<compile_context>
chip_gen: v7x
topology: tpu7x:2x2x1
jax: 0.10.0
libtpu: 0.0.40
codegen_flags: <defaults>
</compile_context>

<pallas_src>
import math
from functools import partial

import jax
import jax.numpy as jnp
from jax.experimental import pallas as pl
from jax.experimental.pallas import tpu as pltpu

EPS = 1e-6  # Norm eps (matches reference)


def _layernorm(x, alpha, bias):
    # Matches reference Norm: unbiased std (ddof=1), eps added to the std.
    d = x.shape[-1]
    mean = jnp.mean(x, axis=-1, keepdims=True)
    var = jnp.sum((x - mean) ** 2, axis=-1, keepdims=True) * (1.0 / (d - 1))
    # Exact divide here (correctness feedback): approx reciprocal is reserved for softmax.
    return alpha * (x - mean) / (jnp.sqrt(var) + EPS) + bias


def encoder_kernel(x_ref, mask_ref,
                   wqkv_ref, bqkv_ref, wo_ref, bo_ref,
                   w1_ref, b1_ref, w2_ref, b2_ref,
                   a1_ref, n1b_ref, a2_ref, n2b_ref,
                   fa_ref, fb_ref,
                   o_ref,
                   h_ref,               # VMEM scratch: running activation (Bt*S, D) f32
                   *, num_heads):
    l = pl.program_id(1)
    n_layers = pl.num_programs(1)
    Bt, S, D = x_ref.shape
    H = num_heads
    dh = D // H
    M = Bt * S
    bf16 = jnp.bfloat16

    # First layer iteration for this batch block: load the embedded input.
    @pl.when(l == 0)
    def _():
        h_ref[...] = x_ref[...].reshape(M, D).astype(jnp.float32)

    x = h_ref[...]                                    # (M, D) f32 — current layer input

    # ---------------- norm1 + multi-head self-attention ----------------
    x1 = _layernorm(x, a1_ref[...], n1b_ref[...])

    # Fused QKV projection: one MXU pass with N = 3D (bf16 operands, f32 accumulate).
    qkv = jnp.dot(x1.astype(bf16), wqkv_ref[...],
                  preferred_element_type=jnp.float32) + bqkv_ref[...]        # (M, 3D) f32

    scale = jnp.float32(1.0 / math.sqrt(dh))

    def split_heads(t2d):
        # (M, D) -> (H*Bt, S, dh); lane-dim (dh) untouched by the transpose, combined
        # attention batch dim ordered (h, b).
        t = jnp.transpose(t2d.reshape(M, H, dh), (1, 0, 2))   # (H, M, dh)
        return t.reshape(H * Bt, S, dh)

    # Fold 1/sqrt(dh) into q in f32 (M*D elems, not H*S^2); cast to bf16 before the
    # head-split transpose so the relayout moves half the bytes.
    q = split_heads((qkv[:, 0 * D:1 * D] * scale).astype(bf16))
    k = split_heads(qkv[:, 1 * D:2 * D].astype(bf16))
    v = split_heads(qkv[:, 2 * D:3 * D].astype(bf16))

    # Additive mask, built once per (batch-block, layer): (Bt,1,S) -> (H*Bt,1,S).
    mask_add = jnp.where(mask_ref[...] == 0.0, jnp.float32(-1e9), jnp.float32(0.0))
    mask_add = jnp.broadcast_to(mask_add[None], (H, Bt, 1, S)).reshape(H * Bt, 1, S)

    s = jnp.einsum('xqd,xkd->xqk', q, k,
                   preferred_element_type=jnp.float32)                       # (H*Bt, S, S)
    s = s + mask_add
    s = s - jnp.max(s, axis=-1, keepdims=True)
    p = jnp.exp(s)
    p = (p * pl.reciprocal(jnp.sum(p, axis=-1, keepdims=True), approx=True)).astype(bf16)

    ctx = jnp.einsum('xqk,xkd->xqd', p, v,
                     preferred_element_type=jnp.float32)                     # (H*Bt, S, dh)

    # Merge-heads without the (.,H,S,dh)->(.,S,D) relayout: wo is head-major (H, dh, D),
    # so the output projection is a per-head MXU contraction + a small VPU head-sum.
    ctx = ctx.reshape(H, M, dh).astype(bf16)
    proj = jnp.einsum('hmd,hde->hme', ctx, wo_ref[...],
                      preferred_element_type=jnp.float32)                    # (H, M, D)
    attn = jnp.sum(proj, axis=0) + bo_ref[...]                               # (M, D)

    x2 = x + attn                                     # dropout1 == identity (inference)

    # ---------------- norm2 + feed-forward ----------------
    x3 = _layernorm(x2, a2_ref[...], n2b_ref[...])
    hdd = jnp.dot(x3.astype(bf16), w1_ref[...],
                  preferred_element_type=jnp.float32) + b1_ref[...]
    hdd = jnp.maximum(hdd, 0.0).astype(bf16)          # shrink the (M, dff) temp to bf16
    ff = jnp.dot(hdd, w2_ref[...],
                 preferred_element_type=jnp.float32) + b2_ref[...]

    # Residual from the ORIGINAL layer input (matches reference); dropout2 == identity.
    out = x + ff
    h_ref[...] = out

    # Final Norm fused into the last layer iteration (saves a pallas_call + HBM trip).
    @pl.when(l == n_layers - 1)
    def _():
        o_ref[...] = _layernorm(out, fa_ref[...], fb_ref[...]
                                ).reshape(Bt, S, D).astype(o_ref.dtype)


def _pick_vmem_limit_bytes():
    # v7x: 64 MiB physical VMEM -> ~48 MiB limit; v5e/v6e: 128 MiB -> ~96 MiB limit.
    try:
        cap = int(getattr(pltpu.get_tpu_info(), "vmem_capacity_bytes", 64 * 1024 * 1024))
    except Exception:
        cap = 64 * 1024 * 1024
    return min((cap * 3) // 4, 100 * 1024 * 1024)


def encoder_forward(tokens, mask, emb_table, pe, stacked_params,
                    final_alpha, final_bias, num_heads, batch_block=2):
    B, S = tokens.shape
    D = emb_table.shape[-1]
    L = stacked_params[0].shape[0]
    dff = stacked_params[4].shape[-1]
    H = num_heads
    dh = D // H
    Bt = batch_block
    assert B % Bt == 0, "batch must be divisible by batch_block"
    assert S % 8 == 0 and D % 128 == 0 and dh % 128 == 0 and dff % 128 == 0, \
        "shapes must be sublane/lane aligned for this kernel"

    # Embedding gather + positional encoding stay in plain JAX (data-dependent gather).
    # TODO(synk): move the token-id gather into the kernel via scalar-prefetch DMA gather.
    x = (emb_table[tokens] * jnp.sqrt(jnp.float32(D)) + pe[None, :S, :]).astype(jnp.float32)

    def per_layer_spec(*dims):
        zeros = (0,) * len(dims)
        # NOTE: on v5e/v6e with VMEM headroom, pipeline_mode=pl.Buffered(3) here deepens
        # weight prefetch along the layer axis (left at the default depth for portability).
        return pl.BlockSpec((None, *dims), lambda b, l, _z=zeros: (l, *_z))

    in_specs = [
        pl.BlockSpec((Bt, S, D), lambda b, l: (b, 0, 0)),     # x (resident across layers)
        pl.BlockSpec((Bt, 1, S), lambda b, l: (b, 0, 0)),     # mask
        per_layer_spec(D, 3 * D),                             # wqkv (bf16)
        per_layer_spec(1, 3 * D),                             # bqkv
        per_layer_spec(H, dh, D),                             # wo   (bf16, head-major)
        per_layer_spec(1, D),                                 # bo
        per_layer_spec(D, dff),                               # w1   (bf16)
        per_layer_spec(1, dff),                               # b1
        per_layer_spec(dff, D),                               # w2   (bf16)
        per_layer_spec(1, D),                                 # b2
        per_layer_spec(1, D),                                 # norm1 alpha
        per_layer_spec(1, D),                                 # norm1 bias
        per_layer_spec(1, D),                                 # norm2 alpha
        per_layer_spec(1, D),                                 # norm2 bias
        pl.BlockSpec((1, D), lambda b, l: (0, 0)),            # final norm alpha
        pl.BlockSpec((1, D), lambda b, l: (0, 0)),            # final norm bias
    ]

    return pl.pallas_call(
        partial(encoder_kernel, num_heads=num_heads),
        out_shape=jax.ShapeDtypeStruct((B, S, D), jnp.float32),
        grid=(B // Bt, L),
        in_specs=in_specs,
        out_specs=pl.BlockSpec((Bt, S, D), lambda b, l: (b, 0, 0)),
        scratch_shapes=[pltpu.VMEM((Bt * S, D), jnp.float32)],
        compiler_params=pltpu.CompilerParams(
            # batch-block axis shards across TensorCores (v7x); layer axis carries scratch.
            dimension_semantics=("parallel", "arbitrary"),
            vmem_limit_bytes=_pick_vmem_limit_bytes(),
        ),
    )(x, mask, *stacked_params, final_alpha, final_bias)


# ---------------- parameter construction (deterministic, synthetic) ----------------

def init_layer_params(key, D, dff):
    ks = jax.random.split(key, 6)

    def w(k, din, dout):
        return jax.random.normal(k, (din, dout), jnp.float32) * 0.02

    wq, wk, wv, wo = (w(ks[i], D, D) for i in range(4))
    w1 = w(ks[4], D, dff)
    w2 = w(ks[5], dff, D)
    wqkv = jnp.concatenate([wq, wk, wv], axis=1)          # fused QKV weight (D, 3D)
    zeros = lambda n: jnp.zeros((1, n), jnp.float32)
    ones = lambda n: jnp.ones((1, n), jnp.float32)
    return (wqkv, zeros(3 * D),       # wqkv, bqkv
            wo, zeros(D),             # wo, bo
            w1, zeros(dff),           # w1, b1
            w2, zeros(D),             # w2, b2
            ones(D), zeros(D),        # norm1 alpha, bias
            ones(D), zeros(D))        # norm2 alpha, bias


def stack_layer_params(layer_params_list, num_heads):
    n = len(layer_params_list[0])
    stacked = [jnp.stack([lp[i] for lp in layer_params_list], axis=0) for i in range(n)]
    L, D, _ = stacked[2].shape
    stacked[2] = stacked[2].reshape(L, num_heads, D // num_heads, D)  # wo -> (H, dh, D)
    weight_idx = (0, 2, 4, 6)  # wqkv, wo, w1, w2 -> bf16 MXU operands (halves VMEM/HBM)
    return [p.astype(jnp.bfloat16) if i in weight_idx else p for i, p in enumerate(stacked)]


def make_positional_encoding(max_seq_len, D):
    pos = jnp.arange(max_seq_len, dtype=jnp.float32)[:, None]
    i = jnp.arange(0, D, 2, dtype=jnp.float32)
    div = jnp.exp(-(jnp.log(10000.0)) * i / D)
    pe = jnp.zeros((max_seq_len, D), jnp.float32)
    pe = pe.at[:, 0::2].set(jnp.sin(pos * div))
    pe = pe.at[:, 1::2].set(jnp.cos(pos * div))
    return pe


def _reference_forward(x, mask, layer_params, final_alpha, final_bias, num_heads):
    # Plain-JAX f32 mirror of the torch Encoder forward (dropout == identity).
    def norm(t, alpha, bias):
        mean = jnp.mean(t, axis=-1, keepdims=True)
        std = jnp.std(t, axis=-1, keepdims=True, ddof=1)
        return alpha * (t - mean) / (std + EPS) + bias

    B, S, D = x.shape
    H = num_heads
    dh = D // H
    for (wqkv, bqkv, wo, bo, w1, b1, w2, b2, a1, n1b, a2, n2b) in layer_params:
        x1 = norm(x, a1, n1b)
        qkv = jnp.einsum('bsd,de->bse', x1, wqkv) + bqkv
        q, k, v = (qkv[..., i * D:(i + 1) * D].reshape(B, S, H, dh).transpose(0, 2, 1, 3)
                   for i in range(3))
        s = jnp.einsum('bhqd,bhkd->bhqk', q, k) / jnp.sqrt(jnp.float32(dh))
        s = jnp.where(mask[:, None, :, :] == 0.0, -1e9, s)
        p = jax.nn.softmax(s, axis=-1)
        ctx = jnp.einsum('bhqk,bhkd->bhqd', p, v).transpose(0, 2, 1, 3).reshape(B, S, D)
        attn = jnp.einsum('bsd,de->bse', ctx, wo) + bo
        x2 = x + attn
        x3 = norm(x2, a2, n2b)
        ff = jnp.einsum('bsf,fd->bsd',
                        jnp.maximum(jnp.einsum('bsd,df->bsf', x3, w1) + b1, 0.0), w2) + b2
        x = x + ff
    return norm(x, final_alpha, final_bias)


if __name__ == "__main__":
    # Small demo shapes: D multiple of 128, dh = 128 (lane-dense), S multiple of 8,
    # and B / batch_block = 2 grid blocks so both v7x TensorCores are used.
    B, S, D = 4, 8, 256
    num_heads = 2            # dh = 128
    dff = 512
    vocab_size = 50
    max_seq_len = 16
    num_layers = 2
    batch_block = 2

    key = jax.random.PRNGKey(0)
    k_emb, k_tok, *k_layers = jax.random.split(key, 2 + num_layers)

    emb_table = jax.random.normal(k_emb, (vocab_size, D), jnp.float32) * 0.02
    pe = make_positional_encoding(max_seq_len, D)
    layer_params = [init_layer_params(k, D, dff) for k in k_layers]
    stacked = stack_layer_params(layer_params, num_heads)
    final_alpha = jnp.ones((1, D), jnp.float32)
    final_bias = jnp.zeros((1, D), jnp.float32)

    tokens = jax.random.randint(k_tok, (B, S), 0, vocab_size, dtype=jnp.int32)
    src_mask = jnp.ones((B, 1, S), jnp.float32)
    src_mask = src_mask.at[1, 0, S - 1].set(0.0).at[3, 0, 0].set(0.0)  # mask a key here & there

    out = encoder_forward(tokens, src_mask, emb_table, pe, stacked,
                          final_alpha, final_bias, num_heads, batch_block=batch_block)
    jax.block_until_ready(out)
    assert out.shape == (B, S, D)
    assert bool(jnp.all(jnp.isfinite(out)))

    # Loose sanity check vs a plain-JAX f32 reference (bf16 MXU operands => ~1e-2 abs err).
    x_emb = (emb_table[tokens] * jnp.sqrt(jnp.float32(D)) + pe[None, :S, :]).astype(jnp.float32)
    ref = _reference_forward(x_emb, src_mask, layer_params, final_alpha, final_bias, num_heads)
    max_err = float(jnp.max(jnp.abs(out - ref)))
    assert max_err < 0.2, f"kernel deviates from reference: max abs err {max_err}"
    print("KERNEL_OK")
</pallas_src>

<mosaic_0001>
module attributes {stable_mosaic.version = 11 : i64} {
  func.func @encoder_kernel(%arg0: i32, %arg1: i32, %arg2: memref<2x8x256xf32, #tpu.memory_space<vmem>>, %arg3: memref<2x1x8xf32, #tpu.memory_space<vmem>>, %arg4: memref<1x256x768xbf16, #tpu.memory_space<vmem>>, %arg5: memref<1x1x768xf32, #tpu.memory_space<vmem>>, %arg6: memref<1x2x128x256xbf16, #tpu.memory_space<vmem>>, %arg7: memref<1x1x256xf32, #tpu.memory_space<vmem>>, %arg8: memref<1x256x512xbf16, #tpu.memory_space<vmem>>, %arg9: memref<1x1x512xf32, #tpu.memory_space<vmem>>, %arg10: memref<1x512x256xbf16, #tpu.memory_space<vmem>>, %arg11: memref<1x1x256xf32, #tpu.memory_space<vmem>>, %arg12: memref<1x1x256xf32, #tpu.memory_space<vmem>>, %arg13: memref<1x1x256xf32, #tpu.memory_space<vmem>>, %arg14: memref<1x1x256xf32, #tpu.memory_space<vmem>>, %arg15: memref<1x1x256xf32, #tpu.memory_space<vmem>>, %arg16: memref<1x256xf32, #tpu.memory_space<vmem>>, %arg17: memref<1x256xf32, #tpu.memory_space<vmem>>, %arg18: memref<2x8x256xf32, #tpu.memory_space<vmem>>, %arg19: memref<16x256xf32, #tpu.memory_space<vmem>>) attributes {dimension_semantics = [#tpu.dimension_semantics<parallel>, #tpu.dimension_semantics<arbitrary>], iteration_bounds = array<i64: 2, 2>, scalar_prefetch = 0 : i64, scratch_operands = 1 : i64, tpu.core_type = #tpu.core_type<tc>, window_params = [{transform_indices = @transform_0, window_bounds = array<i64: 2, 8, 256>}, {transform_indices = @transform_1, window_bounds = array<i64: 2, 1, 8>}, {transform_indices = @transform_2, window_bounds = array<i64: 1, 256, 768>}, {transform_indices = @transform_3, window_bounds = array<i64: 1, 1, 768>}, {transform_indices = @transform_4, window_bounds = array<i64: 1, 2, 128, 256>}, {transform_indices = @transform_5, window_bounds = array<i64: 1, 1, 256>}, {transform_indices = @transform_6, window_bounds = array<i64: 1, 256, 512>}, {transform_indices = @transform_7, window_bounds = array<i64: 1, 1, 512>}, {transform_indices = @transform_8, window_bounds = array<i64: 1, 512, 256>}, {transform_indices = @transform_9, window_bounds = array<i64: 1, 1, 256>}, {transform_indices = @transform_10, window_bounds = array<i64: 1, 1, 256>}, {transform_indices = @transform_11, window_bounds = array<i64: 1, 1, 256>}, {transform_indices = @transform_12, window_bounds = array<i64: 1, 1, 256>}, {transform_indices = @transform_13, window_bounds = array<i64: 1, 1, 256>}, {pipeline_mode = #tpu.pipeline_mode<synchronous>, transform_indices = @transform_14, window_bounds = array<i64: 1, 256>}, {pipeline_mode = #tpu.pipeline_mode<synchronous>, transform_indices = @transform_15, window_bounds = array<i64: 1, 256>}, {transform_indices = @transform_16, window_bounds = array<i64: 2, 8, 256>}]} {
    %c0_i32 = arith.constant 0 : i32
    %0 = arith.cmpi eq, %arg1, %c0_i32 : i32
    %1 = arith.extui %0 : i1 to i32
    %c0_i32_0 = arith.constant 0 : i32
    %2 = arith.cmpi ne, %1, %c0_i32_0 : i32
    scf.if %2 {
      %c0_68 = arith.constant 0 : index
      %c0_69 = arith.constant 0 : index
      %c0_70 = arith.constant 0 : index
      %140 = vector.load %arg2[%c0_68, %c0_69, %c0_70] : memref<2x8x256xf32, #tpu.memory_space<vmem>>, vector<2x8x256xf32>
      %141 = vector.shape_cast %140 : vector<2x8x256xf32> to vector<16x256xf32>
      %c0_71 = arith.constant 0 : index
      %c0_72 = arith.constant 0 : index
      %142 = vector.load %arg19[%c0_71, %c0_72] : memref<16x256xf32, #tpu.memory_space<vmem>>, vector<16x256xf32>
      tpu.vector_store %arg19[%c0_71, %c0_72], %141 {strides = array<i32>} : memref<16x256xf32, #tpu.memory_space<vmem>>, vector<16x256xf32>,
    } else {
    }
    %c0 = arith.constant 0 : index
    %c0_1 = arith.constant 0 : index
    %3 = vector.load %arg19[%c0, %c0_1] : memref<16x256xf32, #tpu.memory_space<vmem>>, vector<16x256xf32>
    %c0_2 = arith.constant 0 : index
    %c0_3 = arith.constant 0 : index
    %c0_4 = arith.constant 0 : index
    %4 = vector.load %arg12[%c0_2, %c0_3, %c0_4] : memref<1x1x256xf32, #tpu.memory_space<vmem>>, vector<1x1x256xf32>
    %5 = vector.shape_cast %4 : vector<1x1x256xf32> to vector<1x256xf32>
    %c0_5 = arith.constant 0 : index
    %c0_6 = arith.constant 0 : index
    %c0_7 = arith.constant 0 : index
    %6 = vector.load %arg13[%c0_5, %c0_6, %c0_7] : memref<1x1x256xf32, #tpu.memory_space<vmem>>, vector<1x1x256xf32>
    %7 = vector.shape_cast %6 : vector<1x1x256xf32> to vector<1x256xf32>
    %cst = arith.constant dense<0.000000e+00> : vector<16xf32>
    %8 = vector.multi_reduction <add>, %3, %cst [1] : vector<16x256xf32> to vector<16xf32>
    %9 = vector.shape_cast %8 : vector<16xf32> to vector<16x1xf32>
    %cst_8 = arith.constant 2.560000e+02 : f32
    %10 = vector.broadcast %cst_8 : f32 to vector<16x1xf32>
    %11 = arith.divf %9, %10 : vector<16x1xf32>
    %12 = vector.broadcast %11 : vector<16x1xf32> to vector<16x256xf32>
    %13 = arith.subf %3, %12 : vector<16x256xf32>
    %14 = arith.mulf %13, %13 : vector<16x256xf32>
    %cst_9 = arith.constant dense<0.000000e+00> : vector<16xf32>
    %15 = vector.multi_reduction <add>, %14, %cst_9 [1] : vector<16x256xf32> to vector<16xf32>
    %16 = vector.shape_cast %15 : vector<16xf32> to vector<16x1xf32>
    %cst_10 = arith.constant 0.00392156886 : f32
    %17 = vector.broadcast %cst_10 : f32 to vector<16x1xf32>
    %18 = arith.mulf %16, %17 : vector<16x1xf32>
    %19 = vector.broadcast %11 : vector<16x1xf32> to vector<16x256xf32>
    %20 = arith.subf %3, %19 : vector<16x256xf32>
    %21 = vector.broadcast %5 : vector<1x256xf32> to vector<16x256xf32>
    %22 = arith.mulf %21, %20 : vector<16x256xf32>
    %23 = math.sqrt %18 : vector<16x1xf32>
    %cst_11 = arith.constant 9.99999997E-7 : f32
    %24 = vector.broadcast %cst_11 : f32 to vector<16x1xf32>
    %25 = arith.addf %23, %24 : vector<16x1xf32>
    %26 = vector.broadcast %25 : vector<16x1xf32> to vector<16x256xf32>
    %27 = arith.divf %22, %26 : vector<16x256xf32>
    %28 = vector.broadcast %7 : vector<1x256xf32> to vector<16x256xf32>
    %29 = arith.addf %27, %28 : vector<16x256xf32>
    %30 = arith.truncf %29 : vector<16x256xf32> to vector<16x256xbf16>
    %c0_12 = arith.constant 0 : index
    %c0_13 = arith.constant 0 : index
    %c0_14 = arith.constant 0 : index
    %31 = vector.load %arg4[%c0_12, %c0_13, %c0_14] : memref<1x256x768xbf16, #tpu.memory_space<vmem>>, vector<1x256x768xbf16>
    %32 = vector.shape_cast %31 : vector<1x256x768xbf16> to vector<256x768xbf16>
    %cst_15 = arith.constant dense<0.000000e+00> : vector<16x768xf32>
    %33 = tpu.matmul %30, %32, %cst_15 {dimension_numbers = #tpu.dot_dimension_numbers<[1], [0], [0], [1], [0, 0, 1, 1], [], []>} : vector<16x256xbf16>, vector<256x768xbf16>, vector<16x768xf32> -> vector<16x768xf32>
    %c0_16 = arith.constant 0 : index
    %c0_17 = arith.constant 0 : index
    %c0_18 = arith.constant 0 : index
    %34 = vector.load %arg5[%c0_16, %c0_17, %c0_18] : memref<1x1x768xf32, #tpu.memory_space<vmem>>, vector<1x1x768xf32>
    %35 = vector.shape_cast %34 : vector<1x1x768xf32> to vector<1x768xf32>
    %36 = vector.broadcast %35 : vector<1x768xf32> to vector<16x768xf32>
    %37 = arith.addf %33, %36 : vector<16x768xf32>
    %38 = vector.extract_strided_slice %37 {offsets = [0, 0], sizes = [16, 256], strides = [1, 1]} : vector<16x768xf32> to vector<16x256xf32>
    %cst_19 = arith.constant 0.0883883461 : f32
    %39 = vector.broadcast %cst_19 : f32 to vector<16x256xf32>
    %40 = arith.mulf %38, %39 : vector<16x256xf32>
    %41 = arith.truncf %40 : vector<16x256xf32> to vector<16x256xbf16>
    %42 = vector.shape_cast %41 : vector<16x256xbf16> to vector<16x2x128xbf16>
    %43 = tpu.transpose %42, [1, 0, 2] : vector<16x2x128xbf16> -> vector<2x16x128xbf16>
    %44 = vector.shape_cast %43 : vector<2x16x128xbf16> to vector<4x8x128xbf16>
    %45 = vector.extract_strided_slice %37 {offsets = [0, 256], sizes = [16, 256], strides = [1, 1]} : vector<16x768xf32> to vector<16x256xf32>
    %46 = arith.truncf %45 : vector<16x256xf32> to vector<16x256xbf16>
    %47 = vector.shape_cast %46 : vector<16x256xbf16> to vector<16x2x128xbf16>
    %48 = tpu.transpose %47, [1, 0, 2] : vector<16x2x128xbf16> -> vector<2x16x128xbf16>
    %49 = vector.shape_cast %48 : vector<2x16x128xbf16> to vector<4x8x128xbf16>
    %50 = vector.extract_strided_slice %37 {offsets = [0, 512], sizes = [16, 256], strides = [1, 1]} : vector<16x768xf32> to vector<16x256xf32>
    %51 = arith.truncf %50 : vector<16x256xf32> to vector<16x256xbf16>
    %52 = vector.shape_cast %51 : vector<16x256xbf16> to vector<16x2x128xbf16>
    %53 = tpu.transpose %52, [1, 0, 2] : vector<16x2x128xbf16> -> vector<2x16x128xbf16>
    %54 = vector.shape_cast %53 : vector<2x16x128xbf16> to vector<4x8x128xbf16>
    %c0_20 = arith.constant 0 : index
    %c0_21 = arith.constant 0 : index
    %c0_22 = arith.constant 0 : index
    %55 = vector.load %arg3[%c0_20, %c0_21, %c0_22] : memref<2x1x8xf32, #tpu.memory_space<vmem>>, vector<2x1x8xf32>
    %cst_23 = arith.constant 0.000000e+00 : f32
    %56 = vector.broadcast %cst_23 : f32 to vector<2x1x8xf32>
    %57 = arith.cmpf oeq, %55, %56 : vector<2x1x8xf32>
    %cst_24 = arith.constant -1.000000e+09 : f32
    %cst_25 = arith.constant 0.000000e+00 : f32
    %58 = vector.broadcast %cst_24 : f32 to vector<2x1x8xf32>
    %59 = vector.broadcast %cst_25 : f32 to vector<2x1x8xf32>
    %60 = arith.select %57, %58, %59 : vector<2x1x8xi1>, vector<2x1x8xf32>
    %61 = vector.shape_cast %60 : vector<2x1x8xf32> to vector<1x2x1x8xf32>
    %62 = vector.shape_cast %61 : vector<1x2x1x8xf32> to vector<1x2x1x8xf32>
    %63 = vector.broadcast %62 : vector<1x2x1x8xf32> to vector<2x2x1x8xf32>
    %64 = vector.shape_cast %63 : vector<2x2x1x8xf32> to vector<4x1x8xf32>
    "tpu.trace_start"() <{level = 10 : i32, message = "xqd,xkd->xqk"}> : () -> ()
    %cst_26 = arith.constant dense<0.000000e+00> : vector<4x8x8xf32>
    %65 = tpu.matmul %44, %49, %cst_26 {dimension_numbers = #tpu.dot_dimension_numbers<[2], [2], [1], [1], [0, 0, 0, 1, 1, 1], [0], [0]>} : vector<4x8x128xbf16>, vector<4x8x128xbf16>, vector<4x8x8xf32> -> vector<4x8x8xf32>
    "tpu.trace_stop"() : () -> ()
    %66 = vector.broadcast %64 : vector<4x1x8xf32> to vector<4x8x8xf32>
    %67 = arith.addf %65, %66 : vector<4x8x8xf32>
    %cst_27 = arith.constant dense<0xFF800000> : vector<4x8xf32>
    %68 = vector.multi_reduction <maximumf>, %67, %cst_27 [2] : vector<4x8x8xf32> to vector<4x8xf32>
    %69 = vector.shape_cast %68 : vector<4x8xf32> to vector<4x8x1xf32>
    %70 = vector.broadcast %69 : vector<4x8x1xf32> to vector<4x8x8xf32>
    %71 = arith.subf %67, %70 : vector<4x8x8xf32>
    %72 = math.exp %71 : vector<4x8x8xf32>
    %cst_28 = arith.constant dense<0.000000e+00> : vector<4x8xf32>
    %73 = vector.multi_reduction <add>, %72, %cst_28 [2] : vector<4x8x8xf32> to vector<4x8xf32>
    %74 = vector.shape_cast %73 : vector<4x8xf32> to vector<4x8x1xf32>
    %75 = tpu.reciprocal %74 {approx = true} : vector<4x8x1xf32> -> vector<4x8x1xf32>
    %76 = vector.broadcast %75 : vector<4x8x1xf32> to vector<4x8x8xf32>
    %77 = arith.mulf %72, %76 : vector<4x8x8xf32>
    %78 = arith.truncf %77 : vector<4x8x8xf32> to vector<4x8x8xbf16>
    "tpu.trace_start"() <{level = 10 : i32, message = "xqk,xkd->xqd"}> : () -> ()
    %cst_29 = arith.constant dense<0.000000e+00> : vector<4x8x128xf32>
    %79 = tpu.matmul %78, %54, %cst_29 {dimension_numbers = #tpu.dot_dimension_numbers<[2], [1], [1], [2], [0, 0, 0, 1, 1, 2], [0], [0]>} : vector<4x8x8xbf16>, vector<4x8x128xbf16>, vector<4x8x128xf32> -> vector<4x8x128xf32>
    "tpu.trace_stop"() : () -> ()
    %80 = vector.shape_cast %79 : vector<4x8x128xf32> to vector<2x16x128xf32>
    %81 = arith.truncf %80 : vector<2x16x128xf32> to vector<2x16x128xbf16>
    %c0_30 = arith.constant 0 : index
    %c0_31 = arith.constant 0 : index
    %c0_32 = arith.constant 0 : index
    %c0_33 = arith.constant 0 : index
    %82 = vector.load %arg6[%c0_30, %c0_31, %c0_32, %c0_33] : memref<1x2x128x256xbf16, #tpu.memory_space<vmem>>, vector<1x2x128x256xbf16>
    %83 = vector.shape_cast %82 : vector<1x2x128x256xbf16> to vector<2x128x256xbf16>
    "tpu.trace_start"() <{level = 10 : i32, message = "hmd,hde->hme"}> : () -> ()
    %cst_34 = arith.constant dense<0.000000e+00> : vector<2x16x256xf32>
    %84 = tpu.matmul %81, %83, %cst_34 {dimension_numbers = #tpu.dot_dimension_numbers<[2], [1], [1], [2], [0, 0, 0, 1, 1, 2], [0], [0]>} : vector<2x16x128xbf16>, vector<2x128x256xbf16>, vector<2x16x256xf32> -> vector<2x16x256xf32>
    "tpu.trace_stop"() : () -> ()
    %cst_35 = arith.constant dense<0.000000e+00> : vector<16x256xf32>
    %85 = vector.multi_reduction <add>, %84, %cst_35 [0] : vector<2x16x256xf32> to vector<16x256xf32>
    %c0_36 = arith.constant 0 : index
    %c0_37 = arith.constant 0 : index
    %c0_38 = arith.constant 0 : index
    %86 = vector.load %arg7[%c0_36, %c0_37, %c0_38] : memref<1x1x256xf32, #tpu.memory_space<vmem>>, vector<1x1x256xf32>
    %87 = vector.shape_cast %86 : vector<1x1x256xf32> to vector<1x256xf32>
    %88 = vector.broadcast %87 : vector<1x256xf32> to vector<16x256xf32>
    %89 = arith.addf %85, %88 : vector<16x256xf32>
    %90 = arith.addf %3, %89 : vector<16x256xf32>
    %c0_39 = arith.constant 0 : index
    %c0_40 = arith.constant 0 : index
    %c0_41 = arith.constant 0 : index
    %91 = vector.load %arg14[%c0_39, %c0_40, %c0_41] : memref<1x1x256xf32, #tpu.memory_space<vmem>>, vector<1x1x256xf32>
    %92 = vector.shape_cast %91 : vector<1x1x256xf32> to vector<1x256xf32>
    %c0_42 = arith.constant 0 : index
    %c0_43 = arith.constant 0 : index
    %c0_44 = arith.constant 0 : index
    %93 = vector.load %arg15[%c0_42, %c0_43, %c0_44] : memref<1x1x256xf32, #tpu.memory_space<vmem>>, vector<1x1x256xf32>
    %94 = vector.shape_cast %93 : vector<1x1x256xf32> to vector<1x256xf32>
    %cst_45 = arith.constant dense<0.000000e+00> : vector<16xf32>
    %95 = vector.multi_reduction <add>, %90, %cst_45 [1] : vector<16x256xf32> to vector<16xf32>
    %96 = vector.shape_cast %95 : vector<16xf32> to vector<16x1xf32>
    %cst_46 = arith.constant 2.560000e+02 : f32
    %97 = vector.broadcast %cst_46 : f32 to vector<16x1xf32>
    %98 = arith.divf %96, %97 : vector<16x1xf32>
    %99 = vector.broadcast %98 : vector<16x1xf32> to vector<16x256xf32>
    %100 = arith.subf %90, %99 : vector<16x256xf32>
    %101 = arith.mulf %100, %100 : vector<16x256xf32>
    %cst_47 = arith.constant dense<0.000000e+00> : vector<16xf32>
    %102 = vector.multi_reduction <add>, %101, %cst_47 [1] : vector<16x256xf32> to vector<16xf32>
    %103 = vector.shape_cast %102 : vector<16xf32> to vector<16x1xf32>
    %cst_48 = arith.constant 0.00392156886 : f32
    %104 = vector.broadcast %cst_48 : f32 to vector<16x1xf32>
    %105 = arith.mulf %103, %104 : vector<16x1xf32>
    %106 = vector.broadcast %98 : vector<16x1xf32> to vector<16x256xf32>
    %107 = arith.subf %90, %106 : vector<16x256xf32>
    %108 = vector.broadcast %92 : vector<1x256xf32> to vector<16x256xf32>
    %109 = arith.mulf %108, %107 : vector<16x256xf32>
    %110 = math.sqrt %105 : vector<16x1xf32>
    %cst_49 = arith.constant 9.99999997E-7 : f32
    %111 = vector.broadcast %cst_49 : f32 to vector<16x1xf32>
    %112 = arith.addf %110, %111 : vector<16x1xf32>
    %113 = vector.broadcast %112 : vector<16x1xf32> to vector<16x256xf32>
    %114 = arith.divf %109, %113 : vector<16x256xf32>
    %115 = vector.broadcast %94 : vector<1x256xf32> to vector<16x256xf32>
    %116 = arith.addf %114, %115 : vector<16x256xf32>
    %117 = arith.truncf %116 : vector<16x256xf32> to vector<16x256xbf16>
    %c0_50 = arith.constant 0 : index
    %c0_51 = arith.constant 0 : index
    %c0_52 = arith.constant 0 : index
    %118 = vector.load %arg8[%c0_50, %c0_51, %c0_52] : memref<1x256x512xbf16, #tpu.memory_space<vmem>>, vector<1x256x512xbf16>
    %119 = vector.shape_cast %118 : vector<1x256x512xbf16> to vector<256x512xbf16>
    %cst_53 = arith.constant dense<0.000000e+00> : vector<16x512xf32>
    %120 = tpu.matmul %117, %119, %cst_53 {dimension_numbers = #tpu.dot_dimension_numbers<[1], [0], [0], [1], [0, 0, 1, 1], [], []>} : vector<16x256xbf16>, vector<256x512xbf16>, vector<16x512xf32> -> vector<16x512xf32>
    %c0_54 = arith.constant 0 : index
    %c0_55 = arith.constant 0 : index
    %c0_56 = arith.constant 0 : index
    %121 = vector.load %arg9[%c0_54, %c0_55, %c0_56] : memref<1x1x512xf32, #tpu.memory_space<vmem>>, vector<1x1x512xf32>
    %122 = vector.shape_cast %121 : vector<1x1x512xf32> to vector<1x512xf32>
    %123 = vector.broadcast %122 : vector<1x512xf32> to vector<16x512xf32>
    %124 = arith.addf %120, %123 : vector<16x512xf32>
    %cst_57 = arith.constant 0.000000e+00 : f32
    %125 = vector.broadcast %cst_57 : f32 to vector<16x512xf32>
    %126 = arith.maximumf %124, %125 : vector<16x512xf32>
    %127 = arith.truncf %126 : vector<16x512xf32> to vector<16x512xbf16>
    %c0_58 = arith.constant 0 : index
    %c0_59 = arith.constant 0 : index
    %c0_60 = arith.constant 0 : index
    %128 = vector.load %arg10[%c0_58, %c0_59, %c0_60] : memref<1x512x256xbf16, #tpu.memory_space<vmem>>, vector<1x512x256xbf16>
    %129 = vector.shape_cast %128 : vector<1x512x256xbf16> to vector<512x256xbf16>
    %cst_61 = arith.constant dense<0.000000e+00> : vector<16x256xf32>
    %130 = tpu.matmul %127, %129, %cst_61 {dimension_numbers = #tpu.dot_dimension_numbers<[1], [0], [0], [1], [0, 0, 1, 1], [], []>} : vector<16x512xbf16>, vector<512x256xbf16>, vector<16x256xf32> -> vector<16x256xf32>
    %c0_62 = arith.constant 0 : index
    %c0_63 = arith.constant 0 : index
    %c0_64 = arith.constant 0 : index
    %131 = vector.load %arg11[%c0_62, %c0_63, %c0_64] : memref<1x1x256xf32, #tpu.memory_space<vmem>>, vector<1x1x256xf32>
    %132 = vector.shape_cast %131 : vector<1x1x256xf32> to vector<1x256xf32>
    %133 = vector.broadcast %132 : vector<1x256xf32> to vector<16x256xf32>
    %134 = arith.addf %130, %133 : vector<16x256xf32>
    %135 = arith.addf %3, %134 : vector<16x256xf32>
    %c0_65 = arith.constant 0 : index
    %c0_66 = arith.constant 0 : index
    %136 = vector.load %arg19[%c0_65, %c0_66] : memref<16x256xf32, #tpu.memory_space<vmem>>, vector<16x256xf32>
    tpu.vector_store %arg19[%c0_65, %c0_66], %135 {strides = array<i32>} : memref<16x256xf32, #tpu.memory_space<vmem>>, vector<16x256xf32>,
    %c1_i32 = arith.constant 1 : i32
    %137 = arith.cmpi eq, %arg1, %c1_i32 : i32
    %138 = arith.extui %137 : i1 to i32
    %c0_i32_67 = arith.constant 0 : i32
    %139 = arith.cmpi ne, %138, %c0_i32_67 : i32
    scf.if %139 {
      %c0_68 = arith.constant 0 : index
      %c0_69 = arith.constant 0 : index
      %140 = vector.load %arg16[%c0_68, %c0_69] : memref<1x256xf32, #tpu.memory_space<vmem>>, vector<1x256xf32>
      %c0_70 = arith.constant 0 : index
      %c0_71 = arith.constant 0 : index
      %141 = vector.load %arg17[%c0_70, %c0_71] : memref<1x256xf32, #tpu.memory_space<vmem>>, vector<1x256xf32>
      %cst_72 = arith.constant dense<0.000000e+00> : vector<16xf32>
      %142 = vector.multi_reduction <add>, %135, %cst_72 [1] : vector<16x256xf32> to vector<16xf32>
      %143 = vector.shape_cast %142 : vector<16xf32> to vector<16x1xf32>
      %cst_73 = arith.constant 2.560000e+02 : f32
      %144 = vector.broadcast %cst_73 : f32 to vector<16x1xf32>
      %145 = arith.divf %143, %144 : vector<16x1xf32>
      %146 = vector.broadcast %145 : vector<16x1xf32> to vector<16x256xf32>
      %147 = arith.subf %135, %146 : vector<16x256xf32>
      %148 = arith.mulf %147, %147 : vector<16x256xf32>
      %cst_74 = arith.constant dense<0.000000e+00> : vector<16xf32>
      %149 = vector.multi_reduction <add>, %148, %cst_74 [1] : vector<16x256xf32> to vector<16xf32>
      %150 = vector.shape_cast %149 : vector<16xf32> to vector<16x1xf32>
      %cst_75 = arith.constant 0.00392156886 : f32
      %151 = vector.broadcast %cst_75 : f32 to vector<16x1xf32>
      %152 = arith.mulf %150, %151 : vector<16x1xf32>
      %153 = vector.broadcast %145 : vector<16x1xf32> to vector<16x256xf32>
      %154 = arith.subf %135, %153 : vector<16x256xf32>
      %155 = vector.broadcast %140 : vector<1x256xf32> to vector<16x256xf32>
      %156 = arith.mulf %155, %154 : vector<16x256xf32>
      %157 = math.sqrt %152 : vector<16x1xf32>
      %cst_76 = arith.constant 9.99999997E-7 : f32
      %158 = vector.broadcast %cst_76 : f32 to vector<16x1xf32>
      %159 = arith.addf %157, %158 : vector<16x1xf32>
      %160 = vector.broadcast %159 : vector<16x1xf32> to vector<16x256xf32>
      %161 = arith.divf %156, %160 : vector<16x256xf32>
      %162 = vector.broadcast %141 : vector<1x256xf32> to vector<16x256xf32>
      %163 = arith.addf %161, %162 : vector<16x256xf32>
      %164 = vector.shape_cast %163 : vector<16x256xf32> to vector<2x8x256xf32>
      %c0_77 = arith.constant 0 : index
      %c0_78 = arith.constant 0 : index
      %c0_79 = arith.constant 0 : index
      %165 = vector.load %arg18[%c0_77, %c0_78, %c0_79] : memref<2x8x256xf32, #tpu.memory_space<vmem>>, vector<2x8x256xf32>
      tpu.vector_store %arg18[%c0_77, %c0_78, %c0_79], %164 {strides = array<i32>} : memref<2x8x256xf32, #tpu.memory_space<vmem>>, vector<2x8x256xf32>,
    } else {
    }
    return
  }
  func.func @transform_0(%arg0: i32, %arg1: i32) -> (i32, i32, i32) {
    %c0_i32 = arith.constant 0 : i32
    %c0_i32_0 = arith.constant 0 : i32
    %c0_i32_1 = arith.constant 0 : i32
    return %arg0, %c0_i32, %c0_i32_0 : i32, i32, i32
  }
  func.func @transform_1(%arg0: i32, %arg1: i32) -> (i32, i32, i32) {
    %c0_i32 = arith.constant 0 : i32
    %c0_i32_0 = arith.constant 0 : i32
    %c0_i32_1 = arith.constant 0 : i32
    return %arg0, %c0_i32, %c0_i32_0 : i32, i32, i32
  }
  func.func @transform_2(%arg0: i32, %arg1: i32) -> (i32, i32, i32) {
    %c0_i32 = arith.constant 0 : i32
    %c0_i32_0 = arith.constant 0 : i32
    %c0_i32_1 = arith.constant 0 : i32
    return %arg1, %c0_i32, %c0_i32_0 : i32, i32, i32
  }
  func.func @transform_3(%arg0: i32, %arg1: i32) -> (i32, i32, i32) {
    %c0_i32 = arith.constant 0 : i32
    %c0_i32_0 = arith.constant 0 : i32
    %c0_i32_1 = arith.constant 0 : i32
    return %arg1, %c0_i32, %c0_i32_0 : i32, i32, i32
  }
  func.func @transform_4(%arg0: i32, %arg1: i32) -> (i32, i32, i32, i32) {
    %c0_i32 = arith.constant 0 : i32
    %c0_i32_0 = arith.constant 0 : i32
    %c0_i32_1 = arith.constant 0 : i32
    %c0_i32_2 = arith.constant 0 : i32
    return %arg1, %c0_i32, %c0_i32_0, %c0_i32_1 : i32, i32, i32, i32
  }
  func.func @transform_5(%arg0: i32, %arg1: i32) -> (i32, i32, i32) {
    %c0_i32 = arith.constant 0 : i32
    %c0_i32_0 = arith.constant 0 : i32
    %c0_i32_1 = arith.constant 0 : i32
    return %arg1, %c0_i32, %c0_i32_0 : i32, i32, i32
  }
  func.func @transform_6(%arg0: i32, %arg1: i32) -> (i32, i32, i32) {
    %c0_i32 = arith.constant 0 : i32
    %c0_i32_0 = arith.constant 0 : i32
    %c0_i32_1 = arith.constant 0 : i32
    return %arg1, %c0_i32, %c0_i32_0 : i32, i32, i32
  }
  func.func @transform_7(%arg0: i32, %arg1: i32) -> (i32, i32, i32) {
    %c0_i32 = arith.constant 0 : i32
    %c0_i32_0 = arith.constant 0 : i32
    %c0_i32_1 = arith.constant 0 : i32
    return %arg1, %c0_i32, %c0_i32_0 : i32, i32, i32
  }
  func.func @transform_8(%arg0: i32, %arg1: i32) -> (i32, i32, i32) {
    %c0_i32 = arith.constant 0 : i32
    %c0_i32_0 = arith.constant 0 : i32
    %c0_i32_1 = arith.constant 0 : i32
    return %arg1, %c0_i32, %c0_i32_0 : i32, i32, i32
  }
  func.func @transform_9(%arg0: i32, %arg1: i32) -> (i32, i32, i32) {
    %c0_i32 = arith.constant 0 : i32
    %c0_i32_0 = arith.constant 0 : i32
    %c0_i32_1 = arith.constant 0 : i32
    return %arg1, %c0_i32, %c0_i32_0 : i32, i32, i32
  }
  func.func @transform_10(%arg0: i32, %arg1: i32) -> (i32, i32, i32) {
    %c0_i32 = arith.constant 0 : i32
    %c0_i32_0 = arith.constant 0 : i32
    %c0_i32_1 = arith.constant 0 : i32
    return %arg1, %c0_i32, %c0_i32_0 : i32, i32, i32
  }
  func.func @transform_11(%arg0: i32, %arg1: i32) -> (i32, i32, i32) {
    %c0_i32 = arith.constant 0 : i32
    %c0_i32_0 = arith.constant 0 : i32
    %c0_i32_1 = arith.constant 0 : i32
    return %arg1, %c0_i32, %c0_i32_0 : i32, i32, i32
  }
  func.func @transform_12(%arg0: i32, %arg1: i32) -> (i32, i32, i32) {
    %c0_i32 = arith.constant 0 : i32
    %c0_i32_0 = arith.constant 0 : i32
    %c0_i32_1 = arith.constant 0 : i32
    return %arg1, %c0_i32, %c0_i32_0 : i32, i32, i32
  }
  func.func @transform_13(%arg0: i32, %arg1: i32) -> (i32, i32, i32) {
    %c0_i32 = arith.constant 0 : i32
    %c0_i32_0 = arith.constant 0 : i32
    %c0_i32_1 = arith.constant 0 : i32
    return %arg1, %c0_i32, %c0_i32_0 : i32, i32, i32
  }
  func.func @transform_14(%arg0: i32, %arg1: i32) -> (i32, i32) {
    %c0_i32 = arith.constant 0 : i32
    %c0_i32_0 = arith.constant 0 : i32
    %c0_i32_1 = arith.constant 0 : i32
    return %c0_i32, %c0_i32_0 : i32, i32
  }
  func.func @transform_15(%arg0: i32, %arg1: i32) -> (i32, i32) {
    %c0_i32 = arith.constant 0 : i32
    %c0_i32_0 = arith.constant 0 : i32
    %c0_i32_1 = arith.constant 0 : i32
    return %c0_i32, %c0_i32_0 : i32, i32
  }
  func.func @transform_16(%arg0: i32, %arg1: i32) -> (i32, i32, i32) {
    %c0_i32 = arith.constant 0 : i32
    %c0_i32_0 = arith.constant 0 : i32
    %c0_i32_1 = arith.constant 0 : i32
    return %arg0, %c0_i32, %c0_i32_0 : i32, i32, i32
  }
}

</mosaic_0001>

<llo_original>
// kernel: tpu_custom_call.1
$region0: #{tpu_custom_call.1}
  #allocation0 [shape = 'u32[]', space=smem, size = 0x4, offset = 0x4, fixed_abs, tag = 'smem constant byte address 0x4 - core index']
  #allocation1 [shape = 'u32[144,128]{1,0:T(1,128)}', space=vmem, size = 0x12000, scoped, tag = 'internal scratch']
  #allocation2 [shape = 'f32[16,256]{1,0:T(8,128)}', space=vmem, size = 0x4000, scoped, tag = 'scratch operand']
  %s0 = inlined_call_operand.hbm [shape: f32[4,8,256], index: 0, kind: input, shape index: {}]
  %s1 = inlined_call_operand.hbm [shape: f32[4,1,8], index: 1, kind: input, shape index: {}]
  %s2 = inlined_call_operand.hbm [shape: bf16[2,256,768], index: 2, kind: input, shape index: {}]
  %s3 = inlined_call_operand.hbm [shape: f32[2,1,768], index: 3, kind: input, shape index: {}]
  %s4 = inlined_call_operand.hbm [shape: bf16[2,2,128,256], index: 4, kind: input, shape index: {}]
  %s5 = inlined_call_operand.vmem [shape: f32[2,1,256], index: 5, kind: input, shape index: {}]
  %s6 = inlined_call_operand.hbm [shape: bf16[2,256,512], index: 6, kind: input, shape index: {}]
  %s7 = inlined_call_operand.vmem [shape: f32[2,1,512], index: 7, kind: input, shape index: {}]
  %s8 = inlined_call_operand.hbm [shape: bf16[2,512,256], index: 8, kind: input, shape index: {}]
  %s9 = inlined_call_operand.vmem [shape: f32[2,1,256], index: 9, kind: input, shape index: {}]
  %s10 = inlined_call_operand.vmem [shape: f32[2,1,256], index: 10, kind: input, shape index: {}]
  %s11 = inlined_call_operand.vmem [shape: f32[2,1,256], index: 11, kind: input, shape index: {}]
  %s12 = inlined_call_operand.vmem [shape: f32[2,1,256], index: 12, kind: input, shape index: {}]
  %s13 = inlined_call_operand.vmem [shape: f32[2,1,256], index: 13, kind: input, shape index: {}]
  %s14 = inlined_call_operand.vmem [shape: f32[1,256], index: 14, kind: input, shape index: {}]
  %s15 = inlined_call_operand.vmem [shape: f32[1,256], index: 15, kind: input, shape index: {}]
  %s16 = inlined_call_operand.hbm [shape: f32[4,8,256], index: 16, kind: output, shape index: {}]
  %s17 = sld [smem:[#allocation0]]
  $region133: #{tpu_custom_call.1} parent=0
    _
  %s19 = ssub.s32 1, %s17
  %s20 = scalar_select 0, %s19, %s17
  $region1: #{tpu_custom_call.1} parent=0
    #allocation3 [shape = 'u8[32768]{0}', space=vmem, size = 0x8000, scoped, tag = 'input window, operand 0']
    #allocation4 [shape = 's32[2]{0}', space=sflag, size = 0x8, scoped, tag = 'scoped memory for tpu_custom_call.1']
    #allocation5 [shape = 's32[2]{0}', space=sflag, size = 0x8, scoped, tag = 'scoped memory for tpu_custom_call.1']
    #allocation6 [shape = 'u8[2048]{0}', space=vmem, size = 0x800, scoped, tag = 'input window, operand 1']
    #allocation7 [shape = 's32[2]{0}', space=sflag, size = 0x8, scoped, tag = 'scoped memory for tpu_custom_call.1']
    #allocation8 [shape = 'u8[786432]{0}', space=vmem, size = 0xc0000, scoped, tag = 'input window, operand 2']
    #allocation9 [shape = 'u8[6144]{0}', space=vmem, size = 0x1800, scoped, tag = 'input window, operand 3']
    #allocation10 [shape = 's32[2]{0}', space=sflag, size = 0x8, scoped, tag = 'scoped memory for tpu_custom_call.1']
    #allocation11 [shape = 'u8[262144]{0}', space=vmem, size = 0x40000, scoped, tag = 'input window, operand 4']
    #allocation12 [shape = 'u8[524288]{0}', space=vmem, size = 0x80000, scoped, tag = 'input window, operand 6']
    #allocation13 [shape = 's32[2]{0}', space=sflag, size = 0x8, scoped, tag = 'scoped memory for tpu_custom_call.1']
    #allocation14 [shape = 'u8[524288]{0}', space=vmem, size = 0x80000, scoped, tag = 'input window, operand 8']
    #allocation15 [shape = 'u8[32768]{0}', space=vmem, size = 0x8000, scoped, tag = 'output window, operand 0']
    %21 = vsyncpa [#allocation4], 0
    %s22 = scalar_lea.sflag [#allocation4], 1
    %23 = vsyncpa %s22, 0
    %24 = vsyncpa [#allocation7], 0
    %s25 = scalar_lea.sflag [#allocation7], 1
    %26 = vsyncpa %s25, 0
    %27 = vsyncpa [#allocation10], 0
    %s28 = scalar_lea.sflag [#allocation10], 1
    %29 = vsyncpa %s28, 0
    %30 = vsyncpa [#allocation13], 0
    %s31 = scalar_lea.sflag [#allocation13], 1
    %32 = vsyncpa %s31, 0
    %33 = vsyncpa [#allocation5], 0
    %s34 = scalar_lea.sflag [#allocation5], 1
    %35 = vsyncpa %s34, 0
    loop: start=0, step=1, limit=6
    $region2: #{tpu_custom_call.1} parent=1 // loop_pre_header
      _
    $region3: #{tpu_custom_call.1} parent=1 // loop_header
      %s37 = sphi 0, %s41
      %p38 = scmp.ge.s32.totalorder %s37, 6
      %s44 = sphi 0, %s56
      %s45 = sphi 0, %s52
      %s46 = sphi 0, %s44
      %s47 = sphi 0, %s45
      %s48 = sphi 0, %s46
      %s49 = sphi 0, %s47
      %s59 = sphi 0, %s61
      %s62 = sphi 0, %s59
      %s63 = sphi 0, %s62
      %s79 = sphi 0, %s63
      %s85 = sphi 0, %s87
      %s88 = sphi 0, %s85
      %s89 = sphi 0, %s88
      %s105 = sphi 0, %s89
      %s111 = sphi 0, %s113
      %s114 = sphi 0, %s111
      %s115 = sphi 0, %s114
      %s131 = sphi 0, %s115
      %s137 = sphi 0, %s139
      %s140 = sphi 0, %s137
      %s141 = sphi 0, %s140
      %s157 = sphi 0, %s141
      %s163 = sphi 0, %s165
      %s166 = sphi 0, %s163
      %s167 = sphi 0, %s166
      %s183 = sphi 0, %s167
      %s189 = sphi 0, %s191
      %s192 = sphi 0, %s189
      %s193 = sphi 0, %s192
      %s209 = sphi 0, %s193
      %s215 = sphi 0, %s217
      %s218 = sphi 0, %s215
      %s219 = sphi 0, %s218
      %s235 = sphi 0, %s219
      %s241 = sphi 0, %s243
      %s244 = sphi 0, %s241
      %s245 = sphi 0, %s244
      %s261 = sphi 0, %s245
      %s267 = sphi 0, %s269
      %s270 = sphi 0, %s267
      %s271 = sphi 0, %s270
      %s287 = sphi 0, %s271
      %s293 = sphi 0, %s295
      %s296 = sphi 0, %s293
      %s297 = sphi 0, %s296
      %s313 = sphi 0, %s297
      %s319 = sphi 0, %s321
      %s322 = sphi 0, %s319
      %s323 = sphi 0, %s322
      %s339 = sphi 0, %s323
      %s345 = sphi 0, %s347
      %s348 = sphi 0, %s345
      %s349 = sphi 0, %s348
      %s365 = sphi 0, %s349
      %s371 = sphi 0, %s373
      %s374 = sphi 0, %s371
      %s375 = sphi 0, %s374
      %s391 = sphi 0, %s375
      %s397 = sphi 0, %s399
      %s400 = sphi 0, %s397
      %s401 = sphi 0, %s400
      %s417 = sphi 0, %s401
      %s421 = sphi 0, %s421
      %s423 = sphi 0, %s421
      %s424 = sphi 0, %s423
      %s438 = sphi 0, %s424
      %s442 = sphi 0, %s442
      %s444 = sphi 0, %s442
      %s445 = sphi 0, %s444
      %s459 = sphi 0, %s445
      %s465 = sphi 0, %s467
      %s468 = sphi 0, %s465
      %s469 = sphi 0, %s468
      %s485 = sphi 0, %s469
    $region4: #{tpu_custom_call.1} parent=1 // loop_header_branch
      %40 = sbr.rel (%p38) target = $region8
    $region5: #{tpu_custom_call.1} parent=1 // loop_body
      %s42 = ssub.s32 %s37, 1
      %s43 = ssub.s32 %s37, 2
      %s50 = sadd.s32 1, %s45
      %p51 = scmp.ge.s32.totalorder %s50, 2
      %s52 = scalar_select %p51, 0, %s50
      %s53 = sadd.s32 1, %s44
      %s54 = scalar_select %p51, %s53, %s44
      %p55 = scmp.ge.s32.totalorder %s54, 2
      %s56 = scalar_select %p55, 0, %s54
      %s57 = ssub.s32 %s44, %s56
      %p58 = scmp.eq.s32.totalorder %s57, 0
      %s60 = sadd.s32 %s59, 1
      %s61 = scalar_select %p58, %s59, %s60
      %p64 = pneg %p58
      %p65 = scmp.eq.s32.totalorder %s37, 3
      %p66 = por %p64, %p65
      %p67 = scmp.ne.s32.totalorder %s59, %s62
      %p68 = scmp.eq.s32.totalorder %s37, 0
      %p69 = por %p67, %p68
      %p70 = scmp.ne.s32.totalorder %s59, %s62
      %p71 = scmp.eq.s32.totalorder %s42, 3
      %p72 = por %p70, %p71
      %p73 = scmp.ne.s32.totalorder %s62, %s63
      %p74 = scmp.eq.s32.totalorder %s42, 0
      %p75 = por %p73, %p74
      %p76 = scmp.ne.s32.totalorder %s62, %s63
      %p77 = scmp.eq.s32.totalorder %s43, 3
      %p78 = por %p76, %p77
      %p80 = scmp.ne.s32.totalorder %s63, %s79
      %p81 = scmp.eq.s32.totalorder %s43, 0
      %p82 = por %p80, %p81
      %s83 = ssub.s32 %s44, %s56
      %p84 = scmp.eq.s32.totalorder %s83, 0
      %s86 = sadd.s32 %s85, 1
      %s87 = scalar_select %p84, %s85, %s86
      %p90 = pneg %p84
      %p91 = scmp.eq.s32.totalorder %s37, 3
      %p92 = por %p90, %p91
      %p93 = scmp.ne.s32.totalorder %s85, %s88
      %p94 = scmp.eq.s32.totalorder %s37, 0
      %p95 = por %p93, %p94
      %p96 = scmp.ne.s32.totalorder %s85, %s88
      %p97 = scmp.eq.s32.totalorder %s42, 3
      %p98 = por %p96, %p97
      %p99 = scmp.ne.s32.totalorder %s88, %s89
      %p100 = scmp.eq.s32.totalorder %s42, 0
      %p101 = por %p99, %p100
      %p102 = scmp.ne.s32.totalorder %s88, %s89
      %p103 = scmp.eq.s32.totalorder %s43, 3
      %p104 = por %p102, %p103
      %p106 = scmp.ne.s32.totalorder %s89, %s105
      %p107 = scmp.eq.s32.totalorder %s43, 0
      %p108 = por %p106, %p107
      %s109 = ssub.s32 %s45, %s52
      %p110 = scmp.eq.s32.totalorder %s109, 0
      %s112 = sadd.s32 %s111, 1
      %s113 = scalar_select %p110, %s111, %s112
      %p116 = pneg %p110
      %p117 = scmp.eq.s32.totalorder %s37, 3
      %p118 = por %p116, %p117
      %p119 = scmp.ne.s32.totalorder %s111, %s114
      %p120 = scmp.eq.s32.totalorder %s37, 0
      %p121 = por %p119, %p120
      %p122 = scmp.ne.s32.totalorder %s111, %s114
      %p123 = scmp.eq.s32.totalorder %s42, 3
      %p124 = por %p122, %p123
      %p125 = scmp.ne.s32.totalorder %s114, %s115
      %p126 = scmp.eq.s32.totalorder %s42, 0
      %p127 = por %p125, %p126
      %p128 = scmp.ne.s32.totalorder %s114, %s115
      %p129 = scmp.eq.s32.totalorder %s43, 3
      %p130 = por %p128, %p129
      %p132 = scmp.ne.s32.totalorder %s115, %s131
      %p133 = scmp.eq.s32.totalorder %s43, 0
      %p134 = por %p132, %p133
      %s135 = ssub.s32 %s45, %s52
      %p136 = scmp.eq.s32.totalorder %s135, 0
      %s138 = sadd.s32 %s137, 1
      %s139 = scalar_select %p136, %s137, %s138
      %p142 = pneg %p136
      %p143 = scmp.eq.s32.totalorder %s37, 3
      %p144 = por %p142, %p143
      %p145 = scmp.ne.s32.totalorder %s137, %s140
      %p146 = scmp.eq.s32.totalorder %s37, 0
      %p147 = por %p145, %p146
      %p148 = scmp.ne.s32.totalorder %s137, %s140
      %p149 = scmp.eq.s32.totalorder %s42, 3
      %p150 = por %p148, %p149
      %p151 = scmp.ne.s32.totalorder %s140, %s141
      %p152 = scmp.eq.s32.totalorder %s42, 0
      %p153 = por %p151, %p152
      %p154 = scmp.ne.s32.totalorder %s140, %s141
      %p155 = scmp.eq.s32.totalorder %s43, 3
      %p156 = por %p154, %p155
      %p158 = scmp.ne.s32.totalorder %s141, %s157
      %p159 = scmp.eq.s32.totalorder %s43, 0
      %p160 = por %p158, %p159
      %s161 = ssub.s32 %s45, %s52
      %p162 = scmp.eq.s32.totalorder %s161, 0
      %s164 = sadd.s32 %s163, 1
      %s165 = scalar_select %p162, %s163, %s164
      %p168 = pneg %p162
      %p169 = scmp.eq.s32.totalorder %s37, 3
      %p170 = por %p168, %p169
      %p171 = scmp.ne.s32.totalorder %s163, %s166
      %p172 = scmp.eq.s32.totalorder %s37, 0
      %p173 = por %p171, %p172
      %p174 = scmp.ne.s32.totalorder %s163, %s166
      %p175 = scmp.eq.s32.totalorder %s42, 3
      %p176 = por %p174, %p175
      %p177 = scmp.ne.s32.totalorder %s166, %s167
      %p178 = scmp.eq.s32.totalorder %s42, 0
      %p179 = por %p177, %p178
      %p180 = scmp.ne.s32.totalorder %s166, %s167
      %p181 = scmp.eq.s32.totalorder %s43, 3
      %p182 = por %p180, %p181
      %p184 = scmp.ne.s32.totalorder %s167, %s183
      %p185 = scmp.eq.s32.totalorder %s43, 0
      %p186 = por %p184, %p185
      %s187 = ssub.s32 %s45, %s52
      %p188 = scmp.eq.s32.totalorder %s187, 0
      %s190 = sadd.s32 %s189, 1
      %s191 = scalar_select %p188, %s189, %s190
      %p194 = pneg %p188
      %p195 = scmp.eq.s32.totalorder %s37, 3
      %p196 = por %p194, %p195
      %p197 = scmp.ne.s32.totalorder %s189, %s192
      %p198 = scmp.eq.s32.totalorder %s37, 0
      %p199 = por %p197, %p198
      %p200 = scmp.ne.s32.totalorder %s189, %s192
      %p201 = scmp.eq.s32.totalorder %s42, 3
      %p202 = por %p200, %p201
      %p203 = scmp.ne.s32.totalorder %s192, %s193
      %p204 = scmp.eq.s32.totalorder %s42, 0
      %p205 = por %p203, %p204
      %p206 = scmp.ne.s32.totalorder %s192, %s193
      %p207 = scmp.eq.s32.totalorder %s43, 3
      %p208 = por %p206, %p207
      %p210 = scmp.ne.s32.totalorder %s193, %s209
      %p211 = scmp.eq.s32.totalorder %s43, 0
      %p212 = por %p210, %p211
      %s213 = ssub.s32 %s45, %s52
      %p214 = scmp.eq.s32.totalorder %s213, 0
      %s216 = sadd.s32 %s215, 1
      %s217 = scalar_select %p214, %s215, %s216
      %p220 = pneg %p214
      %p221 = scmp.eq.s32.totalorder %s37, 3
      %p222 = por %p220, %p221
      %p223 = scmp.ne.s32.totalorder %s215, %s218
      %p224 = scmp.eq.s32.totalorder %s37, 0
      %p225 = por %p223, %p224
      %p226 = scmp.ne.s32.totalorder %s215, %s218
      %p227 = scmp.eq.s32.totalorder %s42, 3
      %p228 = por %p226, %p227
      %p229 = scmp.ne.s32.totalorder %s218, %s219
      %p230 = scmp.eq.s32.totalorder %s42, 0
      %p231 = por %p229, %p230
      %p232 = scmp.ne.s32.totalorder %s218, %s219
      %p233 = scmp.eq.s32.totalorder %s43, 3
      %p234 = por %p232, %p233
      %p236 = scmp.ne.s32.totalorder %s219, %s235
      %p237 = scmp.eq.s32.totalorder %s43, 0
      %p238 = por %p236, %p237
      %s239 = ssub.s32 %s45, %s52
      %p240 = scmp.eq.s32.totalorder %s239, 0
      %s242 = sadd.s32 %s241, 1
      %s243 = scalar_select %p240, %s241, %s242
      %p246 = pneg %p240
      %p247 = scmp.eq.s32.totalorder %s37, 3
      %p248 = por %p246, %p247
      %p249 = scmp.ne.s32.totalorder %s241, %s244
      %p250 = scmp.eq.s32.totalorder %s37, 0
      %p251 = por %p249, %p250
      %p252 = scmp.ne.s32.totalorder %s241, %s244
      %p253 = scmp.eq.s32.totalorder %s42, 3
      %p254 = por %p252, %p253
      %p255 = scmp.ne.s32.totalorder %s244, %s245
      %p256 = scmp.eq.s32.totalorder %s42, 0
      %p257 = por %p255, %p256
      %p258 = scmp.ne.s32.totalorder %s244, %s245
      %p259 = scmp.eq.s32.totalorder %s43, 3
      %p260 = por %p258, %p259
      %p262 = scmp.ne.s32.totalorder %s245, %s261
      %p263 = scmp.eq.s32.totalorder %s43, 0
      %p264 = por %p262, %p263
      %s265 = ssub.s32 %s45, %s52
      %p266 = scmp.eq.s32.totalorder %s265, 0
      %s268 = sadd.s32 %s267, 1
      %s269 = scalar_select %p266, %s267, %s268
      %p272 = pneg %p266
      %p273 = scmp.eq.s32.totalorder %s37, 3
      %p274 = por %p272, %p273
      %p275 = scmp.ne.s32.totalorder %s267, %s270
      %p276 = scmp.eq.s32.totalorder %s37, 0
      %p277 = por %p275, %p276
      %p278 = scmp.ne.s32.totalorder %s267, %s270
      %p279 = scmp.eq.s32.totalorder %s42, 3
      %p280 = por %p278, %p279
      %p281 = scmp.ne.s32.totalorder %s270, %s271
      %p282 = scmp.eq.s32.totalorder %s42, 0
      %p283 = por %p281, %p282
      %p284 = scmp.ne.s32.totalorder %s270, %s271
      %p285 = scmp.eq.s32.totalorder %s43, 3
      %p286 = por %p284, %p285
      %p288 = scmp.ne.s32.totalorder %s271, %s287
      %p289 = scmp.eq.s32.totalorder %s43, 0
      %p290 = por %p288, %p289
      %s291 = ssub.s32 %s45, %s52
      %p292 = scmp.eq.s32.totalorder %s291, 0
      %s294 = sadd.s32 %s293, 1
      %s295 = scalar_select %p292, %s293, %s294
      %p298 = pneg %p292
      %p299 = scmp.eq.s32.totalorder %s37, 3
      %p300 = por %p298, %p299
      %p301 = scmp.ne.s32.totalorder %s293, %s296
      %p302 = scmp.eq.s32.totalorder %s37, 0
      %p303 = por %p301, %p302
      %p304 = scmp.ne.s32.totalorder %s293, %s296
      %p305 = scmp.eq.s32.totalorder %s42, 3
      %p306 = por %p304, %p305
      %p307 = scmp.ne.s32.totalorder %s296, %s297
      %p308 = scmp.eq.s32.totalorder %s42, 0
      %p309 = por %p307, %p308
      %p310 = scmp.ne.s32.totalorder %s296, %s297
      %p311 = scmp.eq.s32.totalorder %s43, 3
      %p312 = por %p310, %p311
      %p314 = scmp.ne.s32.totalorder %s297, %s313
      %p315 = scmp.eq.s32.totalorder %s43, 0
      %p316 = por %p314, %p315
      %s317 = ssub.s32 %s45, %s52
      %p318 = scmp.eq.s32.totalorder %s317, 0
      %s320 = sadd.s32 %s319, 1
      %s321 = scalar_select %p318, %s319, %s320
      %p324 = pneg %p318
      %p325 = scmp.eq.s32.totalorder %s37, 3
      %p326 = por %p324, %p325
      %p327 = scmp.ne.s32.totalorder %s319, %s322
      %p328 = scmp.eq.s32.totalorder %s37, 0
      %p329 = por %p327, %p328
      %p330 = scmp.ne.s32.totalorder %s319, %s322
      %p331 = scmp.eq.s32.totalorder %s42, 3
      %p332 = por %p330, %p331
      %p333 = scmp.ne.s32.totalorder %s322, %s323
      %p334 = scmp.eq.s32.totalorder %s42, 0
      %p335 = por %p333, %p334
      %p336 = scmp.ne.s32.totalorder %s322, %s323
      %p337 = scmp.eq.s32.totalorder %s43, 3
      %p338 = por %p336, %p337
      %p340 = scmp.ne.s32.totalorder %s323, %s339
      %p341 = scmp.eq.s32.totalorder %s43, 0
      %p342 = por %p340, %p341
      %s343 = ssub.s32 %s45, %s52
      %p344 = scmp.eq.s32.totalorder %s343, 0
      %s346 = sadd.s32 %s345, 1
      %s347 = scalar_select %p344, %s345, %s346
      %p350 = pneg %p344
      %p351 = scmp.eq.s32.totalorder %s37, 3
      %p352 = por %p350, %p351
      %p353 = scmp.ne.s32.totalorder %s345, %s348
      %p354 = scmp.eq.s32.totalorder %s37, 0
      %p355 = por %p353, %p354
      %p356 = scmp.ne.s32.totalorder %s345, %s348
      %p357 = scmp.eq.s32.totalorder %s42, 3
      %p358 = por %p356, %p357
      %p359 = scmp.ne.s32.totalorder %s348, %s349
      %p360 = scmp.eq.s32.totalorder %s42, 0
      %p361 = por %p359, %p360
      %p362 = scmp.ne.s32.totalorder %s348, %s349
      %p363 = scmp.eq.s32.totalorder %s43, 3
      %p364 = por %p362, %p363
      %p366 = scmp.ne.s32.totalorder %s349, %s365
      %p367 = scmp.eq.s32.totalorder %s43, 0
      %p368 = por %p366, %p367
      %s369 = ssub.s32 %s45, %s52
      %p370 = scmp.eq.s32.totalorder %s369, 0
      %s372 = sadd.s32 %s371, 1
      %s373 = scalar_select %p370, %s371, %s372
      %p376 = pneg %p370
      %p377 = scmp.eq.s32.totalorder %s37, 3
      %p378 = por %p376, %p377
      %p379 = scmp.ne.s32.totalorder %s371, %s374
      %p380 = scmp.eq.s32.totalorder %s37, 0
      %p381 = por %p379, %p380
      %p382 = scmp.ne.s32.totalorder %s371, %s374
      %p383 = scmp.eq.s32.totalorder %s42, 3
      %p384 = por %p382, %p383
      %p385 = scmp.ne.s32.totalorder %s374, %s375
      %p386 = scmp.eq.s32.totalorder %s42, 0
      %p387 = por %p385, %p386
      %p388 = scmp.ne.s32.totalorder %s374, %s375
      %p389 = scmp.eq.s32.totalorder %s43, 3
      %p390 = por %p388, %p389
      %p392 = scmp.ne.s32.totalorder %s375, %s391
      %p393 = scmp.eq.s32.totalorder %s43, 0
      %p394 = por %p392, %p393
      %s395 = ssub.s32 %s45, %s52
      %p396 = scmp.eq.s32.totalorder %s395, 0
      %s398 = sadd.s32 %s397, 1
      %s399 = scalar_select %p396, %s397, %s398
      %p402 = pneg %p396
      %p403 = scmp.eq.s32.totalorder %s37, 3
      %p404 = por %p402, %p403
      %p405 = scmp.ne.s32.totalorder %s397, %s400
      %p406 = scmp.eq.s32.totalorder %s37, 0
      %p407 = por %p405, %p406
      %p408 = scmp.ne.s32.totalorder %s397, %s400
      %p409 = scmp.eq.s32.totalorder %s42, 3
      %p410 = por %p408, %p409
      %p411 = scmp.ne.s32.totalorder %s400, %s401
      %p412 = scmp.eq.s32.totalorder %s42, 0
      %p413 = por %p411, %p412
      %p414 = scmp.ne.s32.totalorder %s400, %s401
      %p415 = scmp.eq.s32.totalorder %s43, 3
      %p416 = por %p414, %p415
      %p418 = scmp.ne.s32.totalorder %s401, %s417
      %p419 = scmp.eq.s32.totalorder %s43, 0
      %p420 = por %p418, %p419
      %s422 = sadd.s32 %s421, 1
      %p425 = scmp.eq.s32.totalorder %s37, 3
      %p426 = scmp.ne.s32.totalorder %s421, %s423
      %p427 = scmp.eq.s32.totalorder %s37, 0
      %p428 = por %p426, %p427
      %p429 = scmp.ne.s32.totalorder %s421, %s423
      %p430 = scmp.eq.s32.totalorder %s42, 3
      %p431 = por %p429, %p430
      %p432 = scmp.ne.s32.totalorder %s423, %s424
      %p433 = scmp.eq.s32.totalorder %s42, 0
      %p434 = por %p432, %p433
      %p435 = scmp.ne.s32.totalorder %s423, %s424
      %p436 = scmp.eq.s32.totalorder %s43, 3
      %p437 = por %p435, %p436
      %p439 = scmp.ne.s32.totalorder %s424, %s438
      %p440 = scmp.eq.s32.totalorder %s43, 0
      %p441 = por %p439, %p440
      %s443 = sadd.s32 %s442, 1
      %p446 = scmp.eq.s32.totalorder %s37, 3
      %p447 = scmp.ne.s32.totalorder %s442, %s444
      %p448 = scmp.eq.s32.totalorder %s37, 0
      %p449 = por %p447, %p448
      %p450 = scmp.ne.s32.totalorder %s442, %s444
      %p451 = scmp.eq.s32.totalorder %s42, 3
      %p452 = por %p450, %p451
      %p453 = scmp.ne.s32.totalorder %s444, %s445
      %p454 = scmp.eq.s32.totalorder %s42, 0
      %p455 = por %p453, %p454
      %p456 = scmp.ne.s32.totalorder %s444, %s445
      %p457 = scmp.eq.s32.totalorder %s43, 3
      %p458 = por %p456, %p457
      %p460 = scmp.ne.s32.totalorder %s445, %s459
      %p461 = scmp.eq.s32.totalorder %s43, 0
      %p462 = por %p460, %p461
      %s463 = ssub.s32 %s44, %s56
      %p464 = scmp.eq.s32.totalorder %s463, 0
      %s466 = sadd.s32 %s465, 1
      %s467 = scalar_select %p464, %s465, %s466
      %p470 = pneg %p464
      %p471 = scmp.eq.s32.totalorder %s37, 3
      %p472 = por %p470, %p471
      %p473 = scmp.ne.s32.totalorder %s465, %s468
      %p474 = scmp.eq.s32.totalorder %s37, 0
      %p475 = por %p473, %p474
      %p476 = scmp.ne.s32.totalorder %s465, %s468
      %p477 = scmp.eq.s32.totalorder %s42, 3
      %p478 = por %p476, %p477
      %p479 = scmp.ne.s32.totalorder %s468, %s469
      %p480 = scmp.eq.s32.totalorder %s42, 0
      %p481 = por %p479, %p480
      %p482 = scmp.ne.s32.totalorder %s468, %s469
      %p483 = scmp.eq.s32.totalorder %s43, 3
      %p484 = por %p482, %p483
      %p486 = scmp.ne.s32.totalorder %s469, %s485
      %p487 = scmp.eq.s32.totalorder %s43, 0
      %p488 = por %p486, %p487
      %p489 = scmp.le.s32.totalorder 1, %s37
      %p490 = scmp.lt.s32.totalorder %s37, 5
      %p491 = pnand %p489, %p490
      %p492 = pneg %p491
      // Predicated region
      $region9: #{tpu_custom_call.1} parent=5 // pred_check
        _
      $region10: #{tpu_custom_call.1} parent=5 // pred_check_branch
        %494 = sbr.rel (%p491) target = $region12
      $region11: #{tpu_custom_call.1} parent=5 // pred_region
        %s495 = ssub.s32 %s37, 1
        // Predicated region
        $region13: #{tpu_custom_call.1} parent=11 // pred_check
          %p496 = pneg %p434
        $region14: #{tpu_custom_call.1} parent=11 // pred_check_branch
          %498 = sbr.rel (%p496) target = $region16
        $region15: #{tpu_custom_call.1} parent=11 // pred_region
          _
        $region16: #{tpu_custom_call.1} parent=11 // pred_fallthru
          _
        // Predicated region
        $region17: #{tpu_custom_call.1} parent=11 // pred_check
          %p499 = pneg %p455
        $region18: #{tpu_custom_call.1} parent=11 // pred_check_branch
          %501 = sbr.rel (%p499) target = $region20
        $region19: #{tpu_custom_call.1} parent=11 // pred_region
          _
        $region20: #{tpu_custom_call.1} parent=11 // pred_fallthru
          _
      $region12: #{tpu_custom_call.1} parent=5 // pred_fallthru
        _
      %p502 = scmp.lt.s32.totalorder %s37, 4
      // Predicated region
      $region21: #{tpu_custom_call.1} parent=5 // pred_check
        %p503 = pneg %p502
      $region22: #{tpu_custom_call.1} parent=5 // pred_check_branch
        %505 = sbr.rel (%p503) target = $region24
      $region23: #{tpu_custom_call.1} parent=5 // pred_region
        // Predicated region
        $region25: #{tpu_custom_call.1} parent=23 // pred_check
          %p506 = pneg %p69
        $region26: #{tpu_custom_call.1} parent=23 // pred_check_branch
          %508 = sbr.rel (%p506) target = $region28
        $region27: #{tpu_custom_call.1} parent=23 // pred_region
          %s509 = sand.u32 %s59, 1
          %s510 = scalar_lea.sflag [#allocation4], %s509
          %s511 = sand.u32 %s59, 1
          %s512 = smul.addr %s511, 32
          %s513 = scalar_lea.vmem [#allocation3], %s512
          %s514 = smul.u32 2, %s44
          %s516 = ssub.s32 512, 512
          %517 = vsyncadd %s510, %s516
          %s518 = smul.addr %s514, 2
          %s519 = smul.addr %s518, 128
          %s520 = scalar_lea.hbm %s0, %s519
          %s521 = sshll.u32 %s513, 4
          %s522 = int_to_ptr.vmem [resolvable:$true] %s521
          %527 = dma.hbm_to_vmem [thread:$0]  %s520, 512, %s522, %s510, 256, 256, 16
        $region28: #{tpu_custom_call.1} parent=23 // pred_fallthru
          _
        // Predicated region
        $region29: #{tpu_custom_call.1} parent=23 // pred_check
          %p528 = pneg %p95
        $region30: #{tpu_custom_call.1} parent=23 // pred_check_branch
          %530 = sbr.rel (%p528) target = $region32
        $region31: #{tpu_custom_call.1} parent=23 // pred_region
          %s531 = sand.u32 %s37, 1
          %s532 = scalar_lea.sflag [#allocation7], %s531
          %s533 = sand.u32 %s85, 1
          %s534 = smul.addr %s533, 2
          %s535 = scalar_lea.vmem [#allocation6], %s534
          %s536 = smul.u32 2, %s44
          %s538 = ssub.s32 32, 32
          %539 = vsyncadd %s532, %s538
          %s540 = smul.addr %s536, 16
          %s541 = scalar_lea.hbm %s1, %s540
          %s542 = sshll.u32 %s535, 4
          %s543 = int_to_ptr.vmem [resolvable:$true] %s542
          %548 = dma.hbm_to_vmem [thread:$0]  %s541, 32, %s543, %s532, 16, 16, 1
        $region32: #{tpu_custom_call.1} parent=23 // pred_fallthru
          _
        // Predicated region
        $region33: #{tpu_custom_call.1} parent=23 // pred_check
          %p549 = pneg %p121
        $region34: #{tpu_custom_call.1} parent=23 // pred_check_branch
          %551 = sbr.rel (%p549) target = $region36
        $region35: #{tpu_custom_call.1} parent=23 // pred_region
          %s552 = sand.u32 %s37, 1
          %s553 = scalar_lea.sflag [#allocation7], %s552
          %s554 = sand.u32 %s111, 1
          %s555 = smul.addr %s554, 768
          %s556 = scalar_lea.vmem [#allocation8], %s555
          %s558 = ssub.s32 12288, 12288
          %559 = vsyncadd %s553, %s558
          %s560 = smul.addr %s45, 192
          %s561 = smul.addr %s560, 64
          %s562 = scalar_lea.hbm %s2, %s561
          %s563 = sshll.u32 %s556, 4
          %s564 = int_to_ptr.vmem [resolvable:$true] %s563
          %569 = dma.hbm_to_vmem [thread:$0]  %s562, 12288, %s564, %s553, 384, 384, 24
        $region36: #{tpu_custom_call.1} parent=23 // pred_fallthru
          _
        // Predicated region
        $region37: #{tpu_custom_call.1} parent=23 // pred_check
          %p570 = pneg %p147
        $region38: #{tpu_custom_call.1} parent=23 // pred_check_branch
          %572 = sbr.rel (%p570) target = $region40
        $region39: #{tpu_custom_call.1} parent=23 // pred_region
          %s573 = sand.u32 %s37, 1
          %s574 = scalar_lea.sflag [#allocation10], %s573
          %s575 = sand.u32 %s137, 1
          %s576 = smul.addr %s575, 6
          %s577 = scalar_lea.vmem [#allocation9], %s576
          %s579 = ssub.s32 96, 96
          %580 = vsyncadd %s574, %s579
          %s581 = smul.addr %s45, 6
          %s582 = smul.addr %s581, 16
          %s583 = scalar_lea.hbm %s3, %s582
          %s585 = sshll.u32 %s577, 4
          %s586 = int_to_ptr.vmem [resolvable:$true] %s585
          %588 = dma.hbm_to_vmem [thread:$0]  %s583, 96, %s586, %s574
        $region40: #{tpu_custom_call.1} parent=23 // pred_fallthru
          _
        // Predicated region
        $region41: #{tpu_custom_call.1} parent=23 // pred_check
          %p589 = pneg %p173
        $region42: #{tpu_custom_call.1} parent=23 // pred_check_branch
          %591 = sbr.rel (%p589) target = $region44
        $region43: #{tpu_custom_call.1} parent=23 // pred_region
          %s592 = sand.u32 %s37, 1
          %s593 = scalar_lea.sflag [#allocation10], %s592
          %s594 = sand.u32 %s163, 1
          %s595 = smul.addr %s594, 256
          %s596 = scalar_lea.vmem [#allocation11], %s595
          %s598 = ssub.s32 4096, 4096
          %599 = vsyncadd %s593, %s598
          %s600 = smul.addr %s45, 64
          %s601 = smul.addr %s600, 64
          %s602 = scalar_lea.hbm %s4, %s601
          %s603 = sshll.u32 %s596, 4
          %s604 = int_to_ptr.vmem [resolvable:$true] %s603
          %609 = dma.hbm_to_vmem [thread:$0]  %s602, 4096, %s604, %s593, 128, 128, 8
        $region44: #{tpu_custom_call.1} parent=23 // pred_fallthru
          _
        // Predicated region
        $region45: #{tpu_custom_call.1} parent=23 // pred_check
          %p610 = pneg %p199
        $region46: #{tpu_custom_call.1} parent=23 // pred_check_branch
          %612 = sbr.rel (%p610) target = $region48
        $region47: #{tpu_custom_call.1} parent=23 // pred_region
          %p613 = scmp.lt.s32.totalorder %s45, 1
          %s614 = scalar_select %p613, %s45, 1
          %s615 = smul.addr %s614, 2
          %s616 = scalar_lea.vmem %s5, %s615
        $region48: #{tpu_custom_call.1} parent=23 // pred_fallthru
          _
        // Predicated region
        $region49: #{tpu_custom_call.1} parent=23 // pred_check
          %p617 = pneg %p225
        $region50: #{tpu_custom_call.1} parent=23 // pred_check_branch
          %619 = sbr.rel (%p617) target = $region52
        $region51: #{tpu_custom_call.1} parent=23 // pred_region
          %s620 = sand.u32 %s37, 1
          %s621 = scalar_lea.sflag [#allocation13], %s620
          %s622 = sand.u32 %s215, 1
          %s623 = smul.addr %s622, 512
          %s624 = scalar_lea.vmem [#allocation12], %s623
          %s626 = ssub.s32 8192, 8192
          %627 = vsyncadd %s621, %s626
          %s628 = smul.addr %s45, 128
          %s629 = smul.addr %s628, 64
          %s630 = scalar_lea.hbm %s6, %s629
          %s631 = sshll.u32 %s624, 4
          %s632 = int_to_ptr.vmem [resolvable:$true] %s631
          %637 = dma.hbm_to_vmem [thread:$0]  %s630, 8192, %s632, %s621, 256, 256, 16
        $region52: #{tpu_custom_call.1} parent=23 // pred_fallthru
          _
        // Predicated region
        $region53: #{tpu_custom_call.1} parent=23 // pred_check
          %p638 = pneg %p251
        $region54: #{tpu_custom_call.1} parent=23 // pred_check_branch
          %640 = sbr.rel (%p638) target = $region56
        $region55: #{tpu_custom_call.1} parent=23 // pred_region
          %p641 = scmp.lt.s32.totalorder %s45, 1
          %s642 = scalar_select %p641, %s45, 1
          %s643 = smul.addr %s642, 4
          %s644 = scalar_lea.vmem %s7, %s643
        $region56: #{tpu_custom_call.1} parent=23 // pred_fallthru
          _
        // Predicated region
        $region57: #{tpu_custom_call.1} parent=23 // pred_check
          %p645 = pneg %p277
        $region58: #{tpu_custom_call.1} parent=23 // pred_check_branch
          %647 = sbr.rel (%p645) target = $region60
        $region59: #{tpu_custom_call.1} parent=23 // pred_region
          %s648 = sand.u32 %s37, 1
          %s649 = scalar_lea.sflag [#allocation13], %s648
          %s650 = sand.u32 %s267, 1
          %s651 = smul.addr %s650, 512
          %s652 = scalar_lea.vmem [#allocation14], %s651
          %s654 = ssub.s32 8192, 8192
          %655 = vsyncadd %s649, %s654
          %s656 = smul.addr %s45, 128
          %s657 = smul.addr %s656, 64
          %s658 = scalar_lea.hbm %s8, %s657
          %s659 = sshll.u32 %s652, 4
          %s660 = int_to_ptr.vmem [resolvable:$true] %s659
          %665 = dma.hbm_to_vmem [thread:$0]  %s658, 8192, %s660, %s649, 128, 128, 8
        $region60: #{tpu_custom_call.1} parent=23 // pred_fallthru
          _
        // Predicated region
        $region61: #{tpu_custom_call.1} parent=23 // pred_check
          %p666 = pneg %p303
        $region62: #{tpu_custom_call.1} parent=23 // pred_check_branch
          %668 = sbr.rel (%p666) target = $region64
        $region63: #{tpu_custom_call.1} parent=23 // pred_region
          %p669 = scmp.lt.s32.totalorder %s45, 1
          %s670 = scalar_select %p669, %s45, 1
          %s671 = smul.addr %s670, 2
          %s672 = scalar_lea.vmem %s9, %s671
        $region64: #{tpu_custom_call.1} parent=23 // pred_fallthru
          _
        // Predicated region
        $region65: #{tpu_custom_call.1} parent=23 // pred_check
          %p673 = pneg %p329
        $region66: #{tpu_custom_call.1} parent=23 // pred_check_branch
          %675 = sbr.rel (%p673) target = $region68
        $region67: #{tpu_custom_call.1} parent=23 // pred_region
          %p676 = scmp.lt.s32.totalorder %s45, 1
          %s677 = scalar_select %p676, %s45, 1
          %s678 = smul.addr %s677, 2
          %s679 = scalar_lea.vmem %s10, %s678
        $region68: #{tpu_custom_call.1} parent=23 // pred_fallthru
          _
        // Predicated region
        $region69: #{tpu_custom_call.1} parent=23 // pred_check
          %p680 = pneg %p355
        $region70: #{tpu_custom_call.1} parent=23 // pred_check_branch
          %682 = sbr.rel (%p680) target = $region72
        $region71: #{tpu_custom_call.1} parent=23 // pred_region
          %p683 = scmp.lt.s32.totalorder %s45, 1
          %s684 = scalar_select %p683, %s45, 1
          %s685 = smul.addr %s684, 2
          %s686 = scalar_lea.vmem %s11, %s685
        $region72: #{tpu_custom_call.1} parent=23 // pred_fallthru
          _
        // Predicated region
        $region73: #{tpu_custom_call.1} parent=23 // pred_check
          %p687 = pneg %p381
        $region74: #{tpu_custom_call.1} parent=23 // pred_check_branch
          %689 = sbr.rel (%p687) target = $region76
        $region75: #{tpu_custom_call.1} parent=23 // pred_region
          %p690 = scmp.lt.s32.totalorder %s45, 1
          %s691 = scalar_select %p690, %s45, 1
          %s692 = smul.addr %s691, 2
          %s693 = scalar_lea.vmem %s12, %s692
        $region76: #{tpu_custom_call.1} parent=23 // pred_fallthru
          _
        // Predicated region
        $region77: #{tpu_custom_call.1} parent=23 // pred_check
          %p694 = pneg %p407
        $region78: #{tpu_custom_call.1} parent=23 // pred_check_branch
          %696 = sbr.rel (%p694) target = $region80
        $region79: #{tpu_custom_call.1} parent=23 // pred_region
          %p697 = scmp.lt.s32.totalorder %s45, 1
          %s698 = scalar_select %p697, %s45, 1
          %s699 = smul.addr %s698, 2
          %s700 = scalar_lea.vmem %s13, %s699
        $region80: #{tpu_custom_call.1} parent=23 // pred_fallthru
          _
      $region24: #{tpu_custom_call.1} parent=5 // pred_fallthru
        _
      %p701 = scmp.le.s32.totalorder 1, %s37
      %p702 = scmp.lt.s32.totalorder %s37, 5
      %p703 = pnand %p701, %p702
      %p704 = pneg %p703
      // Predicated region
      $region81: #{tpu_custom_call.1} parent=5 // pred_check
        _
      $region82: #{tpu_custom_call.1} parent=5 // pred_check_branch
        %706 = sbr.rel (%p703) target = $region84
      $region83: #{tpu_custom_call.1} parent=5 // pred_region
        %s707 = ssub.s32 %s37, 1
        %s708 = sand.u32 %s62, 1
        %s709 = scalar_lea.sflag [#allocation4], %s708
        %s710 = sand.u32 %s62, 1
        %s711 = smul.addr %s710, 32
        %s712 = scalar_lea.vmem [#allocation3], %s711
        // Predicated region
        $region85: #{tpu_custom_call.1} parent=83 // pred_check
          %p713 = pneg %p75
        $region86: #{tpu_custom_call.1} parent=83 // pred_check_branch
          %715 = sbr.rel (%p713) target = $region88
        $region87: #{tpu_custom_call.1} parent=83 // pred_region
          %716 = dma.done %s709, 512
        $region88: #{tpu_custom_call.1} parent=83 // pred_fallthru
          _
        %s717 = sand.u32 %s42, 1
        %s718 = scalar_lea.sflag [#allocation7], %s717
        %s719 = sand.u32 %s88, 1
        %s720 = smul.addr %s719, 2
        %s721 = scalar_lea.vmem [#allocation6], %s720
        // Predicated region
        $region89: #{tpu_custom_call.1} parent=83 // pred_check
          %p722 = pneg %p101
        $region90: #{tpu_custom_call.1} parent=83 // pred_check_branch
          %724 = sbr.rel (%p722) target = $region92
        $region91: #{tpu_custom_call.1} parent=83 // pred_region
          %725 = dma.done %s718, 32
        $region92: #{tpu_custom_call.1} parent=83 // pred_fallthru
          _
        %s726 = sand.u32 %s42, 1
        %s727 = scalar_lea.sflag [#allocation7], %s726
        %s728 = sand.u32 %s114, 1
        %s729 = smul.addr %s728, 768
        %s730 = scalar_lea.vmem [#allocation8], %s729
        // Predicated region
        $region93: #{tpu_custom_call.1} parent=83 // pred_check
          %p731 = pneg %p127
        $region94: #{tpu_custom_call.1} parent=83 // pred_check_branch
          %733 = sbr.rel (%p731) target = $region96
        $region95: #{tpu_custom_call.1} parent=83 // pred_region
          %734 = dma.done %s727, 12288
        $region96: #{tpu_custom_call.1} parent=83 // pred_fallthru
          _
        %s735 = sand.u32 %s42, 1
        %s736 = scalar_lea.sflag [#allocation10], %s735
        %s737 = sand.u32 %s140, 1
        %s738 = smul.addr %s737, 6
        %s739 = scalar_lea.vmem [#allocation9], %s738
        // Predicated region
        $region97: #{tpu_custom_call.1} parent=83 // pred_check
          %p740 = pneg %p153
        $region98: #{tpu_custom_call.1} parent=83 // pred_check_branch
          %742 = sbr.rel (%p740) target = $region100
        $region99: #{tpu_custom_call.1} parent=83 // pred_region
          %743 = dma.done %s736, 96
        $region100: #{tpu_custom_call.1} parent=83 // pred_fallthru
          _
        %s744 = sand.u32 %s42, 1
        %s745 = scalar_lea.sflag [#allocation10], %s744
        %s746 = sand.u32 %s166, 1
        %s747 = smul.addr %s746, 256
        %s748 = scalar_lea.vmem [#allocation11], %s747
        // Predicated region
        $region101: #{tpu_custom_call.1} parent=83 // pred_check
          %p749 = pneg %p179
        $region102: #{tpu_custom_call.1} parent=83 // pred_check_branch
          %751 = sbr.rel (%p749) target = $region104
        $region103: #{tpu_custom_call.1} parent=83 // pred_region
          %752 = dma.done %s745, 4096
        $region104: #{tpu_custom_call.1} parent=83 // pred_fallthru
          _
        %s753 = sand.u32 %s42, 1
        %s754 = scalar_lea.sflag [#allocation13], %s753
        %s755 = sand.u32 %s218, 1
        %s756 = smul.addr %s755, 512
        %s757 = scalar_lea.vmem [#allocation12], %s756
        // Predicated region
        $region105: #{tpu_custom_call.1} parent=83 // pred_check
          %p758 = pneg %p231
        $region106: #{tpu_custom_call.1} parent=83 // pred_check_branch
          %760 = sbr.rel (%p758) target = $region108
        $region107: #{tpu_custom_call.1} parent=83 // pred_region
          %761 = dma.done %s754, 8192
        $region108: #{tpu_custom_call.1} parent=83 // pred_fallthru
          _
        %s762 = sand.u32 %s42, 1
        %s763 = scalar_lea.sflag [#allocation13], %s762
        %s764 = sand.u32 %s270, 1
        %s765 = smul.addr %s764, 512
        %s766 = scalar_lea.vmem [#allocation14], %s765
        // Predicated region
        $region109: #{tpu_custom_call.1} parent=83 // pred_check
          %p767 = pneg %p283
        $region110: #{tpu_custom_call.1} parent=83 // pred_check_branch
          %769 = sbr.rel (%p767) target = $region112
        $region111: #{tpu_custom_call.1} parent=83 // pred_region
          %770 = dma.done %s763, 8192
        $region112: #{tpu_custom_call.1} parent=83 // pred_fallthru
          _
        %s771 = sand.u32 %s62, 1
        %s772 = scalar_lea.sflag [#allocation4], %s771
        %s773 = sand.u32 %s62, 1
        %s774 = smul.addr %s773, 32
        %s775 = scalar_lea.vmem [#allocation3], %s774
        %p776 = pneg %p75
        %p777 = pneg %p72
        %s778 = sand.u32 %s42, 1
        %s779 = scalar_lea.sflag [#allocation7], %s778
        %s780 = sand.u32 %s88, 1
        %s781 = smul.addr %s780, 2
        %s782 = scalar_lea.vmem [#allocation6], %s781
        %p783 = pneg %p101
        %p784 = pneg %p98
        %s785 = sand.u32 %s42, 1
        %s786 = scalar_lea.sflag [#allocation7], %s785
        %s787 = sand.u32 %s114, 1
        %s788 = smul.addr %s787, 768
        %s789 = scalar_lea.vmem [#allocation8], %s788
        %p790 = pneg %p127
        %p791 = pneg %p124
        %s792 = sand.u32 %s42, 1
        %s793 = scalar_lea.sflag [#allocation10], %s792
        %s794 = sand.u32 %s140, 1
        %s795 = smul.addr %s794, 6
        %s796 = scalar_lea.vmem [#allocation9], %s795
        %p797 = pneg %p153
        %p798 = pneg %p150
        %s799 = sand.u32 %s42, 1
        %s800 = scalar_lea.sflag [#allocation10], %s799
        %s801 = sand.u32 %s166, 1
        %s802 = smul.addr %s801, 256
        %s803 = scalar_lea.vmem [#allocation11], %s802
        %p804 = pneg %p179
        %p805 = pneg %p176
        %p806 = scmp.lt.s32.totalorder %s47, 1
        %s807 = scalar_select %p806, %s47, 1
        %s808 = smul.addr %s807, 2
        %s809 = scalar_lea.vmem %s5, %s808
        %p810 = pneg %p205
        %p811 = pneg %p202
        %s812 = sand.u32 %s42, 1
        %s813 = scalar_lea.sflag [#allocation13], %s812
        %s814 = sand.u32 %s218, 1
        %s815 = smul.addr %s814, 512
        %s816 = scalar_lea.vmem [#allocation12], %s815
        %p817 = pneg %p231
        %p818 = pneg %p228
        %p819 = scmp.lt.s32.totalorder %s47, 1
        %s820 = scalar_select %p819, %s47, 1
        %s821 = smul.addr %s820, 4
        %s822 = scalar_lea.vmem %s7, %s821
        %p823 = pneg %p257
        %p824 = pneg %p254
        %s825 = sand.u32 %s42, 1
        %s826 = scalar_lea.sflag [#allocation13], %s825
        %s827 = sand.u32 %s270, 1
        %s828 = smul.addr %s827, 512
        %s829 = scalar_lea.vmem [#allocation14], %s828
        %p830 = pneg %p283
        %p831 = pneg %p280
        %p832 = scmp.lt.s32.totalorder %s47, 1
        %s833 = scalar_select %p832, %s47, 1
        %s834 = smul.addr %s833, 2
        %s835 = scalar_lea.vmem %s9, %s834
        %p836 = pneg %p309
        %p837 = pneg %p306
        %p838 = scmp.lt.s32.totalorder %s47, 1
        %s839 = scalar_select %p838, %s47, 1
        %s840 = smul.addr %s839, 2
        %s841 = scalar_lea.vmem %s10, %s840
        %p842 = pneg %p335
        %p843 = pneg %p332
        %p844 = scmp.lt.s32.totalorder %s47, 1
        %s845 = scalar_select %p844, %s47, 1
        %s846 = smul.addr %s845, 2
        %s847 = scalar_lea.vmem %s11, %s846
        %p848 = pneg %p361
        %p849 = pneg %p358
        %p850 = scmp.lt.s32.totalorder %s47, 1
        %s851 = scalar_select %p850, %s47, 1
        %s852 = smul.addr %s851, 2
        %s853 = scalar_lea.vmem %s12, %s852
        %p854 = pneg %p387
        %p855 = pneg %p384
        %p856 = scmp.lt.s32.totalorder %s47, 1
        %s857 = scalar_select %p856, %s47, 1
        %s858 = smul.addr %s857, 2
        %s859 = scalar_lea.vmem %s13, %s858
        %p860 = pneg %p413
        %p861 = pneg %p410
        %p862 = pneg %p434
        %p863 = pneg %p431
        %p864 = pneg %p455
        %p865 = pneg %p452
        %p866 = pneg %p481
        %p867 = pneg %p478
        %s868 = sand.u32 %s468, 1
        %s869 = scalar_lea.sflag [#allocation5], %s868
        %s870 = sand.u32 %s468, 1
        %s871 = smul.addr %s870, 32
        %s872 = scalar_lea.vmem [#allocation15], %s871
        %s873 = smul.u32 2, %s46
        %s874 = smul.u32 2, %s46
        %p875 = scmp.lt.s32.totalorder %s47, 1
        %s876 = scalar_select %p875, %s47, 1
        %s877 = smul.addr %s876, 2
        %s878 = scalar_lea.vmem %s5, %s877
        %p879 = scmp.lt.s32.totalorder %s47, 1
        %s880 = scalar_select %p879, %s47, 1
        %s881 = smul.addr %s880, 4
        %s882 = scalar_lea.vmem %s7, %s881
        %p883 = scmp.lt.s32.totalorder %s47, 1
        %s884 = scalar_select %p883, %s47, 1
        %s885 = smul.addr %s884, 2
        %s886 = scalar_lea.vmem %s9, %s885
        %p887 = scmp.lt.s32.totalorder %s47, 1
        %s888 = scalar_select %p887, %s47, 1
        %s889 = smul.addr %s888, 2
        %s890 = scalar_lea.vmem %s10, %s889
        %p891 = scmp.lt.s32.totalorder %s47, 1
        %s892 = scalar_select %p891, %s47, 1
        %s893 = smul.addr %s892, 2
        %s894 = scalar_lea.vmem %s11, %s893
        %p895 = scmp.lt.s32.totalorder %s47, 1
        %s896 = scalar_select %p895, %s47, 1
        %s897 = smul.addr %s896, 2
        %s898 = scalar_lea.vmem %s12, %s897
        %p899 = scmp.lt.s32.totalorder %s47, 1
        %s900 = scalar_select %p899, %s47, 1
        %s901 = smul.addr %s900, 2
        %s902 = scalar_lea.vmem %s13, %s901
        %s903 = smul.u32 2, %s46
        %p905 = scmp.eq.s32.totalorder %s47, 0
        // Predicated region
        $region113: #{tpu_custom_call.1} parent=83 // pred_check
          %p906 = pneg %p905
        $region114: #{tpu_custom_call.1} parent=83 // pred_check_branch
          %908 = sbr.rel (%p906) target = $region116
        $region115: #{tpu_custom_call.1} parent=83 // pred_region
          %v909 = vld [vmem:[%s712] sm:$0xff]
          %v910 = vld [vmem:[%s712 + $0x8] sm:$0xff]
          %v911 = vld [vmem:[%s712 + $0x10] sm:$0xff]
          %v912 = vld [vmem:[%s712 + $0x18] sm:$0xff]
          %913 = vst [vmem:[#allocation2] sm:$0xff] %v909
          %914 = vst [vmem:[#allocation2 + $0x8] sm:$0xff] %v910
          %915 = vst [vmem:[#allocation2 + $0x10] sm:$0xff] %v911
          %916 = vst [vmem:[#allocation2 + $0x18] sm:$0xff] %v912
        $region116: #{tpu_custom_call.1} parent=83 // pred_fallthru
          _
        %v917 = vld [vmem:[#allocation2] sm:$0xff]
        %v918 = vld [vmem:[#allocation2 + $0x8] sm:$0xff]
        %v919 = vld [vmem:[#allocation2 + $0x10] sm:$0xff]
        %v920 = vld [vmem:[#allocation2 + $0x18] sm:$0xff]
        %v921 = vld [vmem:[%s890] sm:$0x3]
        %v922 = vld [vmem:[%s894] sm:$0x3]
        %v923 = vadd.f32 %v917, %v918
        %924 = vadd.xlane.f32.xlu0 %v923
        %v925 = vpop.xlane.xlu0 %924
        %v926 = vadd.f32 %v919, %v920
        %927 = vadd.xlane.f32.xlu0 %v926
        %v928 = vpop.xlane.xlu0 %927
        %v929 = vrcp.pop 256.0
        %v930 = vmul.f32 %v925, %v929
        %v931 = vmul.f32 %v928, %v929
        %v932 = vsub.f32 %v917, %v930
        %v933 = vsub.f32 %v918, %v930
        %v934 = vsub.f32 %v919, %v931
        %v935 = vsub.f32 %v920, %v931
        %v936 = vmul.f32 %v932, %v932
        %v937 = vmul.f32 %v933, %v933
        %v938 = vmul.f32 %v934, %v934
        %v939 = vmul.f32 %v935, %v935
        %v940 = vadd.f32 %v936, %v937
        %941 = vadd.xlane.f32.xlu0 %v940
        %v942 = vpop.xlane.xlu0 %941
        %v943 = vadd.f32 %v938, %v939
        %944 = vadd.xlane.f32.xlu0 %v943
        %v945 = vpop.xlane.xlu0 %944
        %v946 = vmul.f32 %v942, 0.003921569
        %v947 = vmul.f32 %v945, 0.003921569
        %v949 = vlaneseq
        %v950 = vshrl.u32 %v949, 7
        %v951 = vsub.s32 0, %v950
        %v952 = vrot.slane %v921, %v951
        %v953 = vlaneseq
        %v954 = vshrl.u32 %v953, 7
        %v955 = vsub.s32 1, %v954
        %v956 = vrot.slane %v921, %v955
        %v959 = vmul.f32 %v952, %v932
        %v960 = vmul.f32 %v956, %v933
        %v961 = vmul.f32 %v952, %v934
        %v962 = vmul.f32 %v956, %v935
        %v963 = vrsqrt.pop %v946
        %v964 = vmul.f32 %v946, %v963
        %vm965 = vcmp.eq.f32.partialorder %v946, inf
        %v966 = vsel %vm965, %v946, %v964
        %vm967 = vcmp.eq.f32.partialorder %v946, 0.0
        %v968 = vand.u32 %v946, 2147483648
        %v969 = vsel %vm967, %v968, %v966
        %v970 = vrsqrt.pop %v947
        %v971 = vmul.f32 %v947, %v970
        %vm972 = vcmp.eq.f32.partialorder %v947, inf
        %v973 = vsel %vm972, %v947, %v971
        %vm974 = vcmp.eq.f32.partialorder %v947, 0.0
        %v975 = vand.u32 %v947, 2147483648
        %v976 = vsel %vm974, %v975, %v973
        %v977 = vadd.f32 %v969, 1e-06
        %v978 = vadd.f32 %v976, 1e-06
        %v979 = vrcp.pop %v977
        %v980 = vmul.f32 %v959, %v979
        %v981 = vmul.f32 %v960, %v979
        %v982 = vrcp.pop %v978
        %v983 = vmul.f32 %v961, %v982
        %v984 = vmul.f32 %v962, %v982
        %v986 = vlaneseq
        %v987 = vshrl.u32 %v986, 7
        %v988 = vsub.s32 0, %v987
        %v989 = vrot.slane %v922, %v988
        %v990 = vlaneseq
        %v991 = vshrl.u32 %v990, 7
        %v992 = vsub.s32 1, %v991
        %v993 = vrot.slane %v922, %v992
        %v996 = vadd.f32 %v980, %v989
        %v997 = vadd.f32 %v981, %v993
        %v998 = vadd.f32 %v983, %v989
        %v999 = vadd.f32 %v984, %v993
        %v1000 = vpack.c.bf16 %v998, %v996
        %v1001 = vpack.c.bf16 %v999, %v997
        %v1002 = vld [vmem:[%s730] sm:$0xff]
        %v1003 = vld [vmem:[%s730 + $0x8] sm:$0xff]
        %v1004 = vld [vmem:[%s730 + $0x10] sm:$0xff]
        %v1005 = vld [vmem:[%s730 + $0x18] sm:$0xff]
        %v1006 = vld [vmem:[%s730 + $0x20] sm:$0xff]
        %v1007 = vld [vmem:[%s730 + $0x28] sm:$0xff]
        %v1008 = vld [vmem:[%s730 + $0x30] sm:$0xff]
        %v1009 = vld [vmem:[%s730 + $0x38] sm:$0xff]
        %v1010 = vld [vmem:[%s730 + $0x40] sm:$0xff]
        %v1011 = vld [vmem:[%s730 + $0x48] sm:$0xff]
        %v1012 = vld [vmem:[%s730 + $0x50] sm:$0xff]
        %v1013 = vld [vmem:[%s730 + $0x58] sm:$0xff]
        %v1014 = vld [vmem:[%s730 + $0x60] sm:$0xff]
        %v1015 = vld [vmem:[%s730 + $0x68] sm:$0xff]
        %v1016 = vld [vmem:[%s730 + $0x70] sm:$0xff]
        %v1017 = vld [vmem:[%s730 + $0x78] sm:$0xff]
        %v1018 = vld [vmem:[%s730 + $0x80] sm:$0xff]
        %v1019 = vld [vmem:[%s730 + $0x88] sm:$0xff]
        %v1020 = vld [vmem:[%s730 + $0x90] sm:$0xff]
        %v1021 = vld [vmem:[%s730 + $0x98] sm:$0xff]
        %v1022 = vld [vmem:[%s730 + $0xa0] sm:$0xff]
        %v1023 = vld [vmem:[%s730 + $0xa8] sm:$0xff]
        %v1024 = vld [vmem:[%s730 + $0xb0] sm:$0xff]
        %v1025 = vld [vmem:[%s730 + $0xb8] sm:$0xff]
        %v1026 = vld [vmem:[%s730 + $0xc0] sm:$0xff]
        %v1027 = vld [vmem:[%s730 + $0xc8] sm:$0xff]
        %v1028 = vld [vmem:[%s730 + $0xd0] sm:$0xff]
        %v1029 = vld [vmem:[%s730 + $0xd8] sm:$0xff]
        %v1030 = vld [vmem:[%s730 + $0xe0] sm:$0xff]
        %v1031 = vld [vmem:[%s730 + $0xe8] sm:$0xff]
        %v1032 = vld [vmem:[%s730 + $0xf0] sm:$0xff]
        %v1033 = vld [vmem:[%s730 + $0xf8] sm:$0xff]
        %v1034 = vld [vmem:[%s730 + $0x100] sm:$0xff]
        %v1035 = vld [vmem:[%s730 + $0x108] sm:$0xff]
        %v1036 = vld [vmem:[%s730 + $0x110] sm:$0xff]
        %v1037 = vld [vmem:[%s730 + $0x118] sm:$0xff]
        %v1038 = vld [vmem:[%s730 + $0x120] sm:$0xff]
        %v1039 = vld [vmem:[%s730 + $0x128] sm:$0xff]
        %v1040 = vld [vmem:[%s730 + $0x130] sm:$0xff]
        %v1041 = vld [vmem:[%s730 + $0x138] sm:$0xff]
        %v1042 = vld [vmem:[%s730 + $0x140] sm:$0xff]
        %v1043 = vld [vmem:[%s730 + $0x148] sm:$0xff]
        %v1044 = vld [vmem:[%s730 + $0x150] sm:$0xff]
        %v1045 = vld [vmem:[%s730 + $0x158] sm:$0xff]
        %v1046 = vld [vmem:[%s730 + $0x160] sm:$0xff]
        %v1047 = vld [vmem:[%s730 + $0x168] sm:$0xff]
        %v1048 = vld [vmem:[%s730 + $0x170] sm:$0xff]
        %v1049 = vld [vmem:[%s730 + $0x178] sm:$0xff]
        %v1050 = vld [vmem:[%s730 + $0x180] sm:$0xff]
        %v1051 = vld [vmem:[%s730 + $0x188] sm:$0xff]
        %v1052 = vld [vmem:[%s730 + $0x190] sm:$0xff]
        %v1053 = vld [vmem:[%s730 + $0x198] sm:$0xff]
        %v1054 = vld [vmem:[%s730 + $0x1a0] sm:$0xff]
        %v1055 = vld [vmem:[%s730 + $0x1a8] sm:$0xff]
        %v1056 = vld [vmem:[%s730 + $0x1b0] sm:$0xff]
        %v1057 = vld [vmem:[%s730 + $0x1b8] sm:$0xff]
        %v1058 = vld [vmem:[%s730 + $0x1c0] sm:$0xff]
        %v1059 = vld [vmem:[%s730 + $0x1c8] sm:$0xff]
        %v1060 = vld [vmem:[%s730 + $0x1d0] sm:$0xff]
        %v1061 = vld [vmem:[%s730 + $0x1d8] sm:$0xff]
        %v1062 = vld [vmem:[%s730 + $0x1e0] sm:$0xff]
        %v1063 = vld [vmem:[%s730 + $0x1e8] sm:$0xff]
        %v1064 = vld [vmem:[%s730 + $0x1f0] sm:$0xff]
        %v1065 = vld [vmem:[%s730 + $0x1f8] sm:$0xff]
        %v1066 = vld [vmem:[%s730 + $0x200] sm:$0xff]
        %v1067 = vld [vmem:[%s730 + $0x208] sm:$0xff]
        %v1068 = vld [vmem:[%s730 + $0x210] sm:$0xff]
        %v1069 = vld [vmem:[%s730 + $0x218] sm:$0xff]
        %v1070 = vld [vmem:[%s730 + $0x220] sm:$0xff]
        %v1071 = vld [vmem:[%s730 + $0x228] sm:$0xff]
        %v1072 = vld [vmem:[%s730 + $0x230] sm:$0xff]
        %v1073 = vld [vmem:[%s730 + $0x238] sm:$0xff]
        %v1074 = vld [vmem:[%s730 + $0x240] sm:$0xff]
        %v1075 = vld [vmem:[%s730 + $0x248] sm:$0xff]
        %v1076 = vld [vmem:[%s730 + $0x250] sm:$0xff]
        %v1077 = vld [vmem:[%s730 + $0x258] sm:$0xff]
        %v1078 = vld [vmem:[%s730 + $0x260] sm:$0xff]
        %v1079 = vld [vmem:[%s730 + $0x268] sm:$0xff]
        %v1080 = vld [vmem:[%s730 + $0x270] sm:$0xff]
        %v1081 = vld [vmem:[%s730 + $0x278] sm:$0xff]
        %v1082 = vld [vmem:[%s730 + $0x280] sm:$0xff]
        %v1083 = vld [vmem:[%s730 + $0x288] sm:$0xff]
        %v1084 = vld [vmem:[%s730 + $0x290] sm:$0xff]
        %v1085 = vld [vmem:[%s730 + $0x298] sm:$0xff]
        %v1086 = vld [vmem:[%s730 + $0x2a0] sm:$0xff]
        %v1087 = vld [vmem:[%s730 + $0x2a8] sm:$0xff]
        %v1088 = vld [vmem:[%s730 + $0x2b0] sm:$0xff]
        %v1089 = vld [vmem:[%s730 + $0x2b8] sm:$0xff]
        %v1090 = vld [vmem:[%s730 + $0x2c0] sm:$0xff]
        %v1091 = vld [vmem:[%s730 + $0x2c8] sm:$0xff]
        %v1092 = vld [vmem:[%s730 + $0x2d0] sm:$0xff]
        %v1093 = vld [vmem:[%s730 + $0x2d8] sm:$0xff]
        %v1094 = vld [vmem:[%s730 + $0x2e0] sm:$0xff]
        %v1095 = vld [vmem:[%s730 + $0x2e8] sm:$0xff]
        %v1096 = vld [vmem:[%s730 + $0x2f0] sm:$0xff]
        %v1097 = vld [vmem:[%s730 + $0x2f8] sm:$0xff]
        %v1098 = vld [vmem:[%s739] sm:$0x3f]
        %v1100 = vlaneseq
        %v1101 = vshrl.u32 %v1100, 7
        %v1102 = vsub.s32 0, %v1101
        %v1103 = vrot.slane %v1098, %v1102
        %v1104 = vlaneseq
        %v1105 = vshrl.u32 %v1104, 7
        %v1106 = vsub.s32 1, %v1105
        %v1107 = vrot.slane %v1098, %v1106
        %v1108 = vlaneseq
        %v1109 = vshrl.u32 %v1108, 7
        %v1110 = vsub.s32 2, %v1109
        %v1111 = vrot.slane %v1098, %v1110
        %v1112 = vlaneseq
        %v1113 = vshrl.u32 %v1112, 7
        %v1114 = vsub.s32 3, %v1113
        %v1115 = vrot.slane %v1098, %v1114
        %v1116 = vlaneseq
        %v1117 = vshrl.u32 %v1116, 7
        %v1118 = vsub.s32 4, %v1117
        %v1119 = vrot.slane %v1098, %v1118
        %v1120 = vlaneseq
        %v1121 = vshrl.u32 %v1120, 7
        %v1122 = vsub.s32 5, %v1121
        %v1123 = vrot.slane %v1098, %v1122
        %v1226 = vunpack.c.l.b16 %v1002
        %v1227 = vunpack.c.h.b16 %v1002
        %v1228 = vunpack.c.l.b16 %v1003
        %v1229 = vunpack.c.h.b16 %v1003
        %v1230 = vunpack.c.l.b16 %v1004
        %v1231 = vunpack.c.h.b16 %v1004
        %v1232 = vunpack.c.l.b16 %v1005
        %v1233 = vunpack.c.h.b16 %v1005
        %v1234 = vunpack.c.l.b16 %v1006
        %v1235 = vunpack.c.h.b16 %v1006
        %v1236 = vunpack.c.l.b16 %v1007
        %v1237 = vunpack.c.h.b16 %v1007
        %v1238 = vunpack.c.l.b16 %v1008
        %v1239 = vunpack.c.h.b16 %v1008
        %v1240 = vunpack.c.l.b16 %v1009
        %v1241 = vunpack.c.h.b16 %v1009
        %v1242 = vunpack.c.l.b16 %v1010
        %v1243 = vunpack.c.h.b16 %v1010
        %v1244 = vunpack.c.l.b16 %v1011
        %v1245 = vunpack.c.h.b16 %v1011
        %v1246 = vunpack.c.l.b16 %v1012
        %v1247 = vunpack.c.h.b16 %v1012
        %v1248 = vunpack.c.l.b16 %v1013
        %v1249 = vunpack.c.h.b16 %v1013
        %v1250 = vunpack.c.l.b16 %v1014
        %v1251 = vunpack.c.h.b16 %v1014
        %v1252 = vunpack.c.l.b16 %v1015
        %v1253 = vunpack.c.h.b16 %v1015
        %v1254 = vunpack.c.l.b16 %v1016
        %v1255 = vunpack.c.h.b16 %v1016
        %v1256 = vunpack.c.l.b16 %v1017
        %v1257 = vunpack.c.h.b16 %v1017
        %v1258 = vunpack.c.l.b16 %v1018
        %v1259 = vunpack.c.h.b16 %v1018
        %v1260 = vunpack.c.l.b16 %v1019
        %v1261 = vunpack.c.h.b16 %v1019
        %v1262 = vunpack.c.l.b16 %v1020
        %v1263 = vunpack.c.h.b16 %v1020
        %v1264 = vunpack.c.l.b16 %v1021
        %v1265 = vunpack.c.h.b16 %v1021
        %v1266 = vunpack.c.l.b16 %v1022
        %v1267 = vunpack.c.h.b16 %v1022
        %v1268 = vunpack.c.l.b16 %v1023
        %v1269 = vunpack.c.h.b16 %v1023
        %v1270 = vunpack.c.l.b16 %v1024
        %v1271 = vunpack.c.h.b16 %v1024
        %v1272 = vunpack.c.l.b16 %v1025
        %v1273 = vunpack.c.h.b16 %v1025
        %v1274 = vunpack.c.l.b16 %v1026
        %v1275 = vunpack.c.h.b16 %v1026
        %v1276 = vunpack.c.l.b16 %v1027
        %v1277 = vunpack.c.h.b16 %v1027
        %v1278 = vunpack.c.l.b16 %v1028
        %v1279 = vunpack.c.h.b16 %v1028
        %v1280 = vunpack.c.l.b16 %v1029
        %v1281 = vunpack.c.h.b16 %v1029
        %v1282 = vunpack.c.l.b16 %v1030
        %v1283 = vunpack.c.h.b16 %v1030
        %v1284 = vunpack.c.l.b16 %v1031
        %v1285 = vunpack.c.h.b16 %v1031
        %v1286 = vunpack.c.l.b16 %v1032
        %v1287 = vunpack.c.h.b16 %v1032
        %v1288 = vunpack.c.l.b16 %v1033
        %v1289 = vunpack.c.h.b16 %v1033
        %v1290 = vunpack.c.l.b16 %v1034
        %v1291 = vunpack.c.h.b16 %v1034
        %v1292 = vunpack.c.l.b16 %v1035
        %v1293 = vunpack.c.h.b16 %v1035
        %v1294 = vunpack.c.l.b16 %v1036
        %v1295 = vunpack.c.h.b16 %v1036
        %v1296 = vunpack.c.l.b16 %v1037
        %v1297 = vunpack.c.h.b16 %v1037
        %v1298 = vunpack.c.l.b16 %v1038
        %v1299 = vunpack.c.h.b16 %v1038
        %v1300 = vunpack.c.l.b16 %v1039
        %v1301 = vunpack.c.h.b16 %v1039
        %v1302 = vunpack.c.l.b16 %v1040
        %v1303 = vunpack.c.h.b16 %v1040
        %v1304 = vunpack.c.l.b16 %v1041
        %v1305 = vunpack.c.h.b16 %v1041
        %v1306 = vunpack.c.l.b16 %v1042
        %v1307 = vunpack.c.h.b16 %v1042
        %v1308 = vunpack.c.l.b16 %v1043
        %v1309 = vunpack.c.h.b16 %v1043
        %v1310 = vunpack.c.l.b16 %v1044
        %v1311 = vunpack.c.h.b16 %v1044
        %v1312 = vunpack.c.l.b16 %v1045
        %v1313 = vunpack.c.h.b16 %v1045
        %v1314 = vunpack.c.l.b16 %v1046
        %v1315 = vunpack.c.h.b16 %v1046
        %v1316 = vunpack.c.l.b16 %v1047
        %v1317 = vunpack.c.h.b16 %v1047
        %v1318 = vunpack.c.l.b16 %v1048
        %v1319 = vunpack.c.h.b16 %v1048
        %v1320 = vunpack.c.l.b16 %v1049
        %v1321 = vunpack.c.h.b16 %v1049
        %v1322 = vunpack.c.l.b16 %v1050
        %v1323 = vunpack.c.h.b16 %v1050
        %v1324 = vunpack.c.l.b16 %v1051
        %v1325 = vunpack.c.h.b16 %v1051
        %v1326 = vunpack.c.l.b16 %v1052
        %v1327 = vunpack.c.h.b16 %v1052
        %v1328 = vunpack.c.l.b16 %v1053
        %v1329 = vunpack.c.h.b16 %v1053
        %v1330 = vunpack.c.l.b16 %v1054
        %v1331 = vunpack.c.h.b16 %v1054
        %v1332 = vunpack.c.l.b16 %v1055
        %v1333 = vunpack.c.h.b16 %v1055
        %v1334 = vunpack.c.l.b16 %v1056
        %v1335 = vunpack.c.h.b16 %v1056
        %v1336 = vunpack.c.l.b16 %v1057
        %v1337 = vunpack.c.h.b16 %v1057
        %v1338 = vunpack.c.l.b16 %v1058
        %v1339 = vunpack.c.h.b16 %v1058
        %v1340 = vunpack.c.l.b16 %v1059
        %v1341 = vunpack.c.h.b16 %v1059
        %v1342 = vunpack.c.l.b16 %v1060
        %v1343 = vunpack.c.h.b16 %v1060
        %v1344 = vunpack.c.l.b16 %v1061
        %v1345 = vunpack.c.h.b16 %v1061
        %v1346 = vunpack.c.l.b16 %v1062
        %v1347 = vunpack.c.h.b16 %v1062
        %v1348 = vunpack.c.l.b16 %v1063
        %v1349 = vunpack.c.h.b16 %v1063
        %v1350 = vunpack.c.l.b16 %v1064
        %v1351 = vunpack.c.h.b16 %v1064
        %v1352 = vunpack.c.l.b16 %v1065
        %v1353 = vunpack.c.h.b16 %v1065
        %v1354 = vunpack.c.l.b16 %v1066
        %v1355 = vunpack.c.h.b16 %v1066
        %v1356 = vunpack.c.l.b16 %v1067
        %v1357 = vunpack.c.h.b16 %v1067
        %v1358 = vunpack.c.l.b16 %v1068
        %v1359 = vunpack.c.h.b16 %v1068
        %v1360 = vunpack.c.l.b16 %v1069
        %v1361 = vunpack.c.h.b16 %v1069
        %v1362 = vunpack.c.l.b16 %v1070
        %v1363 = vunpack.c.h.b16 %v1070
        %v1364 = vunpack.c.l.b16 %v1071
        %v1365 = vunpack.c.h.b16 %v1071
        %v1366 = vunpack.c.l.b16 %v1072
        %v1367 = vunpack.c.h.b16 %v1072
        %v1368 = vunpack.c.l.b16 %v1073
        %v1369 = vunpack.c.h.b16 %v1073
        %v1370 = vunpack.c.l.b16 %v1074
        %v1371 = vunpack.c.h.b16 %v1074
        %v1372 = vunpack.c.l.b16 %v1075
        %v1373 = vunpack.c.h.b16 %v1075
        %v1374 = vunpack.c.l.b16 %v1076
        %v1375 = vunpack.c.h.b16 %v1076
        %v1376 = vunpack.c.l.b16 %v1077
        %v1377 = vunpack.c.h.b16 %v1077
        %v1378 = vunpack.c.l.b16 %v1078
        %v1379 = vunpack.c.h.b16 %v1078
        %v1380 = vunpack.c.l.b16 %v1079
        %v1381 = vunpack.c.h.b16 %v1079
        %v1382 = vunpack.c.l.b16 %v1080
        %v1383 = vunpack.c.h.b16 %v1080
        %v1384 = vunpack.c.l.b16 %v1081
        %v1385 = vunpack.c.h.b16 %v1081
        %v1386 = vunpack.c.l.b16 %v1082
        %v1387 = vunpack.c.h.b16 %v1082
        %v1388 = vunpack.c.l.b16 %v1083
        %v1389 = vunpack.c.h.b16 %v1083
        %v1390 = vunpack.c.l.b16 %v1084
        %v1391 = vunpack.c.h.b16 %v1084
        %v1392 = vunpack.c.l.b16 %v1085
        %v1393 = vunpack.c.h.b16 %v1085
        %v1394 = vunpack.c.l.b16 %v1086
        %v1395 = vunpack.c.h.b16 %v1086
        %v1396 = vunpack.c.l.b16 %v1087
        %v1397 = vunpack.c.h.b16 %v1087
        %v1398 = vunpack.c.l.b16 %v1088
        %v1399 = vunpack.c.h.b16 %v1088
        %v1400 = vunpack.c.l.b16 %v1089
        %v1401 = vunpack.c.h.b16 %v1089
        %v1402 = vunpack.c.l.b16 %v1090
        %v1403 = vunpack.c.h.b16 %v1090
        %v1404 = vunpack.c.l.b16 %v1091
        %v1405 = vunpack.c.h.b16 %v1091
        %v1406 = vunpack.c.l.b16 %v1092
        %v1407 = vunpack.c.h.b16 %v1092
        %v1408 = vunpack.c.l.b16 %v1093
        %v1409 = vunpack.c.h.b16 %v1093
        %v1410 = vunpack.c.l.b16 %v1094
        %v1411 = vunpack.c.h.b16 %v1094
        %v1412 = vunpack.c.l.b16 %v1095
        %v1413 = vunpack.c.h.b16 %v1095
        %v1414 = vunpack.c.l.b16 %v1096
        %v1415 = vunpack.c.h.b16 %v1096
        %v1416 = vunpack.c.l.b16 %v1097
        %v1417 = vunpack.c.h.b16 %v1097
        %v1418 = vpack.c.b16 %v1232, %v1226
        %v1419 = vpack.c.b16 %v1233, %v1227
        %v1420 = vpack.c.b16 %v1234, %v1228
        %v1421 = vpack.c.b16 %v1235, %v1229
        %v1422 = vpack.c.b16 %v1236, %v1230
        %v1423 = vpack.c.b16 %v1237, %v1231
        %v1424 = vpack.c.b16 %v1244, %v1238
        %v1425 = vpack.c.b16 %v1245, %v1239
        %v1426 = vpack.c.b16 %v1246, %v1240
        %v1427 = vpack.c.b16 %v1247, %v1241
        %v1428 = vpack.c.b16 %v1248, %v1242
        %v1429 = vpack.c.b16 %v1249, %v1243
        %v1430 = vpack.c.b16 %v1256, %v1250
        %v1431 = vpack.c.b16 %v1257, %v1251
        %v1432 = vpack.c.b16 %v1258, %v1252
        %v1433 = vpack.c.b16 %v1259, %v1253
        %v1434 = vpack.c.b16 %v1260, %v1254
        %v1435 = vpack.c.b16 %v1261, %v1255
        %v1436 = vpack.c.b16 %v1268, %v1262
        %v1437 = vpack.c.b16 %v1269, %v1263
        %v1438 = vpack.c.b16 %v1270, %v1264
        %v1439 = vpack.c.b16 %v1271, %v1265
        %v1440 = vpack.c.b16 %v1272, %v1266
        %v1441 = vpack.c.b16 %v1273, %v1267
        %v1442 = vpack.c.b16 %v1280, %v1274
        %v1443 = vpack.c.b16 %v1281, %v1275
        %v1444 = vpack.c.b16 %v1282, %v1276
        %v1445 = vpack.c.b16 %v1283, %v1277
        %v1446 = vpack.c.b16 %v1284, %v1278
        %v1447 = vpack.c.b16 %v1285, %v1279
        %v1448 = vpack.c.b16 %v1292, %v1286
        %v1449 = vpack.c.b16 %v1293, %v1287
        %v1450 = vpack.c.b16 %v1294, %v1288
        %v1451 = vpack.c.b16 %v1295, %v1289
        %v1452 = vpack.c.b16 %v1296, %v1290
        %v1453 = vpack.c.b16 %v1297, %v1291
        %v1454 = vpack.c.b16 %v1304, %v1298
        %v1455 = vpack.c.b16 %v1305, %v1299
        %v1456 = vpack.c.b16 %v1306, %v1300
        %v1457 = vpack.c.b16 %v1307, %v1301
        %v1458 = vpack.c.b16 %v1308, %v1302
        %v1459 = vpack.c.b16 %v1309, %v1303
        %v1460 = vpack.c.b16 %v1316, %v1310
        %v1461 = vpack.c.b16 %v1317, %v1311
        %v1462 = vpack.c.b16 %v1318, %v1312
        %v1463 = vpack.c.b16 %v1319, %v1313
        %v1464 = vpack.c.b16 %v1320, %v1314
        %v1465 = vpack.c.b16 %v1321, %v1315
        %v1466 = vpack.c.b16 %v1328, %v1322
        %v1467 = vpack.c.b16 %v1329, %v1323
        %v1468 = vpack.c.b16 %v1330, %v1324
        %v1469 = vpack.c.b16 %v1331, %v1325
        %v1470 = vpack.c.b16 %v1332, %v1326
        %v1471 = vpack.c.b16 %v1333, %v1327
        %v1472 = vpack.c.b16 %v1340, %v1334
        %v1473 = vpack.c.b16 %v1341, %v1335
        %v1474 = vpack.c.b16 %v1342, %v1336
        %v1475 = vpack.c.b16 %v1343, %v1337
        %v1476 = vpack.c.b16 %v1344, %v1338
        %v1477 = vpack.c.b16 %v1345, %v1339
        %v1478 = vpack.c.b16 %v1352, %v1346
        %v1479 = vpack.c.b16 %v1353, %v1347
        %v1480 = vpack.c.b16 %v1354, %v1348
        %v1481 = vpack.c.b16 %v1355, %v1349
        %v1482 = vpack.c.b16 %v1356, %v1350
        %v1483 = vpack.c.b16 %v1357, %v1351
        %v1484 = vpack.c.b16 %v1364, %v1358
        %v1485 = vpack.c.b16 %v1365, %v1359
        %v1486 = vpack.c.b16 %v1366, %v1360
        %v1487 = vpack.c.b16 %v1367, %v1361
        %v1488 = vpack.c.b16 %v1368, %v1362
        %v1489 = vpack.c.b16 %v1369, %v1363
        %v1490 = vpack.c.b16 %v1376, %v1370
        %v1491 = vpack.c.b16 %v1377, %v1371
        %v1492 = vpack.c.b16 %v1378, %v1372
        %v1493 = vpack.c.b16 %v1379, %v1373
        %v1494 = vpack.c.b16 %v1380, %v1374
        %v1495 = vpack.c.b16 %v1381, %v1375
        %v1496 = vpack.c.b16 %v1388, %v1382
        %v1497 = vpack.c.b16 %v1389, %v1383
        %v1498 = vpack.c.b16 %v1390, %v1384
        %v1499 = vpack.c.b16 %v1391, %v1385
        %v1500 = vpack.c.b16 %v1392, %v1386
        %v1501 = vpack.c.b16 %v1393, %v1387
        %v1502 = vpack.c.b16 %v1400, %v1394
        %v1503 = vpack.c.b16 %v1401, %v1395
        %v1504 = vpack.c.b16 %v1402, %v1396
        %v1505 = vpack.c.b16 %v1403, %v1397
        %v1506 = vpack.c.b16 %v1404, %v1398
        %v1507 = vpack.c.b16 %v1405, %v1399
        %v1508 = vpack.c.b16 %v1412, %v1406
        %v1509 = vpack.c.b16 %v1413, %v1407
        %v1510 = vpack.c.b16 %v1414, %v1408
        %v1511 = vpack.c.b16 %v1415, %v1409
        %v1512 = vpack.c.b16 %v1416, %v1410
        %v1513 = vpack.c.b16 %v1417, %v1411
        %1610 = vmatprep.subr.bf16.mxu0 %v1419
        %1611 = vmatpush1.bf16.msra.mxu0 %v1418
        %1612 = vmatprep.subr.bf16.mxu0 %v1425
        %1613 = vmatpush1.bf16.msra.mxu0 %v1424
        %1614 = vmatprep.subr.bf16.mxu0 %v1431
        %1615 = vmatpush1.bf16.msra.mxu0 %v1430
        %1616 = vmatprep.subr.bf16.mxu0 %v1437
        %1617 = vmatpush1.bf16.msra.mxu0 %v1436
        %1618 = vmatprep.subr.bf16.mxu0 %v1443
        %1619 = vmatpush1.bf16.msra.mxu0 %v1442
        %1620 = vmatprep.subr.bf16.mxu0 %v1449
        %1621 = vmatpush1.bf16.msra.mxu0 %v1448
        %1622 = vmatprep.subr.bf16.mxu0 %v1455
        %1623 = vmatpush1.bf16.msra.mxu0 %v1454
        %1624 = vmatprep.subr.bf16.mxu0 %v1461
        %1625 = vmatpush1.bf16.msra.mxu0 %v1460
        %1626 = vmatprep.subr.bf16.mxu0 %v1467
        %1627 = vmatpush1.bf16.msra.mxu0 %v1466
        %1628 = vmatprep.subr.bf16.mxu0 %v1473
        %1629 = vmatpush1.bf16.msra.mxu0 %v1472
        %1630 = vmatprep.subr.bf16.mxu0 %v1479
        %1631 = vmatpush1.bf16.msra.mxu0 %v1478
        %1632 = vmatprep.subr.bf16.mxu0 %v1485
        %1633 = vmatpush1.bf16.msra.mxu0 %v1484
        %1634 = vmatprep.subr.bf16.mxu0 %v1491
        %1635 = vmatpush1.bf16.msra.mxu0 %v1490
        %1636 = vmatprep.subr.bf16.mxu0 %v1497
        %1637 = vmatpush1.bf16.msra.mxu0 %v1496
        %1638 = vmatprep.subr.bf16.mxu0 %v1503
        %1639 = vmatpush1.bf16.msra.mxu0 %v1502
        %1640 = vmatprep.subr.bf16.mxu0 %v1509
        %1641 = vmatpush1.bf16.msra.mxu0 %v1508
        %1642 = vmatprep.mubr.bf16.mxu0 %v1001
        %1643 = vmatmul.mubr.bf16.gmra.mrb[0].mxu0 %v1000
        %v1644 = vpop.f32.mrb[0].mxu0
        %v1645 = vadd.f32 %v1103, %v1644
        %v1646 = vpop.f32.mrb[0].mxu0
        %v1647 = vadd.f32 %v1107, %v1646
        %v1648 = vpop.f32.mrb[0].mxu0
        %v1649 = vadd.f32 %v1103, %v1648
        %v1650 = vpop.f32.mrb[0].mxu0
        %v1651 = vadd.f32 %v1107, %v1650
        %1652 = vdwg.mxu0
        %1653 = vmatprep.subr.bf16.mxu0 %v1421
        %1654 = vmatpush1.bf16.msra.mxu0 %v1420
        %1655 = vmatprep.subr.bf16.mxu0 %v1427
        %1656 = vmatpush1.bf16.msra.mxu0 %v1426
        %1657 = vmatprep.subr.bf16.mxu0 %v1433
        %1658 = vmatpush1.bf16.msra.mxu0 %v1432
        %1659 = vmatprep.subr.bf16.mxu0 %v1439
        %1660 = vmatpush1.bf16.msra.mxu0 %v1438
        %1661 = vmatprep.subr.bf16.mxu0 %v1445
        %1662 = vmatpush1.bf16.msra.mxu0 %v1444
        %1663 = vmatprep.subr.bf16.mxu0 %v1451
        %1664 = vmatpush1.bf16.msra.mxu0 %v1450
        %1665 = vmatprep.subr.bf16.mxu0 %v1457
        %1666 = vmatpush1.bf16.msra.mxu0 %v1456
        %1667 = vmatprep.subr.bf16.mxu0 %v1463
        %1668 = vmatpush1.bf16.msra.mxu0 %v1462
        %1669 = vmatprep.subr.bf16.mxu0 %v1469
        %1670 = vmatpush1.bf16.msra.mxu0 %v1468
        %1671 = vmatprep.subr.bf16.mxu0 %v1475
        %1672 = vmatpush1.bf16.msra.mxu0 %v1474
        %1673 = vmatprep.subr.bf16.mxu0 %v1481
        %1674 = vmatpush1.bf16.msra.mxu0 %v1480
        %1675 = vmatprep.subr.bf16.mxu0 %v1487
        %1676 = vmatpush1.bf16.msra.mxu0 %v1486
        %1677 = vmatprep.subr.bf16.mxu0 %v1493
        %1678 = vmatpush1.bf16.msra.mxu0 %v1492
        %1679 = vmatprep.subr.bf16.mxu0 %v1499
        %1680 = vmatpush1.bf16.msra.mxu0 %v1498
        %1681 = vmatprep.subr.bf16.mxu0 %v1505
        %1682 = vmatpush1.bf16.msra.mxu0 %v1504
        %1683 = vmatprep.subr.bf16.mxu0 %v1511
        %1684 = vmatpush1.bf16.msra.mxu0 %v1510
        %1685 = vmatprep.mubr.bf16.mxu0 %v1001
        %1686 = vmatmul.mubr.bf16.gmra.mrb[0].mxu0 %v1000
        %v1687 = vpop.f32.mrb[0].mxu0
        %v1688 = vadd.f32 %v1111, %v1687
        %v1689 = vpop.f32.mrb[0].mxu0
        %v1690 = vadd.f32 %v1115, %v1689
        %v1691 = vpop.f32.mrb[0].mxu0
        %v1692 = vadd.f32 %v1111, %v1691
        %v1693 = vpop.f32.mrb[0].mxu0
        %v1694 = vadd.f32 %v1115, %v1693
        %1695 = vdwg.mxu0
        %1696 = vmatprep.subr.bf16.mxu0 %v1423
        %1697 = vmatpush1.bf16.msra.mxu0 %v1422
        %1698 = vmatprep.subr.bf16.mxu0 %v1429
        %1699 = vmatpush1.bf16.msra.mxu0 %v1428
        %1700 = vmatprep.subr.bf16.mxu0 %v1435
        %1701 = vmatpush1.bf16.msra.mxu0 %v1434
        %1702 = vmatprep.subr.bf16.mxu0 %v1441
        %1703 = vmatpush1.bf16.msra.mxu0 %v1440
        %1704 = vmatprep.subr.bf16.mxu0 %v1447
        %1705 = vmatpush1.bf16.msra.mxu0 %v1446
        %1706 = vmatprep.subr.bf16.mxu0 %v1453
        %1707 = vmatpush1.bf16.msra.mxu0 %v1452
        %1708 = vmatprep.subr.bf16.mxu0 %v1459
        %1709 = vmatpush1.bf16.msra.mxu0 %v1458
        %1710 = vmatprep.subr.bf16.mxu0 %v1465
        %1711 = vmatpush1.bf16.msra.mxu0 %v1464
        %1712 = vmatprep.subr.bf16.mxu0 %v1471
        %1713 = vmatpush1.bf16.msra.mxu0 %v1470
        %1714 = vmatprep.subr.bf16.mxu0 %v1477
        %1715 = vmatpush1.bf16.msra.mxu0 %v1476
        %1716 = vmatprep.subr.bf16.mxu0 %v1483
        %1717 = vmatpush1.bf16.msra.mxu0 %v1482
        %1718 = vmatprep.subr.bf16.mxu0 %v1489
        %1719 = vmatpush1.bf16.msra.mxu0 %v1488
        %1720 = vmatprep.subr.bf16.mxu0 %v1495
        %1721 = vmatpush1.bf16.msra.mxu0 %v1494
        %1722 = vmatprep.subr.bf16.mxu0 %v1501
        %1723 = vmatpush1.bf16.msra.mxu0 %v1500
        %1724 = vmatprep.subr.bf16.mxu0 %v1507
        %1725 = vmatpush1.bf16.msra.mxu0 %v1506
        %1726 = vmatprep.subr.bf16.mxu0 %v1513
        %1727 = vmatpush1.bf16.msra.mxu0 %v1512
        %1728 = vmatprep.mubr.bf16.mxu0 %v1001
        %1729 = vmatmul.mubr.bf16.gmra.mrb[0].mxu0 %v1000
        %v1730 = vpop.f32.mrb[0].mxu0
        %v1731 = vadd.f32 %v1119, %v1730
        %v1732 = vpop.f32.mrb[0].mxu0
        %v1733 = vadd.f32 %v1123, %v1732
        %v1734 = vpop.f32.mrb[0].mxu0
        %v1735 = vadd.f32 %v1119, %v1734
        %v1736 = vpop.f32.mrb[0].mxu0
        %v1737 = vadd.f32 %v1123, %v1736
        %1738 = vdwg.mxu0
        %v1739 = vmul.f32 %v1645, 0.088388346
        %v1740 = vmul.f32 %v1647, 0.088388346
        %v1741 = vmul.f32 %v1649, 0.088388346
        %v1742 = vmul.f32 %v1651, 0.088388346
        %v1743 = vpack.c.bf16 %v1741, %v1739
        %v1744 = vpack.c.bf16 %v1742, %v1740
        %v1747 = vpack.i.b16 %v1744, %v1743
        %v1749 = vshrl.u32 %v1743, 16
        %v1750 = vshrl.u32 %v1744, 16
        %v1751 = vpack.i.b16 %v1750, %v1749
        %v1754 = vpack.i.b16 0, 0
        %v1756 = vshrl.u32 0, 16
        %v1757 = vpack.i.b16 %v1756, %v1756
        %v1759 = vcombine.high %v1747, %v1754
        %v1761 = vunpack.c.l.s4 1983009808
        %v1762 = vunpack.c.0.s8 %v1761
        %v1763 = vlaneseq
        %v1764 = vshrl.u32 %v1763, 7
        %v1765 = vsub.s32 %v1762, %v1764
        %v1766 = vrot.slane %v1747, %v1765
        %v1768 = vunpack.c.l.s4 1983009808
        %v1769 = vunpack.c.0.s8 %v1768
        %v1770 = vlaneseq
        %v1771 = vshrl.u32 %v1770, 7
        %v1772 = vsub.s32 %v1769, %v1771
        %v1773 = vrot.slane %v1759, %v1772
        %v1774 = vcombine.high %v1766, 0
        %v1776 = vunpack.c.l.s4 1934713408
        %v1777 = vunpack.c.0.s8 %v1776
        %v1778 = vlaneseq
        %v1779 = vshrl.u32 %v1778, 7
        %v1780 = vsub.s32 %v1777, %v1779
        %v1781 = vrot.slane %v1766, %v1780
        %v1783 = vunpack.c.l.s4 1934713408
        %v1784 = vunpack.c.0.s8 %v1783
        %v1785 = vlaneseq
        %v1786 = vshrl.u32 %v1785, 7
        %v1787 = vsub.s32 %v1784, %v1786
        %v1788 = vrot.slane %v1774, %v1787
        %v1789 = vcombine.high %v1773, 0
        %v1791 = vunpack.c.l.s4 1934713408
        %v1792 = vunpack.c.0.s8 %v1791
        %v1793 = vlaneseq
        %v1794 = vshrl.u32 %v1793, 7
        %v1795 = vsub.s32 %v1792, %v1794
        %v1796 = vrot.slane %v1773, %v1795
        %v1798 = vunpack.c.l.s4 1934713408
        %v1799 = vunpack.c.0.s8 %v1798
        %v1800 = vlaneseq
        %v1801 = vshrl.u32 %v1800, 7
        %v1802 = vsub.s32 %v1799, %v1801
        %v1803 = vrot.slane %v1789, %v1802
        %v1804 = vcombine.high %v1781, 0
        %v1805 = vcombine.high %v1788, 0
        %v1806 = vcombine.high %v1796, 0
        %v1807 = vcombine.high %v1803, 0
        %v1808 = vcombine.high %v1751, %v1757
        %v1810 = vunpack.c.l.s4 1983009808
        %v1811 = vunpack.c.0.s8 %v1810
        %v1812 = vlaneseq
        %v1813 = vshrl.u32 %v1812, 7
        %v1814 = vsub.s32 %v1811, %v1813
        %v1815 = vrot.slane %v1751, %v1814
        %v1817 = vunpack.c.l.s4 1983009808
        %v1818 = vunpack.c.0.s8 %v1817
        %v1819 = vlaneseq
        %v1820 = vshrl.u32 %v1819, 7
        %v1821 = vsub.s32 %v1818, %v1820
        %v1822 = vrot.slane %v1808, %v1821
        %v1823 = vcombine.high %v1815, 0
        %v1825 = vunpack.c.l.s4 1934713408
        %v1826 = vunpack.c.0.s8 %v1825
        %v1827 = vlaneseq
        %v1828 = vshrl.u32 %v1827, 7
        %v1829 = vsub.s32 %v1826, %v1828
        %v1830 = vrot.slane %v1815, %v1829
        %v1832 = vunpack.c.l.s4 1934713408
        %v1833 = vunpack.c.0.s8 %v1832
        %v1834 = vlaneseq
        %v1835 = vshrl.u32 %v1834, 7
        %v1836 = vsub.s32 %v1833, %v1835
        %v1837 = vrot.slane %v1823, %v1836
        %v1838 = vcombine.high %v1822, 0
        %v1840 = vunpack.c.l.s4 1934713408
        %v1841 = vunpack.c.0.s8 %v1840
        %v1842 = vlaneseq
        %v1843 = vshrl.u32 %v1842, 7
        %v1844 = vsub.s32 %v1841, %v1843
        %v1845 = vrot.slane %v1822, %v1844
        %v1847 = vunpack.c.l.s4 1934713408
        %v1848 = vunpack.c.0.s8 %v1847
        %v1849 = vlaneseq
        %v1850 = vshrl.u32 %v1849, 7
        %v1851 = vsub.s32 %v1848, %v1850
        %v1852 = vrot.slane %v1838, %v1851
        %v1853 = vcombine.high %v1830, 0
        %v1854 = vcombine.high %v1837, 0
        %v1855 = vcombine.high %v1845, 0
        %v1856 = vcombine.high %v1852, 0
        %v1857 = vcombine.low %v1781, %v1788
        %v1859 = vunpack.c.l.s4 1983009808
        %v1860 = vunpack.c.0.s8 %v1859
        %v1861 = vlaneseq
        %v1862 = vshrl.u32 %v1861, 7
        %v1863 = vsub.s32 %v1860, %v1862
        %v1864 = vrot.slane %v1857, %v1863
        %v1865 = vcombine.low %v1804, %v1805
        %v1867 = vunpack.c.l.s4 1983009808
        %v1868 = vunpack.c.0.s8 %v1867
        %v1869 = vlaneseq
        %v1870 = vshrl.u32 %v1869, 7
        %v1871 = vsub.s32 %v1868, %v1870
        %v1872 = vrot.slane %v1865, %v1871
        %v1873 = vcombine.low %v1796, %v1803
        %v1875 = vunpack.c.l.s4 1983009808
        %v1876 = vunpack.c.0.s8 %v1875
        %v1877 = vlaneseq
        %v1878 = vshrl.u32 %v1877, 7
        %v1879 = vsub.s32 %v1876, %v1878
        %v1880 = vrot.slane %v1873, %v1879
        %v1881 = vcombine.low %v1806, %v1807
        %v1883 = vunpack.c.l.s4 1983009808
        %v1884 = vunpack.c.0.s8 %v1883
        %v1885 = vlaneseq
        %v1886 = vshrl.u32 %v1885, 7
        %v1887 = vsub.s32 %v1884, %v1886
        %v1888 = vrot.slane %v1881, %v1887
        %v1889 = vcombine.low %v1864, %v1872
        %v1891 = vunpack.c.l.s4 1934713408
        %v1892 = vunpack.c.0.s8 %v1891
        %v1893 = vlaneseq
        %v1894 = vshrl.u32 %v1893, 7
        %v1895 = vsub.s32 %v1892, %v1894
        %v1896 = vrot.slane %v1889, %v1895
        %v1897 = vcombine.low %v1880, %v1888
        %v1899 = vunpack.c.l.s4 1934713408
        %v1900 = vunpack.c.0.s8 %v1899
        %v1901 = vlaneseq
        %v1902 = vshrl.u32 %v1901, 7
        %v1903 = vsub.s32 %v1900, %v1902
        %v1904 = vrot.slane %v1897, %v1903
        %v1905 = vcombine.low %v1896, %v1904
        %v1906 = vcombine.low %v1830, %v1837
        %v1908 = vunpack.c.l.s4 1983009808
        %v1909 = vunpack.c.0.s8 %v1908
        %v1910 = vlaneseq
        %v1911 = vshrl.u32 %v1910, 7
        %v1912 = vsub.s32 %v1909, %v1911
        %v1913 = vrot.slane %v1906, %v1912
        %v1914 = vcombine.low %v1853, %v1854
        %v1916 = vunpack.c.l.s4 1983009808
        %v1917 = vunpack.c.0.s8 %v1916
        %v1918 = vlaneseq
        %v1919 = vshrl.u32 %v1918, 7
        %v1920 = vsub.s32 %v1917, %v1919
        %v1921 = vrot.slane %v1914, %v1920
        %v1922 = vcombine.low %v1845, %v1852
        %v1924 = vunpack.c.l.s4 1983009808
        %v1925 = vunpack.c.0.s8 %v1924
        %v1926 = vlaneseq
        %v1927 = vshrl.u32 %v1926, 7
        %v1928 = vsub.s32 %v1925, %v1927
        %v1929 = vrot.slane %v1922, %v1928
        %v1930 = vcombine.low %v1855, %v1856
        %v1932 = vunpack.c.l.s4 1983009808
        %v1933 = vunpack.c.0.s8 %v1932
        %v1934 = vlaneseq
        %v1935 = vshrl.u32 %v1934, 7
        %v1936 = vsub.s32 %v1933, %v1935
        %v1937 = vrot.slane %v1930, %v1936
        %v1938 = vcombine.low %v1913, %v1921
        %v1940 = vunpack.c.l.s4 1934713408
        %v1941 = vunpack.c.0.s8 %v1940
        %v1942 = vlaneseq
        %v1943 = vshrl.u32 %v1942, 7
        %v1944 = vsub.s32 %v1941, %v1943
        %v1945 = vrot.slane %v1938, %v1944
        %v1946 = vcombine.low %v1929, %v1937
        %v1948 = vunpack.c.l.s4 1934713408
        %v1949 = vunpack.c.0.s8 %v1948
        %v1950 = vlaneseq
        %v1951 = vshrl.u32 %v1950, 7
        %v1952 = vsub.s32 %v1949, %v1951
        %v1953 = vrot.slane %v1946, %v1952
        %v1954 = vcombine.low %v1945, %v1953
        %v1957 = vpack.i.b16 %v1954, %v1905
        %v1958 = vshrl.u32 %v1905, 16
        %v1959 = vshrl.u32 %v1954, 16
        %v1960 = vpack.i.b16 %v1959, %v1958
        %v1961 = vunpack.c.l.b16 %v1957
        %v1962 = vunpack.c.h.b16 %v1957
        %v1963 = vunpack.c.l.b16 %v1960
        %v1964 = vunpack.c.h.b16 %v1960
        %v1965 = vpack.c.b16 %v1961, %v1961
        %v1966 = vpack.c.b16 %v1962, %v1962
        %v1967 = vpack.c.b16 %v1963, %v1963
        %v1968 = vpack.c.b16 %v1964, %v1964
        %v1973 = vpack.c.bf16 %v1692, %v1688
        %v1974 = vpack.c.bf16 %v1694, %v1690
        %v1977 = vpack.i.b16 %v1974, %v1973
        %v1979 = vshrl.u32 %v1973, 16
        %v1980 = vshrl.u32 %v1974, 16
        %v1981 = vpack.i.b16 %v1980, %v1979
        %v1983 = vcombine.high %v1977, %v1754
        %v1985 = vunpack.c.l.s4 1983009808
        %v1986 = vunpack.c.0.s8 %v1985
        %v1987 = vlaneseq
        %v1988 = vshrl.u32 %v1987, 7
        %v1989 = vsub.s32 %v1986, %v1988
        %v1990 = vrot.slane %v1977, %v1989
        %v1992 = vunpack.c.l.s4 1983009808
        %v1993 = vunpack.c.0.s8 %v1992
        %v1994 = vlaneseq
        %v1995 = vshrl.u32 %v1994, 7
        %v1996 = vsub.s32 %v1993, %v1995
        %v1997 = vrot.slane %v1983, %v1996
        %v1998 = vcombine.high %v1990, 0
        %v2000 = vunpack.c.l.s4 1934713408
        %v2001 = vunpack.c.0.s8 %v2000
        %v2002 = vlaneseq
        %v2003 = vshrl.u32 %v2002, 7
        %v2004 = vsub.s32 %v2001, %v2003
        %v2005 = vrot.slane %v1990, %v2004
        %v2007 = vunpack.c.l.s4 1934713408
        %v2008 = vunpack.c.0.s8 %v2007
        %v2009 = vlaneseq
        %v2010 = vshrl.u32 %v2009, 7
        %v2011 = vsub.s32 %v2008, %v2010
        %v2012 = vrot.slane %v1998, %v2011
        %v2013 = vcombine.high %v1997, 0
        %v2015 = vunpack.c.l.s4 1934713408
        %v2016 = vunpack.c.0.s8 %v2015
        %v2017 = vlaneseq
        %v2018 = vshrl.u32 %v2017, 7
        %v2019 = vsub.s32 %v2016, %v2018
        %v2020 = vrot.slane %v1997, %v2019
        %v2022 = vunpack.c.l.s4 1934713408
        %v2023 = vunpack.c.0.s8 %v2022
        %v2024 = vlaneseq
        %v2025 = vshrl.u32 %v2024, 7
        %v2026 = vsub.s32 %v2023, %v2025
        %v2027 = vrot.slane %v2013, %v2026
        %v2028 = vcombine.high %v2005, 0
        %v2029 = vcombine.high %v2012, 0
        %v2030 = vcombine.high %v2020, 0
        %v2031 = vcombine.high %v2027, 0
        %v2032 = vcombine.high %v1981, %v1757
        %v2034 = vunpack.c.l.s4 1983009808
        %v2035 = vunpack.c.0.s8 %v2034
        %v2036 = vlaneseq
        %v2037 = vshrl.u32 %v2036, 7
        %v2038 = vsub.s32 %v2035, %v2037
        %v2039 = vrot.slane %v1981, %v2038
        %v2041 = vunpack.c.l.s4 1983009808
        %v2042 = vunpack.c.0.s8 %v2041
        %v2043 = vlaneseq
        %v2044 = vshrl.u32 %v2043, 7
        %v2045 = vsub.s32 %v2042, %v2044
        %v2046 = vrot.slane %v2032, %v2045
        %v2047 = vcombine.high %v2039, 0
        %v2049 = vunpack.c.l.s4 1934713408
        %v2050 = vunpack.c.0.s8 %v2049
        %v2051 = vlaneseq
        %v2052 = vshrl.u32 %v2051, 7
        %v2053 = vsub.s32 %v2050, %v2052
        %v2054 = vrot.slane %v2039, %v2053
        %v2056 = vunpack.c.l.s4 1934713408
        %v2057 = vunpack.c.0.s8 %v2056
        %v2058 = vlaneseq
        %v2059 = vshrl.u32 %v2058, 7
        %v2060 = vsub.s32 %v2057, %v2059
        %v2061 = vrot.slane %v2047, %v2060
        %v2062 = vcombine.high %v2046, 0
        %v2064 = vunpack.c.l.s4 1934713408
        %v2065 = vunpack.c.0.s8 %v2064
        %v2066 = vlaneseq
        %v2067 = vshrl.u32 %v2066, 7
        %v2068 = vsub.s32 %v2065, %v2067
        %v2069 = vrot.slane %v2046, %v2068
        %v2071 = vunpack.c.l.s4 1934713408
        %v2072 = vunpack.c.0.s8 %v2071
        %v2073 = vlaneseq
        %v2074 = vshrl.u32 %v2073, 7
        %v2075 = vsub.s32 %v2072, %v2074
        %v2076 = vrot.slane %v2062, %v2075
        %v2077 = vcombine.high %v2054, 0
        %v2078 = vcombine.high %v2061, 0
        %v2079 = vcombine.high %v2069, 0
        %v2080 = vcombine.high %v2076, 0
        %v2081 = vcombine.low %v2005, %v2012
        %v2083 = vunpack.c.l.s4 1983009808
        %v2084 = vunpack.c.0.s8 %v2083
        %v2085 = vlaneseq
        %v2086 = vshrl.u32 %v2085, 7
        %v2087 = vsub.s32 %v2084, %v2086
        %v2088 = vrot.slane %v2081, %v2087
        %v2089 = vcombine.low %v2028, %v2029
        %v2091 = vunpack.c.l.s4 1983009808
        %v2092 = vunpack.c.0.s8 %v2091
        %v2093 = vlaneseq
        %v2094 = vshrl.u32 %v2093, 7
        %v2095 = vsub.s32 %v2092, %v2094
        %v2096 = vrot.slane %v2089, %v2095
        %v2097 = vcombine.low %v2020, %v2027
        %v2099 = vunpack.c.l.s4 1983009808
        %v2100 = vunpack.c.0.s8 %v2099
        %v2101 = vlaneseq
        %v2102 = vshrl.u32 %v2101, 7
        %v2103 = vsub.s32 %v2100, %v2102
        %v2104 = vrot.slane %v2097, %v2103
        %v2105 = vcombine.low %v2030, %v2031
        %v2107 = vunpack.c.l.s4 1983009808
        %v2108 = vunpack.c.0.s8 %v2107
        %v2109 = vlaneseq
        %v2110 = vshrl.u32 %v2109, 7
        %v2111 = vsub.s32 %v2108, %v2110
        %v2112 = vrot.slane %v2105, %v2111
        %v2113 = vcombine.low %v2088, %v2096
        %v2115 = vunpack.c.l.s4 1934713408
        %v2116 = vunpack.c.0.s8 %v2115
        %v2117 = vlaneseq
        %v2118 = vshrl.u32 %v2117, 7
        %v2119 = vsub.s32 %v2116, %v2118
        %v2120 = vrot.slane %v2113, %v2119
        %v2121 = vcombine.low %v2104, %v2112
        %v2123 = vunpack.c.l.s4 1934713408
        %v2124 = vunpack.c.0.s8 %v2123
        %v2125 = vlaneseq
        %v2126 = vshrl.u32 %v2125, 7
        %v2127 = vsub.s32 %v2124, %v2126
        %v2128 = vrot.slane %v2121, %v2127
        %v2129 = vcombine.low %v2120, %v2128
        %v2130 = vcombine.low %v2054, %v2061
        %v2132 = vunpack.c.l.s4 1983009808
        %v2133 = vunpack.c.0.s8 %v2132
        %v2134 = vlaneseq
        %v2135 = vshrl.u32 %v2134, 7
        %v2136 = vsub.s32 %v2133, %v2135
        %v2137 = vrot.slane %v2130, %v2136
        %v2138 = vcombine.low %v2077, %v2078
        %v2140 = vunpack.c.l.s4 1983009808
        %v2141 = vunpack.c.0.s8 %v2140
        %v2142 = vlaneseq
        %v2143 = vshrl.u32 %v2142, 7
        %v2144 = vsub.s32 %v2141, %v2143
        %v2145 = vrot.slane %v2138, %v2144
        %v2146 = vcombine.low %v2069, %v2076
        %v2148 = vunpack.c.l.s4 1983009808
        %v2149 = vunpack.c.0.s8 %v2148
        %v2150 = vlaneseq
        %v2151 = vshrl.u32 %v2150, 7
        %v2152 = vsub.s32 %v2149, %v2151
        %v2153 = vrot.slane %v2146, %v2152
        %v2154 = vcombine.low %v2079, %v2080
        %v2156 = vunpack.c.l.s4 1983009808
        %v2157 = vunpack.c.0.s8 %v2156
        %v2158 = vlaneseq
        %v2159 = vshrl.u32 %v2158, 7
        %v2160 = vsub.s32 %v2157, %v2159
        %v2161 = vrot.slane %v2154, %v2160
        %v2162 = vcombine.low %v2137, %v2145
        %v2164 = vunpack.c.l.s4 1934713408
        %v2165 = vunpack.c.0.s8 %v2164
        %v2166 = vlaneseq
        %v2167 = vshrl.u32 %v2166, 7
        %v2168 = vsub.s32 %v2165, %v2167
        %v2169 = vrot.slane %v2162, %v2168
        %v2170 = vcombine.low %v2153, %v2161
        %v2172 = vunpack.c.l.s4 1934713408
        %v2173 = vunpack.c.0.s8 %v2172
        %v2174 = vlaneseq
        %v2175 = vshrl.u32 %v2174, 7
        %v2176 = vsub.s32 %v2173, %v2175
        %v2177 = vrot.slane %v2170, %v2176
        %v2178 = vcombine.low %v2169, %v2177
        %v2181 = vpack.i.b16 %v2178, %v2129
        %v2182 = vshrl.u32 %v2129, 16
        %v2183 = vshrl.u32 %v2178, 16
        %v2184 = vpack.i.b16 %v2183, %v2182
        %v2185 = vunpack.c.l.b16 %v2181
        %v2186 = vunpack.c.h.b16 %v2181
        %v2187 = vunpack.c.l.b16 %v2184
        %v2188 = vunpack.c.h.b16 %v2184
        %v2189 = vpack.c.b16 %v2185, %v2185
        %v2190 = vpack.c.b16 %v2186, %v2186
        %v2191 = vpack.c.b16 %v2187, %v2187
        %v2192 = vpack.c.b16 %v2188, %v2188
        %v2197 = vpack.c.bf16 %v1735, %v1731
        %v2198 = vpack.c.bf16 %v1737, %v1733
        %v2201 = vpack.i.b16 %v2198, %v2197
        %v2203 = vshrl.u32 %v2197, 16
        %v2204 = vshrl.u32 %v2198, 16
        %v2205 = vpack.i.b16 %v2204, %v2203
        %v2207 = vcombine.high %v2201, %v1754
        %v2209 = vunpack.c.l.s4 1983009808
        %v2210 = vunpack.c.0.s8 %v2209
        %v2211 = vlaneseq
        %v2212 = vshrl.u32 %v2211, 7
        %v2213 = vsub.s32 %v2210, %v2212
        %v2214 = vrot.slane %v2201, %v2213
        %v2216 = vunpack.c.l.s4 1983009808
        %v2217 = vunpack.c.0.s8 %v2216
        %v2218 = vlaneseq
        %v2219 = vshrl.u32 %v2218, 7
        %v2220 = vsub.s32 %v2217, %v2219
        %v2221 = vrot.slane %v2207, %v2220
        %v2222 = vcombine.high %v2214, 0
        %v2224 = vunpack.c.l.s4 1934713408
        %v2225 = vunpack.c.0.s8 %v2224
        %v2226 = vlaneseq
        %v2227 = vshrl.u32 %v2226, 7
        %v2228 = vsub.s32 %v2225, %v2227
        %v2229 = vrot.slane %v2214, %v2228
        %v2231 = vunpack.c.l.s4 1934713408
        %v2232 = vunpack.c.0.s8 %v2231
        %v2233 = vlaneseq
        %v2234 = vshrl.u32 %v2233, 7
        %v2235 = vsub.s32 %v2232, %v2234
        %v2236 = vrot.slane %v2222, %v2235
        %v2237 = vcombine.high %v2221, 0
        %v2239 = vunpack.c.l.s4 1934713408
        %v2240 = vunpack.c.0.s8 %v2239
        %v2241 = vlaneseq
        %v2242 = vshrl.u32 %v2241, 7
        %v2243 = vsub.s32 %v2240, %v2242
        %v2244 = vrot.slane %v2221, %v2243
        %v2246 = vunpack.c.l.s4 1934713408
        %v2247 = vunpack.c.0.s8 %v2246
        %v2248 = vlaneseq
        %v2249 = vshrl.u32 %v2248, 7
        %v2250 = vsub.s32 %v2247, %v2249
        %v2251 = vrot.slane %v2237, %v2250
        %v2252 = vcombine.high %v2229, 0
        %v2253 = vcombine.high %v2236, 0
        %v2254 = vcombine.high %v2244, 0
        %v2255 = vcombine.high %v2251, 0
        %v2256 = vcombine.high %v2205, %v1757
        %v2258 = vunpack.c.l.s4 1983009808
        %v2259 = vunpack.c.0.s8 %v2258
        %v2260 = vlaneseq
        %v2261 = vshrl.u32 %v2260, 7
        %v2262 = vsub.s32 %v2259, %v2261
        %v2263 = vrot.slane %v2205, %v2262
        %v2265 = vunpack.c.l.s4 1983009808
        %v2266 = vunpack.c.0.s8 %v2265
        %v2267 = vlaneseq
        %v2268 = vshrl.u32 %v2267, 7
        %v2269 = vsub.s32 %v2266, %v2268
        %v2270 = vrot.slane %v2256, %v2269
        %v2271 = vcombine.high %v2263, 0
        %v2273 = vunpack.c.l.s4 1934713408
        %v2274 = vunpack.c.0.s8 %v2273
        %v2275 = vlaneseq
        %v2276 = vshrl.u32 %v2275, 7
        %v2277 = vsub.s32 %v2274, %v2276
        %v2278 = vrot.slane %v2263, %v2277
        %v2280 = vunpack.c.l.s4 1934713408
        %v2281 = vunpack.c.0.s8 %v2280
        %v2282 = vlaneseq
        %v2283 = vshrl.u32 %v2282, 7
        %v2284 = vsub.s32 %v2281, %v2283
        %v2285 = vrot.slane %v2271, %v2284
        %v2286 = vcombine.high %v2270, 0
        %v2288 = vunpack.c.l.s4 1934713408
        %v2289 = vunpack.c.0.s8 %v2288
        %v2290 = vlaneseq
        %v2291 = vshrl.u32 %v2290, 7
        %v2292 = vsub.s32 %v2289, %v2291
        %v2293 = vrot.slane %v2270, %v2292
        %v2295 = vunpack.c.l.s4 1934713408
        %v2296 = vunpack.c.0.s8 %v2295
        %v2297 = vlaneseq
        %v2298 = vshrl.u32 %v2297, 7
        %v2299 = vsub.s32 %v2296, %v2298
        %v2300 = vrot.slane %v2286, %v2299
        %v2301 = vcombine.high %v2278, 0
        %v2302 = vcombine.high %v2285, 0
        %v2303 = vcombine.high %v2293, 0
        %v2304 = vcombine.high %v2300, 0
        %v2305 = vcombine.low %v2229, %v2236
        %v2307 = vunpack.c.l.s4 1983009808
        %v2308 = vunpack.c.0.s8 %v2307
        %v2309 = vlaneseq
        %v2310 = vshrl.u32 %v2309, 7
        %v2311 = vsub.s32 %v2308, %v2310
        %v2312 = vrot.slane %v2305, %v2311
        %v2313 = vcombine.low %v2252, %v2253
        %v2315 = vunpack.c.l.s4 1983009808
        %v2316 = vunpack.c.0.s8 %v2315
        %v2317 = vlaneseq
        %v2318 = vshrl.u32 %v2317, 7
        %v2319 = vsub.s32 %v2316, %v2318
        %v2320 = vrot.slane %v2313, %v2319
        %v2321 = vcombine.low %v2244, %v2251
        %v2323 = vunpack.c.l.s4 1983009808
        %v2324 = vunpack.c.0.s8 %v2323
        %v2325 = vlaneseq
        %v2326 = vshrl.u32 %v2325, 7
        %v2327 = vsub.s32 %v2324, %v2326
        %v2328 = vrot.slane %v2321, %v2327
        %v2329 = vcombine.low %v2254, %v2255
        %v2331 = vunpack.c.l.s4 1983009808
        %v2332 = vunpack.c.0.s8 %v2331
        %v2333 = vlaneseq
        %v2334 = vshrl.u32 %v2333, 7
        %v2335 = vsub.s32 %v2332, %v2334
        %v2336 = vrot.slane %v2329, %v2335
        %v2337 = vcombine.low %v2312, %v2320
        %v2339 = vunpack.c.l.s4 1934713408
        %v2340 = vunpack.c.0.s8 %v2339
        %v2341 = vlaneseq
        %v2342 = vshrl.u32 %v2341, 7
        %v2343 = vsub.s32 %v2340, %v2342
        %v2344 = vrot.slane %v2337, %v2343
        %v2345 = vcombine.low %v2328, %v2336
        %v2347 = vunpack.c.l.s4 1934713408
        %v2348 = vunpack.c.0.s8 %v2347
        %v2349 = vlaneseq
        %v2350 = vshrl.u32 %v2349, 7
        %v2351 = vsub.s32 %v2348, %v2350
        %v2352 = vrot.slane %v2345, %v2351
        %v2353 = vcombine.low %v2344, %v2352
        %v2354 = vcombine.low %v2278, %v2285
        %v2356 = vunpack.c.l.s4 1983009808
        %v2357 = vunpack.c.0.s8 %v2356
        %v2358 = vlaneseq
        %v2359 = vshrl.u32 %v2358, 7
        %v2360 = vsub.s32 %v2357, %v2359
        %v2361 = vrot.slane %v2354, %v2360
        %v2362 = vcombine.low %v2301, %v2302
        %v2364 = vunpack.c.l.s4 1983009808
        %v2365 = vunpack.c.0.s8 %v2364
        %v2366 = vlaneseq
        %v2367 = vshrl.u32 %v2366, 7
        %v2368 = vsub.s32 %v2365, %v2367
        %v2369 = vrot.slane %v2362, %v2368
        %v2370 = vcombine.low %v2293, %v2300
        %v2372 = vunpack.c.l.s4 1983009808
        %v2373 = vunpack.c.0.s8 %v2372
        %v2374 = vlaneseq
        %v2375 = vshrl.u32 %v2374, 7
        %v2376 = vsub.s32 %v2373, %v2375
        %v2377 = vrot.slane %v2370, %v2376
        %v2378 = vcombine.low %v2303, %v2304
        %v2380 = vunpack.c.l.s4 1983009808
        %v2381 = vunpack.c.0.s8 %v2380
        %v2382 = vlaneseq
        %v2383 = vshrl.u32 %v2382, 7
        %v2384 = vsub.s32 %v2381, %v2383
        %v2385 = vrot.slane %v2378, %v2384
        %v2386 = vcombine.low %v2361, %v2369
        %v2388 = vunpack.c.l.s4 1934713408
        %v2389 = vunpack.c.0.s8 %v2388
        %v2390 = vlaneseq
        %v2391 = vshrl.u32 %v2390, 7
        %v2392 = vsub.s32 %v2389, %v2391
        %v2393 = vrot.slane %v2386, %v2392
        %v2394 = vcombine.low %v2377, %v2385
        %v2396 = vunpack.c.l.s4 1934713408
        %v2397 = vunpack.c.0.s8 %v2396
        %v2398 = vlaneseq
        %v2399 = vshrl.u32 %v2398, 7
        %v2400 = vsub.s32 %v2397, %v2399
        %v2401 = vrot.slane %v2394, %v2400
        %v2402 = vcombine.low %v2393, %v2401
        %v2405 = vpack.i.b16 %v2402, %v2353
        %v2406 = vshrl.u32 %v2353, 16
        %v2407 = vshrl.u32 %v2402, 16
        %v2408 = vpack.i.b16 %v2407, %v2406
        %v2409 = vunpack.c.l.b16 %v2405
        %v2410 = vunpack.c.h.b16 %v2405
        %v2411 = vunpack.c.l.b16 %v2408
        %v2412 = vunpack.c.h.b16 %v2408
        %v2413 = vpack.c.b16 %v2409, %v2409
        %v2414 = vpack.c.b16 %v2410, %v2410
        %v2415 = vpack.c.b16 %v2411, %v2411
        %v2416 = vpack.c.b16 %v2412, %v2412
        %v2417 = vld [vmem:[%s721] sm:$0x1]
        %v2418 = vld [vmem:[%s721 + $0x1] sm:$0x1]
        %vm2419 = vcmp.eq.f32.partialorder %v2417, 0.0
        %vm2420 = vcmp.eq.f32.partialorder %v2418, 0.0
        %v2421 = vsel %vm2419, -1e+09, 0.0
        %v2422 = vsel %vm2420, -1e+09, 0.0
        %v2425 = vlaneseq
        %v2426 = vshrl.u32 %v2425, 7
        %v2427 = vsub.s32 0, %v2426
        %v2428 = vrot.slane %v2421, %v2427
        %v2429 = vlaneseq
        %v2430 = vshrl.u32 %v2429, 7
        %v2431 = vsub.s32 0, %v2430
        %v2432 = vrot.slane %v2422, %v2431
        %2435 = vmatprep.subr.bf16.mxu0 0
        %2436 = vmatpush1.bf16.xpose.msra.mxu0 %v2189
        %2437 = vmatprep.subr.bf16.mxu0 0
        %2438 = vmatpush1.bf16.xpose.msra.mxu0 0
        %2439 = vmatprep.subr.bf16.mxu0 0
        %2440 = vmatpush1.bf16.xpose.msra.mxu0 0
        %2441 = vmatprep.subr.bf16.mxu0 0
        %2442 = vmatpush1.bf16.xpose.msra.mxu0 0
        %2443 = vmatprep.subr.bf16.mxu0 0
        %2444 = vmatpush1.bf16.xpose.msra.mxu0 0
        %2445 = vmatprep.subr.bf16.mxu0 0
        %2446 = vmatpush1.bf16.xpose.msra.mxu0 0
        %2447 = vmatprep.subr.bf16.mxu0 0
        %2448 = vmatpush1.bf16.xpose.msra.mxu0 0
        %2449 = vmatprep.subr.bf16.mxu0 0
        %2450 = vmatpush1.bf16.xpose.msra.mxu0 0
        %2451 = vmatprep.subr.bf16.mxu0 0
        %2452 = vmatpush1.bf16.xpose.msra.mxu0 0
        %2453 = vmatprep.subr.bf16.mxu0 0
        %2454 = vmatpush1.bf16.xpose.msra.mxu0 0
        %2455 = vmatprep.subr.bf16.mxu0 0
        %2456 = vmatpush1.bf16.xpose.msra.mxu0 0
        %2457 = vmatprep.subr.bf16.mxu0 0
        %2458 = vmatpush1.bf16.xpose.msra.mxu0 0
        %2459 = vmatprep.subr.bf16.mxu0 0
        %2460 = vmatpush1.bf16.xpose.msra.mxu0 0
        %2461 = vmatprep.subr.bf16.mxu0 0
        %2462 = vmatpush1.bf16.xpose.msra.mxu0 0
        %2463 = vmatprep.subr.bf16.mxu0 0
        %2464 = vmatpush1.bf16.xpose.msra.mxu0 0
        %2465 = vmatprep.subr.bf16.mxu0 0
        %2466 = vmatpush1.bf16.xpose.msra.mxu0 0
        %2467 = vmatprep.mubr.bf16.mxu0 0
        %2468 = vmatmul.mubr.bf16.gmra.mrb[0].mxu0 %v1965
        %v2469 = vpop.f32.mrb[0].mxu0
        %v2470 = vadd.f32 %v2428, %v2469
        %v2471 = vpop.f32.mrb[0].mxu0
        %v2472 = vpop.f32.mrb[0].mxu0
        %v2473 = vpop.f32.mrb[0].mxu0
        %2474 = vdwg.mxu0
        %2475 = vmatprep.subr.bf16.mxu0 0
        %2476 = vmatpush1.bf16.xpose.msra.mxu0 %v2190
        %2477 = vmatprep.subr.bf16.mxu0 0
        %2478 = vmatpush1.bf16.xpose.msra.mxu0 0
        %2479 = vmatprep.subr.bf16.mxu0 0
        %2480 = vmatpush1.bf16.xpose.msra.mxu0 0
        %2481 = vmatprep.subr.bf16.mxu0 0
        %2482 = vmatpush1.bf16.xpose.msra.mxu0 0
        %2483 = vmatprep.subr.bf16.mxu0 0
        %2484 = vmatpush1.bf16.xpose.msra.mxu0 0
        %2485 = vmatprep.subr.bf16.mxu0 0
        %2486 = vmatpush1.bf16.xpose.msra.mxu0 0
        %2487 = vmatprep.subr.bf16.mxu0 0
        %2488 = vmatpush1.bf16.xpose.msra.mxu0 0
        %2489 = vmatprep.subr.bf16.mxu0 0
        %2490 = vmatpush1.bf16.xpose.msra.mxu0 0
        %2491 = vmatprep.subr.bf16.mxu0 0
        %2492 = vmatpush1.bf16.xpose.msra.mxu0 0
        %2493 = vmatprep.subr.bf16.mxu0 0
        %2494 = vmatpush1.bf16.xpose.msra.mxu0 0
        %2495 = vmatprep.subr.bf16.mxu0 0
        %2496 = vmatpush1.bf16.xpose.msra.mxu0 0
        %2497 = vmatprep.subr.bf16.mxu0 0
        %2498 = vmatpush1.bf16.xpose.msra.mxu0 0
        %2499 = vmatprep.subr.bf16.mxu0 0
        %2500 = vmatpush1.bf16.xpose.msra.mxu0 0
        %2501 = vmatprep.subr.bf16.mxu0 0
        %2502 = vmatpush1.bf16.xpose.msra.mxu0 0
        %2503 = vmatprep.subr.bf16.mxu0 0
        %2504 = vmatpush1.bf16.xpose.msra.mxu0 0
        %2505 = vmatprep.subr.bf16.mxu0 0
        %2506 = vmatpush1.bf16.xpose.msra.mxu0 0
        %2507 = vmatprep.mubr.bf16.mxu0 0
        %2508 = vmatmul.mubr.bf16.gmra.mrb[0].mxu0 %v1966
        %v2509 = vpop.f32.mrb[0].mxu0
        %v2510 = vadd.f32 %v2432, %v2509
        %v2511 = vpop.f32.mrb[0].mxu0
        %v2512 = vpop.f32.mrb[0].mxu0
        %v2513 = vpop.f32.mrb[0].mxu0
        %2514 = vdwg.mxu0
        %2515 = vmatprep.subr.bf16.mxu0 0
        %2516 = vmatpush1.bf16.xpose.msra.mxu0 %v2191
        %2517 = vmatprep.subr.bf16.mxu0 0
        %2518 = vmatpush1.bf16.xpose.msra.mxu0 0
        %2519 = vmatprep.subr.bf16.mxu0 0
        %2520 = vmatpush1.bf16.xpose.msra.mxu0 0
        %2521 = vmatprep.subr.bf16.mxu0 0
        %2522 = vmatpush1.bf16.xpose.msra.mxu0 0
        %2523 = vmatprep.subr.bf16.mxu0 0
        %2524 = vmatpush1.bf16.xpose.msra.mxu0 0
        %2525 = vmatprep.subr.bf16.mxu0 0
        %2526 = vmatpush1.bf16.xpose.msra.mxu0 0
        %2527 = vmatprep.subr.bf16.mxu0 0
        %2528 = vmatpush1.bf16.xpose.msra.mxu0 0
        %2529 = vmatprep.subr.bf16.mxu0 0
        %2530 = vmatpush1.bf16.xpose.msra.mxu0 0
        %2531 = vmatprep.subr.bf16.mxu0 0
        %2532 = vmatpush1.bf16.xpose.msra.mxu0 0
        %2533 = vmatprep.subr.bf16.mxu0 0
        %2534 = vmatpush1.bf16.xpose.msra.mxu0 0
        %2535 = vmatprep.subr.bf16.mxu0 0
        %2536 = vmatpush1.bf16.xpose.msra.mxu0 0
        %2537 = vmatprep.subr.bf16.mxu0 0
        %2538 = vmatpush1.bf16.xpose.msra.mxu0 0
        %2539 = vmatprep.subr.bf16.mxu0 0
        %2540 = vmatpush1.bf16.xpose.msra.mxu0 0
        %2541 = vmatprep.subr.bf16.mxu0 0
        %2542 = vmatpush1.bf16.xpose.msra.mxu0 0
        %2543 = vmatprep.subr.bf16.mxu0 0
        %2544 = vmatpush1.bf16.xpose.msra.mxu0 0
        %2545 = vmatprep.subr.bf16.mxu0 0
        %2546 = vmatpush1.bf16.xpose.msra.mxu0 0
        %2547 = vmatprep.mubr.bf16.mxu0 0
        %2548 = vmatmul.mubr.bf16.gmra.mrb[0].mxu0 %v1967
        %v2549 = vpop.f32.mrb[0].mxu0
        %v2550 = vadd.f32 %v2428, %v2549
        %v2551 = vpop.f32.mrb[0].mxu0
        %v2552 = vpop.f32.mrb[0].mxu0
        %v2553 = vpop.f32.mrb[0].mxu0
        %2554 = vdwg.mxu0
        %2555 = vmatprep.subr.bf16.mxu0 0
        %2556 = vmatpush1.bf16.xpose.msra.mxu0 %v2192
        %2557 = vmatprep.subr.bf16.mxu0 0
        %2558 = vmatpush1.bf16.xpose.msra.mxu0 0
        %2559 = vmatprep.subr.bf16.mxu0 0
        %2560 = vmatpush1.bf16.xpose.msra.mxu0 0
        %2561 = vmatprep.subr.bf16.mxu0 0
        %2562 = vmatpush1.bf16.xpose.msra.mxu0 0
        %2563 = vmatprep.subr.bf16.mxu0 0
        %2564 = vmatpush1.bf16.xpose.msra.mxu0 0
        %2565 = vmatprep.subr.bf16.mxu0 0
        %2566 = vmatpush1.bf16.xpose.msra.mxu0 0
        %2567 = vmatprep.subr.bf16.mxu0 0
        %2568 = vmatpush1.bf16.xpose.msra.mxu0 0
        %2569 = vmatprep.subr.bf16.mxu0 0
        %2570 = vmatpush1.bf16.xpose.msra.mxu0 0
        %2571 = vmatprep.subr.bf16.mxu0 0
        %2572 = vmatpush1.bf16.xpose.msra.mxu0 0
        %2573 = vmatprep.subr.bf16.mxu0 0
        %2574 = vmatpush1.bf16.xpose.msra.mxu0 0
        %2575 = vmatprep.subr.bf16.mxu0 0
        %2576 = vmatpush1.bf16.xpose.msra.mxu0 0
        %2577 = vmatprep.subr.bf16.mxu0 0
        %2578 = vmatpush1.bf16.xpose.msra.mxu0 0
        %2579 = vmatprep.subr.bf16.mxu0 0
        %2580 = vmatpush1.bf16.xpose.msra.mxu0 0
        %2581 = vmatprep.subr.bf16.mxu0 0
        %2582 = vmatpush1.bf16.xpose.msra.mxu0 0
        %2583 = vmatprep.subr.bf16.mxu0 0
        %2584 = vmatpush1.bf16.xpose.msra.mxu0 0
        %2585 = vmatprep.subr.bf16.mxu0 0
        %2586 = vmatpush1.bf16.xpose.msra.mxu0 0
        %2587 = vmatprep.mubr.bf16.mxu0 0
        %2588 = vmatmul.mubr.bf16.gmra.mrb[0].mxu0 %v1968
        %v2589 = vpop.f32.mrb[0].mxu0
        %v2590 = vadd.f32 %v2432, %v2589
        %v2591 = vpop.f32.mrb[0].mxu0
        %v2592 = vpop.f32.mrb[0].mxu0
        %v2593 = vpop.f32.mrb[0].mxu0
        %2594 = vdwg.mxu0
        %vm2595 = vcmask 64512
        %v2596 = vsel %vm2595, %v2470, -inf
        %2597 = vmax.xlane.f32.xlu0 %v2596
        %v2598 = vpop.xlane.xlu0 %2597
        %v2599 = vsel %vm2595, %v2510, -inf
        %2600 = vmax.xlane.f32.xlu0 %v2599
        %v2601 = vpop.xlane.xlu0 %2600
        %v2602 = vsel %vm2595, %v2550, -inf
        %2603 = vmax.xlane.f32.xlu0 %v2602
        %v2604 = vpop.xlane.xlu0 %2603
        %v2605 = vsel %vm2595, %v2590, -inf
        %2606 = vmax.xlane.f32.xlu0 %v2605
        %v2607 = vpop.xlane.xlu0 %2606
        %v2608 = vsub.f32 %v2470, %v2598
        %v2609 = vsub.f32 %v2510, %v2601
        %v2610 = vsub.f32 %v2550, %v2604
        %v2611 = vsub.f32 %v2590, %v2607
        %v2612 = vmul.f32 %v2608, 1.442695
        %v2613 = vpow.pop %v2612
        %v2614 = vmul.f32 %v2609, 1.442695
        %v2615 = vpow.pop %v2614
        %v2616 = vmul.f32 %v2610, 1.442695
        %v2617 = vpow.pop %v2616
        %v2618 = vmul.f32 %v2611, 1.442695
        %v2619 = vpow.pop %v2618
        %v2620 = vsel %vm2595, %v2613, 0.0
        %2621 = vadd.xlane.f32.xlu0 %v2620
        %v2622 = vpop.xlane.xlu0 %2621
        %v2623 = vsel %vm2595, %v2615, 0.0
        %2624 = vadd.xlane.f32.xlu0 %v2623
        %v2625 = vpop.xlane.xlu0 %2624
        %v2626 = vsel %vm2595, %v2617, 0.0
        %2627 = vadd.xlane.f32.xlu0 %v2626
        %v2628 = vpop.xlane.xlu0 %2627
        %v2629 = vsel %vm2595, %v2619, 0.0
        %2630 = vadd.xlane.f32.xlu0 %v2629
        %v2631 = vpop.xlane.xlu0 %2630
        %v2632 = vrcp.pop %v2622
        %v2633 = vrcp.pop %v2625
        %v2634 = vrcp.pop %v2628
        %v2635 = vrcp.pop %v2631
        %v2636 = vmul.f32 %v2613, %v2632
        %v2637 = vmul.f32 %v2615, %v2633
        %v2638 = vmul.f32 %v2617, %v2634
        %v2639 = vmul.f32 %v2619, %v2635
        %v2640 = vpack.c.bf16 %v2636, %v2636
        %v2641 = vpack.c.bf16 %v2637, %v2637
        %v2642 = vpack.c.bf16 %v2638, %v2638
        %v2643 = vpack.c.bf16 %v2639, %v2639
        %v2645 = vsel %vm2595, %v2640, 0
        %vm2647 = vcmask 1043456
        %v2649 = vsel %vm2647, %v2413, 0
        %2651 = vmatprep.subr.bf16.mxu0 0
        %2652 = vmatpush1.bf16.msra.mxu0 %v2649
        %2653 = vmatprep.subr.bf16.mxu0 0
        %2654 = vmatpush1.bf16.msra.mxu0 0
        %2655 = vmatprep.subr.bf16.mxu0 0
        %2656 = vmatpush1.bf16.msra.mxu0 0
        %2657 = vmatprep.subr.bf16.mxu0 0
        %2658 = vmatpush1.bf16.msra.mxu0 0
        %2659 = vmatprep.subr.bf16.mxu0 0
        %2660 = vmatpush1.bf16.msra.mxu0 0
        %2661 = vmatprep.subr.bf16.mxu0 0
        %2662 = vmatpush1.bf16.msra.mxu0 0
        %2663 = vmatprep.subr.bf16.mxu0 0
        %2664 = vmatpush1.bf16.msra.mxu0 0
        %2665 = vmatprep.subr.bf16.mxu0 0
        %2666 = vmatpush1.bf16.msra.mxu0 0
        %2667 = vmatprep.subr.bf16.mxu0 0
        %2668 = vmatpush1.bf16.msra.mxu0 0
        %2669 = vmatprep.subr.bf16.mxu0 0
        %2670 = vmatpush1.bf16.msra.mxu0 0
        %2671 = vmatprep.subr.bf16.mxu0 0
        %2672 = vmatpush1.bf16.msra.mxu0 0
        %2673 = vmatprep.subr.bf16.mxu0 0
        %2674 = vmatpush1.bf16.msra.mxu0 0
        %2675 = vmatprep.subr.bf16.mxu0 0
        %2676 = vmatpush1.bf16.msra.mxu0 0
        %2677 = vmatprep.subr.bf16.mxu0 0
        %2678 = vmatpush1.bf16.msra.mxu0 0
        %2679 = vmatprep.subr.bf16.mxu0 0
        %2680 = vmatpush1.bf16.msra.mxu0 0
        %2681 = vmatprep.subr.bf16.mxu0 0
        %2682 = vmatpush1.bf16.msra.mxu0 0
        %2683 = vmatprep.mubr.bf16.mxu0 0
        %2684 = vmatmul.mubr.bf16.gmra.mrb[0].mxu0 %v2645
        %v2685 = vpop.f32.mrb[0].mxu0
        %v2686 = vadd.f32 0.0, %v2685
        %v2687 = vpop.f32.mrb[0].mxu0
        %v2688 = vpop.f32.mrb[0].mxu0
        %v2689 = vpop.f32.mrb[0].mxu0
        %2690 = vdwg.mxu0
        %v2692 = vsel %vm2595, %v2641, 0
        %v2695 = vsel %vm2647, %v2414, 0
        %2697 = vmatprep.subr.bf16.mxu0 0
        %2698 = vmatpush1.bf16.msra.mxu0 %v2695
        %2699 = vmatprep.subr.bf16.mxu0 0
        %2700 = vmatpush1.bf16.msra.mxu0 0
        %2701 = vmatprep.subr.bf16.mxu0 0
        %2702 = vmatpush1.bf16.msra.mxu0 0
        %2703 = vmatprep.subr.bf16.mxu0 0
        %2704 = vmatpush1.bf16.msra.mxu0 0
        %2705 = vmatprep.subr.bf16.mxu0 0
        %2706 = vmatpush1.bf16.msra.mxu0 0
        %2707 = vmatprep.subr.bf16.mxu0 0
        %2708 = vmatpush1.bf16.msra.mxu0 0
        %2709 = vmatprep.subr.bf16.mxu0 0
        %2710 = vmatpush1.bf16.msra.mxu0 0
        %2711 = vmatprep.subr.bf16.mxu0 0
        %2712 = vmatpush1.bf16.msra.mxu0 0
        %2713 = vmatprep.subr.bf16.mxu0 0
        %2714 = vmatpush1.bf16.msra.mxu0 0
        %2715 = vmatprep.subr.bf16.mxu0 0
        %2716 = vmatpush1.bf16.msra.mxu0 0
        %2717 = vmatprep.subr.bf16.mxu0 0
        %2718 = vmatpush1.bf16.msra.mxu0 0
        %2719 = vmatprep.subr.bf16.mxu0 0
        %2720 = vmatpush1.bf16.msra.mxu0 0
        %2721 = vmatprep.subr.bf16.mxu0 0
        %2722 = vmatpush1.bf16.msra.mxu0 0
        %2723 = vmatprep.subr.bf16.mxu0 0
        %2724 = vmatpush1.bf16.msra.mxu0 0
        %2725 = vmatprep.subr.bf16.mxu0 0
        %2726 = vmatpush1.bf16.msra.mxu0 0
        %2727 = vmatprep.subr.bf16.mxu0 0
        %2728 = vmatpush1.bf16.msra.mxu0 0
        %2729 = vmatprep.mubr.bf16.mxu0 0
        %2730 = vmatmul.mubr.bf16.gmra.mrb[0].mxu0 %v2692
        %v2731 = vpop.f32.mrb[0].mxu0
        %v2732 = vadd.f32 0.0, %v2731
        %v2733 = vpop.f32.mrb[0].mxu0
        %v2734 = vpop.f32.mrb[0].mxu0
        %v2735 = vpop.f32.mrb[0].mxu0
        %2736 = vdwg.mxu0
        %v2738 = vsel %vm2595, %v2642, 0
        %v2741 = vsel %vm2647, %v2415, 0
        %2743 = vmatprep.subr.bf16.mxu0 0
        %2744 = vmatpush1.bf16.msra.mxu0 %v2741
        %2745 = vmatprep.subr.bf16.mxu0 0
        %2746 = vmatpush1.bf16.msra.mxu0 0
        %2747 = vmatprep.subr.bf16.mxu0 0
        %2748 = vmatpush1.bf16.msra.mxu0 0
        %2749 = vmatprep.subr.bf16.mxu0 0
        %2750 = vmatpush1.bf16.msra.mxu0 0
        %2751 = vmatprep.subr.bf16.mxu0 0
        %2752 = vmatpush1.bf16.msra.mxu0 0
        %2753 = vmatprep.subr.bf16.mxu0 0
        %2754 = vmatpush1.bf16.msra.mxu0 0
        %2755 = vmatprep.subr.bf16.mxu0 0
        %2756 = vmatpush1.bf16.msra.mxu0 0
        %2757 = vmatprep.subr.bf16.mxu0 0
        %2758 = vmatpush1.bf16.msra.mxu0 0
        %2759 = vmatprep.subr.bf16.mxu0 0
        %2760 = vmatpush1.bf16.msra.mxu0 0
        %2761 = vmatprep.subr.bf16.mxu0 0
        %2762 = vmatpush1.bf16.msra.mxu0 0
        %2763 = vmatprep.subr.bf16.mxu0 0
        %2764 = vmatpush1.bf16.msra.mxu0 0
        %2765 = vmatprep.subr.bf16.mxu0 0
        %2766 = vmatpush1.bf16.msra.mxu0 0
        %2767 = vmatprep.subr.bf16.mxu0 0
        %2768 = vmatpush1.bf16.msra.mxu0 0
        %2769 = vmatprep.subr.bf16.mxu0 0
        %2770 = vmatpush1.bf16.msra.mxu0 0
        %2771 = vmatprep.subr.bf16.mxu0 0
        %2772 = vmatpush1.bf16.msra.mxu0 0
        %2773 = vmatprep.subr.bf16.mxu0 0
        %2774 = vmatpush1.bf16.msra.mxu0 0
        %2775 = vmatprep.mubr.bf16.mxu0 0
        %2776 = vmatmul.mubr.bf16.gmra.mrb[0].mxu0 %v2738
        %v2777 = vpop.f32.mrb[0].mxu0
        %v2778 = vadd.f32 0.0, %v2777
        %v2779 = vpop.f32.mrb[0].mxu0
        %v2780 = vpop.f32.mrb[0].mxu0
        %v2781 = vpop.f32.mrb[0].mxu0
        %2782 = vdwg.mxu0
        %v2784 = vsel %vm2595, %v2643, 0
        %v2787 = vsel %vm2647, %v2416, 0
        %2789 = vmatprep.subr.bf16.mxu0 0
        %2790 = vmatpush1.bf16.msra.mxu0 %v2787
        %2791 = vmatprep.subr.bf16.mxu0 0
        %2792 = vmatpush1.bf16.msra.mxu0 0
        %2793 = vmatprep.subr.bf16.mxu0 0
        %2794 = vmatpush1.bf16.msra.mxu0 0
        %2795 = vmatprep.subr.bf16.mxu0 0
        %2796 = vmatpush1.bf16.msra.mxu0 0
        %2797 = vmatprep.subr.bf16.mxu0 0
        %2798 = vmatpush1.bf16.msra.mxu0 0
        %2799 = vmatprep.subr.bf16.mxu0 0
        %2800 = vmatpush1.bf16.msra.mxu0 0
        %2801 = vmatprep.subr.bf16.mxu0 0
        %2802 = vmatpush1.bf16.msra.mxu0 0
        %2803 = vmatprep.subr.bf16.mxu0 0
        %2804 = vmatpush1.bf16.msra.mxu0 0
        %2805 = vmatprep.subr.bf16.mxu0 0
        %2806 = vmatpush1.bf16.msra.mxu0 0
        %2807 = vmatprep.subr.bf16.mxu0 0
        %2808 = vmatpush1.bf16.msra.mxu0 0
        %2809 = vmatprep.subr.bf16.mxu0 0
        %2810 = vmatpush1.bf16.msra.mxu0 0
        %2811 = vmatprep.subr.bf16.mxu0 0
        %2812 = vmatpush1.bf16.msra.mxu0 0
        %2813 = vmatprep.subr.bf16.mxu0 0
        %2814 = vmatpush1.bf16.msra.mxu0 0
        %2815 = vmatprep.subr.bf16.mxu0 0
        %2816 = vmatpush1.bf16.msra.mxu0 0
        %2817 = vmatprep.subr.bf16.mxu0 0
        %2818 = vmatpush1.bf16.msra.mxu0 0
        %2819 = vmatprep.subr.bf16.mxu0 0
        %2820 = vmatpush1.bf16.msra.mxu0 0
        %2821 = vmatprep.mubr.bf16.mxu0 0
        %2822 = vmatmul.mubr.bf16.gmra.mrb[0].mxu0 %v2784
        %v2823 = vpop.f32.mrb[0].mxu0
        %v2824 = vadd.f32 0.0, %v2823
        %v2825 = vpop.f32.mrb[0].mxu0
        %v2826 = vpop.f32.mrb[0].mxu0
        %v2827 = vpop.f32.mrb[0].mxu0
        %2828 = vdwg.mxu0
        %v2829 = vpack.c.bf16 %v2732, %v2686
        %v2830 = vpack.c.bf16 %v2824, %v2778
        %v2831 = vld [vmem:[%s748] sm:$0xff]
        %v2832 = vld [vmem:[%s748 + $0x8] sm:$0xff]
        %v2833 = vld [vmem:[%s748 + $0x10] sm:$0xff]
        %v2834 = vld [vmem:[%s748 + $0x18] sm:$0xff]
        %v2835 = vld [vmem:[%s748 + $0x20] sm:$0xff]
        %v2836 = vld [vmem:[%s748 + $0x28] sm:$0xff]
        %v2837 = vld [vmem:[%s748 + $0x30] sm:$0xff]
        %v2838 = vld [vmem:[%s748 + $0x38] sm:$0xff]
        %v2839 = vld [vmem:[%s748 + $0x40] sm:$0xff]
        %v2840 = vld [vmem:[%s748 + $0x48] sm:$0xff]
        %v2841 = vld [vmem:[%s748 + $0x50] sm:$0xff]
        %v2842 = vld [vmem:[%s748 + $0x58] sm:$0xff]
        %v2843 = vld [vmem:[%s748 + $0x60] sm:$0xff]
        %v2844 = vld [vmem:[%s748 + $0x68] sm:$0xff]
        %v2845 = vld [vmem:[%s748 + $0x70] sm:$0xff]
        %v2846 = vld [vmem:[%s748 + $0x78] sm:$0xff]
        %v2847 = vld [vmem:[%s748 + $0x80] sm:$0xff]
        %v2848 = vld [vmem:[%s748 + $0x88] sm:$0xff]
        %v2849 = vld [vmem:[%s748 + $0x90] sm:$0xff]
        %v2850 = vld [vmem:[%s748 + $0x98] sm:$0xff]
        %v2851 = vld [vmem:[%s748 + $0xa0] sm:$0xff]
        %v2852 = vld [vmem:[%s748 + $0xa8] sm:$0xff]
        %v2853 = vld [vmem:[%s748 + $0xb0] sm:$0xff]
        %v2854 = vld [vmem:[%s748 + $0xb8] sm:$0xff]
        %v2855 = vld [vmem:[%s748 + $0xc0] sm:$0xff]
        %v2856 = vld [vmem:[%s748 + $0xc8] sm:$0xff]
        %v2857 = vld [vmem:[%s748 + $0xd0] sm:$0xff]
        %v2858 = vld [vmem:[%s748 + $0xd8] sm:$0xff]
        %v2859 = vld [vmem:[%s748 + $0xe0] sm:$0xff]
        %v2860 = vld [vmem:[%s748 + $0xe8] sm:$0xff]
        %v2861 = vld [vmem:[%s748 + $0xf0] sm:$0xff]
        %v2862 = vld [vmem:[%s748 + $0xf8] sm:$0xff]
        %v2879 = vunpack.c.l.b16 %v2831
        %v2880 = vunpack.c.h.b16 %v2831
        %v2881 = vunpack.c.l.b16 %v2832
        %v2882 = vunpack.c.h.b16 %v2832
        %v2883 = vunpack.c.l.b16 %v2833
        %v2884 = vunpack.c.h.b16 %v2833
        %v2885 = vunpack.c.l.b16 %v2834
        %v2886 = vunpack.c.h.b16 %v2834
        %v2887 = vunpack.c.l.b16 %v2835
        %v2888 = vunpack.c.h.b16 %v2835
        %v2889 = vunpack.c.l.b16 %v2836
        %v2890 = vunpack.c.h.b16 %v2836
        %v2891 = vunpack.c.l.b16 %v2837
        %v2892 = vunpack.c.h.b16 %v2837
        %v2893 = vunpack.c.l.b16 %v2838
        %v2894 = vunpack.c.h.b16 %v2838
        %v2895 = vunpack.c.l.b16 %v2839
        %v2896 = vunpack.c.h.b16 %v2839
        %v2897 = vunpack.c.l.b16 %v2840
        %v2898 = vunpack.c.h.b16 %v2840
        %v2899 = vunpack.c.l.b16 %v2841
        %v2900 = vunpack.c.h.b16 %v2841
        %v2901 = vunpack.c.l.b16 %v2842
        %v2902 = vunpack.c.h.b16 %v2842
        %v2903 = vunpack.c.l.b16 %v2843
        %v2904 = vunpack.c.h.b16 %v2843
        %v2905 = vunpack.c.l.b16 %v2844
        %v2906 = vunpack.c.h.b16 %v2844
        %v2907 = vunpack.c.l.b16 %v2845
        %v2908 = vunpack.c.h.b16 %v2845
        %v2909 = vunpack.c.l.b16 %v2846
        %v2910 = vunpack.c.h.b16 %v2846
        %v2911 = vpack.c.b16 %v2881, %v2879
        %v2912 = vpack.c.b16 %v2882, %v2880
        %v2913 = vpack.c.b16 %v2885, %v2883
        %v2914 = vpack.c.b16 %v2886, %v2884
        %v2915 = vpack.c.b16 %v2889, %v2887
        %v2916 = vpack.c.b16 %v2890, %v2888
        %v2917 = vpack.c.b16 %v2893, %v2891
        %v2918 = vpack.c.b16 %v2894, %v2892
        %v2919 = vpack.c.b16 %v2897, %v2895
        %v2920 = vpack.c.b16 %v2898, %v2896
        %v2921 = vpack.c.b16 %v2901, %v2899
        %v2922 = vpack.c.b16 %v2902, %v2900
        %v2923 = vpack.c.b16 %v2905, %v2903
        %v2924 = vpack.c.b16 %v2906, %v2904
        %v2925 = vpack.c.b16 %v2909, %v2907
        %v2926 = vpack.c.b16 %v2910, %v2908
        %2943 = vmatprep.subr.bf16.mxu0 %v2912
        %2944 = vmatpush1.bf16.msra.mxu0 %v2911
        %2945 = vmatprep.subr.bf16.mxu0 %v2914
        %2946 = vmatpush1.bf16.msra.mxu0 %v2913
        %2947 = vmatprep.subr.bf16.mxu0 %v2916
        %2948 = vmatpush1.bf16.msra.mxu0 %v2915
        %2949 = vmatprep.subr.bf16.mxu0 %v2918
        %2950 = vmatpush1.bf16.msra.mxu0 %v2917
        %2951 = vmatprep.subr.bf16.mxu0 %v2920
        %2952 = vmatpush1.bf16.msra.mxu0 %v2919
        %2953 = vmatprep.subr.bf16.mxu0 %v2922
        %2954 = vmatpush1.bf16.msra.mxu0 %v2921
        %2955 = vmatprep.subr.bf16.mxu0 %v2924
        %2956 = vmatpush1.bf16.msra.mxu0 %v2923
        %2957 = vmatprep.subr.bf16.mxu0 %v2926
        %2958 = vmatpush1.bf16.msra.mxu0 %v2925
        %2959 = vmatprep.subr.bf16.mxu0 0
        %2960 = vmatpush1.bf16.msra.mxu0 0
        %2961 = vmatprep.subr.bf16.mxu0 0
        %2962 = vmatpush1.bf16.msra.mxu0 0
        %2963 = vmatprep.subr.bf16.mxu0 0
        %2964 = vmatpush1.bf16.msra.mxu0 0
        %2965 = vmatprep.subr.bf16.mxu0 0
        %2966 = vmatpush1.bf16.msra.mxu0 0
        %2967 = vmatprep.subr.bf16.mxu0 0
        %2968 = vmatpush1.bf16.msra.mxu0 0
        %2969 = vmatprep.subr.bf16.mxu0 0
        %2970 = vmatpush1.bf16.msra.mxu0 0
        %2971 = vmatprep.subr.bf16.mxu0 0
        %2972 = vmatpush1.bf16.msra.mxu0 0
        %2973 = vmatprep.subr.bf16.mxu0 0
        %2974 = vmatpush1.bf16.msra.mxu0 0
        %2975 = vmatprep.mubr.bf16.mxu0 0
        %2976 = vmatmul.mubr.bf16.gmra.mrb[0].mxu0 %v2829
        %v2977 = vpop.f32.mrb[0].mxu0
        %v2978 = vadd.f32 0.0, %v2977
        %v2979 = vpop.f32.mrb[0].mxu0
        %v2980 = vadd.f32 0.0, %v2979
        %v2981 = vpop.f32.mrb[0].mxu0
        %v2982 = vadd.f32 0.0, %v2981
        %v2983 = vpop.f32.mrb[0].mxu0
        %v2984 = vadd.f32 0.0, %v2983
        %2985 = vdwg.mxu0
        %v3002 = vunpack.c.l.b16 %v2847
        %v3003 = vunpack.c.h.b16 %v2847
        %v3004 = vunpack.c.l.b16 %v2848
        %v3005 = vunpack.c.h.b16 %v2848
        %v3006 = vunpack.c.l.b16 %v2849
        %v3007 = vunpack.c.h.b16 %v2849
        %v3008 = vunpack.c.l.b16 %v2850
        %v3009 = vunpack.c.h.b16 %v2850
        %v3010 = vunpack.c.l.b16 %v2851
        %v3011 = vunpack.c.h.b16 %v2851
        %v3012 = vunpack.c.l.b16 %v2852
        %v3013 = vunpack.c.h.b16 %v2852
        %v3014 = vunpack.c.l.b16 %v2853
        %v3015 = vunpack.c.h.b16 %v2853
        %v3016 = vunpack.c.l.b16 %v2854
        %v3017 = vunpack.c.h.b16 %v2854
        %v3018 = vunpack.c.l.b16 %v2855
        %v3019 = vunpack.c.h.b16 %v2855
        %v3020 = vunpack.c.l.b16 %v2856
        %v3021 = vunpack.c.h.b16 %v2856
        %v3022 = vunpack.c.l.b16 %v2857
        %v3023 = vunpack.c.h.b16 %v2857
        %v3024 = vunpack.c.l.b16 %v2858
        %v3025 = vunpack.c.h.b16 %v2858
        %v3026 = vunpack.c.l.b16 %v2859
        %v3027 = vunpack.c.h.b16 %v2859
        %v3028 = vunpack.c.l.b16 %v2860
        %v3029 = vunpack.c.h.b16 %v2860
        %v3030 = vunpack.c.l.b16 %v2861
        %v3031 = vunpack.c.h.b16 %v2861
        %v3032 = vunpack.c.l.b16 %v2862
        %v3033 = vunpack.c.h.b16 %v2862
        %v3034 = vpack.c.b16 %v3004, %v3002
        %v3035 = vpack.c.b16 %v3005, %v3003
        %v3036 = vpack.c.b16 %v3008, %v3006
        %v3037 = vpack.c.b16 %v3009, %v3007
        %v3038 = vpack.c.b16 %v3012, %v3010
        %v3039 = vpack.c.b16 %v3013, %v3011
        %v3040 = vpack.c.b16 %v3016, %v3014
        %v3041 = vpack.c.b16 %v3017, %v3015
        %v3042 = vpack.c.b16 %v3020, %v3018
        %v3043 = vpack.c.b16 %v3021, %v3019
        %v3044 = vpack.c.b16 %v3024, %v3022
        %v3045 = vpack.c.b16 %v3025, %v3023
        %v3046 = vpack.c.b16 %v3028, %v3026
        %v3047 = vpack.c.b16 %v3029, %v3027
        %v3048 = vpack.c.b16 %v3032, %v3030
        %v3049 = vpack.c.b16 %v3033, %v3031
        %3066 = vmatprep.subr.bf16.mxu0 %v3035
        %3067 = vmatpush1.bf16.msra.mxu0 %v3034
        %3068 = vmatprep.subr.bf16.mxu0 %v3037
        %3069 = vmatpush1.bf16.msra.mxu0 %v3036
        %3070 = vmatprep.subr.bf16.mxu0 %v3039
        %3071 = vmatpush1.bf16.msra.mxu0 %v3038
        %3072 = vmatprep.subr.bf16.mxu0 %v3041
        %3073 = vmatpush1.bf16.msra.mxu0 %v3040
        %3074 = vmatprep.subr.bf16.mxu0 %v3043
        %3075 = vmatpush1.bf16.msra.mxu0 %v3042
        %3076 = vmatprep.subr.bf16.mxu0 %v3045
        %3077 = vmatpush1.bf16.msra.mxu0 %v3044
        %3078 = vmatprep.subr.bf16.mxu0 %v3047
        %3079 = vmatpush1.bf16.msra.mxu0 %v3046
        %3080 = vmatprep.subr.bf16.mxu0 %v3049
        %3081 = vmatpush1.bf16.msra.mxu0 %v3048
        %3082 = vmatprep.subr.bf16.mxu0 0
        %3083 = vmatpush1.bf16.msra.mxu0 0
        %3084 = vmatprep.subr.bf16.mxu0 0
        %3085 = vmatpush1.bf16.msra.mxu0 0
        %3086 = vmatprep.subr.bf16.mxu0 0
        %3087 = vmatpush1.bf16.msra.mxu0 0
        %3088 = vmatprep.subr.bf16.mxu0 0
        %3089 = vmatpush1.bf16.msra.mxu0 0
        %3090 = vmatprep.subr.bf16.mxu0 0
        %3091 = vmatpush1.bf16.msra.mxu0 0
        %3092 = vmatprep.subr.bf16.mxu0 0
        %3093 = vmatpush1.bf16.msra.mxu0 0
        %3094 = vmatprep.subr.bf16.mxu0 0
        %3095 = vmatpush1.bf16.msra.mxu0 0
        %3096 = vmatprep.subr.bf16.mxu0 0
        %3097 = vmatpush1.bf16.msra.mxu0 0
        %3098 = vmatprep.mubr.bf16.mxu0 0
        %3099 = vmatmul.mubr.bf16.gmra.mrb[0].mxu0 %v2830
        %v3100 = vpop.f32.mrb[0].mxu0
        %v3101 = vadd.f32 0.0, %v3100
        %v3102 = vpop.f32.mrb[0].mxu0
        %v3103 = vadd.f32 0.0, %v3102
        %v3104 = vpop.f32.mrb[0].mxu0
        %v3105 = vadd.f32 0.0, %v3104
        %v3106 = vpop.f32.mrb[0].mxu0
        %v3107 = vadd.f32 0.0, %v3106
        %3108 = vdwg.mxu0
        %v3109 = vadd.f32 %v2978, %v3101
        %v3110 = vadd.f32 %v2980, %v3103
        %v3111 = vadd.f32 %v2982, %v3105
        %v3112 = vadd.f32 %v2984, %v3107
        %v3113 = vld [vmem:[%s878] sm:$0x3]
        %v3115 = vlaneseq
        %v3116 = vshrl.u32 %v3115, 7
        %v3117 = vsub.s32 0, %v3116
        %v3118 = vrot.slane %v3113, %v3117
        %v3119 = vlaneseq
        %v3120 = vshrl.u32 %v3119, 7
        %v3121 = vsub.s32 1, %v3120
        %v3122 = vrot.slane %v3113, %v3121
        %v3125 = vadd.f32 %v3109, %v3118
        %v3126 = vadd.f32 %v3110, %v3122
        %v3127 = vadd.f32 %v3111, %v3118
        %v3128 = vadd.f32 %v3112, %v3122
        %v3129 = vadd.f32 %v917, %v3125
        %v3130 = vadd.f32 %v918, %v3126
        %v3131 = vadd.f32 %v919, %v3127
        %v3132 = vadd.f32 %v920, %v3128
        %v3133 = vld [vmem:[%s898] sm:$0x3]
        %v3134 = vld [vmem:[%s902] sm:$0x3]
        %v3135 = vadd.f32 %v3129, %v3130
        %3136 = vadd.xlane.f32.xlu0 %v3135
        %v3137 = vpop.xlane.xlu0 %3136
        %v3138 = vadd.f32 %v3131, %v3132
        %3139 = vadd.xlane.f32.xlu0 %v3138
        %v3140 = vpop.xlane.xlu0 %3139
        %v3141 = vmul.f32 %v3137, %v929
        %v3142 = vmul.f32 %v3140, %v929
        %v3143 = vsub.f32 %v3129, %v3141
        %v3144 = vsub.f32 %v3130, %v3141
        %v3145 = vsub.f32 %v3131, %v3142
        %v3146 = vsub.f32 %v3132, %v3142
        %v3147 = vmul.f32 %v3143, %v3143
        %v3148 = vmul.f32 %v3144, %v3144
        %v3149 = vmul.f32 %v3145, %v3145
        %v3150 = vmul.f32 %v3146, %v3146
        %v3151 = vadd.f32 %v3147, %v3148
        %3152 = vadd.xlane.f32.xlu0 %v3151
        %v3153 = vpop.xlane.xlu0 %3152
        %v3154 = vadd.f32 %v3149, %v3150
        %3155 = vadd.xlane.f32.xlu0 %v3154
        %v3156 = vpop.xlane.xlu0 %3155
        %v3157 = vmul.f32 %v3153, 0.003921569
        %v3158 = vmul.f32 %v3156, 0.003921569
        %v3160 = vlaneseq
        %v3161 = vshrl.u32 %v3160, 7
        %v3162 = vsub.s32 0, %v3161
        %v3163 = vrot.slane %v3133, %v3162
        %v3164 = vlaneseq
        %v3165 = vshrl.u32 %v3164, 7
        %v3166 = vsub.s32 1, %v3165
        %v3167 = vrot.slane %v3133, %v3166
        %v3170 = vmul.f32 %v3163, %v3143
        %v3171 = vmul.f32 %v3167, %v3144
        %v3172 = vmul.f32 %v3163, %v3145
        %v3173 = vmul.f32 %v3167, %v3146
        %v3174 = vrsqrt.pop %v3157
        %v3175 = vmul.f32 %v3157, %v3174
        %vm3176 = vcmp.eq.f32.partialorder %v3157, inf
        %v3177 = vsel %vm3176, %v3157, %v3175
        %vm3178 = vcmp.eq.f32.partialorder %v3157, 0.0
        %v3179 = vand.u32 %v3157, 2147483648
        %v3180 = vsel %vm3178, %v3179, %v3177
        %v3181 = vrsqrt.pop %v3158
        %v3182 = vmul.f32 %v3158, %v3181
        %vm3183 = vcmp.eq.f32.partialorder %v3158, inf
        %v3184 = vsel %vm3183, %v3158, %v3182
        %vm3185 = vcmp.eq.f32.partialorder %v3158, 0.0
        %v3186 = vand.u32 %v3158, 2147483648
        %v3187 = vsel %vm3185, %v3186, %v3184
        %v3188 = vadd.f32 %v3180, 1e-06
        %v3189 = vadd.f32 %v3187, 1e-06
        %v3190 = vrcp.pop %v3188
        %v3191 = vmul.f32 %v3170, %v3190
        %v3192 = vmul.f32 %v3171, %v3190
        %v3193 = vrcp.pop %v3189
        %v3194 = vmul.f32 %v3172, %v3193
        %v3195 = vmul.f32 %v3173, %v3193
        %v3197 = vlaneseq
        %v3198 = vshrl.u32 %v3197, 7
        %v3199 = vsub.s32 0, %v3198
        %v3200 = vrot.slane %v3134, %v3199
        %v3201 = vlaneseq
        %v3202 = vshrl.u32 %v3201, 7
        %v3203 = vsub.s32 1, %v3202
        %v3204 = vrot.slane %v3134, %v3203
        %v3207 = vadd.f32 %v3191, %v3200
        %v3208 = vadd.f32 %v3192, %v3204
        %v3209 = vadd.f32 %v3194, %v3200
        %v3210 = vadd.f32 %v3195, %v3204
        %v3211 = vpack.c.bf16 %v3209, %v3207
        %v3212 = vpack.c.bf16 %v3210, %v3208
        %v3213 = vld [vmem:[%s757] sm:$0xff]
        %v3214 = vld [vmem:[%s757 + $0x8] sm:$0xff]
        %v3215 = vld [vmem:[%s757 + $0x10] sm:$0xff]
        %v3216 = vld [vmem:[%s757 + $0x18] sm:$0xff]
        %v3217 = vld [vmem:[%s757 + $0x20] sm:$0xff]
        %v3218 = vld [vmem:[%s757 + $0x28] sm:$0xff]
        %v3219 = vld [vmem:[%s757 + $0x30] sm:$0xff]
        %v3220 = vld [vmem:[%s757 + $0x38] sm:$0xff]
        %v3221 = vld [vmem:[%s757 + $0x40] sm:$0xff]
        %v3222 = vld [vmem:[%s757 + $0x48] sm:$0xff]
        %v3223 = vld [vmem:[%s757 + $0x50] sm:$0xff]
        %v3224 = vld [vmem:[%s757 + $0x58] sm:$0xff]
        %v3225 = vld [vmem:[%s757 + $0x60] sm:$0xff]
        %v3226 = vld [vmem:[%s757 + $0x68] sm:$0xff]
        %v3227 = vld [vmem:[%s757 + $0x70] sm:$0xff]
        %v3228 = vld [vmem:[%s757 + $0x78] sm:$0xff]
        %v3229 = vld [vmem:[%s757 + $0x80] sm:$0xff]
        %v3230 = vld [vmem:[%s757 + $0x88] sm:$0xff]
        %v3231 = vld [vmem:[%s757 + $0x90] sm:$0xff]
        %v3232 = vld [vmem:[%s757 + $0x98] sm:$0xff]
        %v3233 = vld [vmem:[%s757 + $0xa0] sm:$0xff]
        %v3234 = vld [vmem:[%s757 + $0xa8] sm:$0xff]
        %v3235 = vld [vmem:[%s757 + $0xb0] sm:$0xff]
        %v3236 = vld [vmem:[%s757 + $0xb8] sm:$0xff]
        %v3237 = vld [vmem:[%s757 + $0xc0] sm:$0xff]
        %v3238 = vld [vmem:[%s757 + $0xc8] sm:$0xff]
        %v3239 = vld [vmem:[%s757 + $0xd0] sm:$0xff]
        %v3240 = vld [vmem:[%s757 + $0xd8] sm:$0xff]
        %v3241 = vld [vmem:[%s757 + $0xe0] sm:$0xff]
        %v3242 = vld [vmem:[%s757 + $0xe8] sm:$0xff]
        %v3243 = vld [vmem:[%s757 + $0xf0] sm:$0xff]
        %v3244 = vld [vmem:[%s757 + $0xf8] sm:$0xff]
        %v3245 = vld [vmem:[%s757 + $0x100] sm:$0xff]
        %v3246 = vld [vmem:[%s757 + $0x108] sm:$0xff]
        %v3247 = vld [vmem:[%s757 + $0x110] sm:$0xff]
        %v3248 = vld [vmem:[%s757 + $0x118] sm:$0xff]
        %v3249 = vld [vmem:[%s757 + $0x120] sm:$0xff]
        %v3250 = vld [vmem:[%s757 + $0x128] sm:$0xff]
        %v3251 = vld [vmem:[%s757 + $0x130] sm:$0xff]
        %v3252 = vld [vmem:[%s757 + $0x138] sm:$0xff]
        %v3253 = vld [vmem:[%s757 + $0x140] sm:$0xff]
        %v3254 = vld [vmem:[%s757 + $0x148] sm:$0xff]
        %v3255 = vld [vmem:[%s757 + $0x150] sm:$0xff]
        %v3256 = vld [vmem:[%s757 + $0x158] sm:$0xff]
        %v3257 = vld [vmem:[%s757 + $0x160] sm:$0xff]
        %v3258 = vld [vmem:[%s757 + $0x168] sm:$0xff]
        %v3259 = vld [vmem:[%s757 + $0x170] sm:$0xff]
        %v3260 = vld [vmem:[%s757 + $0x178] sm:$0xff]
        %v3261 = vld [vmem:[%s757 + $0x180] sm:$0xff]
        %v3262 = vld [vmem:[%s757 + $0x188] sm:$0xff]
        %v3263 = vld [vmem:[%s757 + $0x190] sm:$0xff]
        %v3264 = vld [vmem:[%s757 + $0x198] sm:$0xff]
        %v3265 = vld [vmem:[%s757 + $0x1a0] sm:$0xff]
        %v3266 = vld [vmem:[%s757 + $0x1a8] sm:$0xff]
        %v3267 = vld [vmem:[%s757 + $0x1b0] sm:$0xff]
        %v3268 = vld [vmem:[%s757 + $0x1b8] sm:$0xff]
        %v3269 = vld [vmem:[%s757 + $0x1c0] sm:$0xff]
        %v3270 = vld [vmem:[%s757 + $0x1c8] sm:$0xff]
        %v3271 = vld [vmem:[%s757 + $0x1d0] sm:$0xff]
        %v3272 = vld [vmem:[%s757 + $0x1d8] sm:$0xff]
        %v3273 = vld [vmem:[%s757 + $0x1e0] sm:$0xff]
        %v3274 = vld [vmem:[%s757 + $0x1e8] sm:$0xff]
        %v3275 = vld [vmem:[%s757 + $0x1f0] sm:$0xff]
        %v3276 = vld [vmem:[%s757 + $0x1f8] sm:$0xff]
        %v3277 = vld [vmem:[%s882] sm:$0xf]
        %v3279 = vlaneseq
        %v3280 = vshrl.u32 %v3279, 7
        %v3281 = vsub.s32 0, %v3280
        %v3282 = vrot.slane %v3277, %v3281
        %v3283 = vlaneseq
        %v3284 = vshrl.u32 %v3283, 7
        %v3285 = vsub.s32 1, %v3284
        %v3286 = vrot.slane %v3277, %v3285
        %v3287 = vlaneseq
        %v3288 = vshrl.u32 %v3287, 7
        %v3289 = vsub.s32 2, %v3288
        %v3290 = vrot.slane %v3277, %v3289
        %v3291 = vlaneseq
        %v3292 = vshrl.u32 %v3291, 7
        %v3293 = vsub.s32 3, %v3292
        %v3294 = vrot.slane %v3277, %v3293
        %v3363 = vunpack.c.l.b16 %v3213
        %v3364 = vunpack.c.h.b16 %v3213
        %v3365 = vunpack.c.l.b16 %v3214
        %v3366 = vunpack.c.h.b16 %v3214
        %v3367 = vunpack.c.l.b16 %v3215
        %v3368 = vunpack.c.h.b16 %v3215
        %v3369 = vunpack.c.l.b16 %v3216
        %v3370 = vunpack.c.h.b16 %v3216
        %v3371 = vunpack.c.l.b16 %v3217
        %v3372 = vunpack.c.h.b16 %v3217
        %v3373 = vunpack.c.l.b16 %v3218
        %v3374 = vunpack.c.h.b16 %v3218
        %v3375 = vunpack.c.l.b16 %v3219
        %v3376 = vunpack.c.h.b16 %v3219
        %v3377 = vunpack.c.l.b16 %v3220
        %v3378 = vunpack.c.h.b16 %v3220
        %v3379 = vunpack.c.l.b16 %v3221
        %v3380 = vunpack.c.h.b16 %v3221
        %v3381 = vunpack.c.l.b16 %v3222
        %v3382 = vunpack.c.h.b16 %v3222
        %v3383 = vunpack.c.l.b16 %v3223
        %v3384 = vunpack.c.h.b16 %v3223
        %v3385 = vunpack.c.l.b16 %v3224
        %v3386 = vunpack.c.h.b16 %v3224
        %v3387 = vunpack.c.l.b16 %v3225
        %v3388 = vunpack.c.h.b16 %v3225
        %v3389 = vunpack.c.l.b16 %v3226
        %v3390 = vunpack.c.h.b16 %v3226
        %v3391 = vunpack.c.l.b16 %v3227
        %v3392 = vunpack.c.h.b16 %v3227
        %v3393 = vunpack.c.l.b16 %v3228
        %v3394 = vunpack.c.h.b16 %v3228
        %v3395 = vunpack.c.l.b16 %v3229
        %v3396 = vunpack.c.h.b16 %v3229
        %v3397 = vunpack.c.l.b16 %v3230
        %v3398 = vunpack.c.h.b16 %v3230
        %v3399 = vunpack.c.l.b16 %v3231
        %v3400 = vunpack.c.h.b16 %v3231
        %v3401 = vunpack.c.l.b16 %v3232
        %v3402 = vunpack.c.h.b16 %v3232
        %v3403 = vunpack.c.l.b16 %v3233
        %v3404 = vunpack.c.h.b16 %v3233
        %v3405 = vunpack.c.l.b16 %v3234
        %v3406 = vunpack.c.h.b16 %v3234
        %v3407 = vunpack.c.l.b16 %v3235
        %v3408 = vunpack.c.h.b16 %v3235
        %v3409 = vunpack.c.l.b16 %v3236
        %v3410 = vunpack.c.h.b16 %v3236
        %v3411 = vunpack.c.l.b16 %v3237
        %v3412 = vunpack.c.h.b16 %v3237
        %v3413 = vunpack.c.l.b16 %v3238
        %v3414 = vunpack.c.h.b16 %v3238
        %v3415 = vunpack.c.l.b16 %v3239
        %v3416 = vunpack.c.h.b16 %v3239
        %v3417 = vunpack.c.l.b16 %v3240
        %v3418 = vunpack.c.h.b16 %v3240
        %v3419 = vunpack.c.l.b16 %v3241
        %v3420 = vunpack.c.h.b16 %v3241
        %v3421 = vunpack.c.l.b16 %v3242
        %v3422 = vunpack.c.h.b16 %v3242
        %v3423 = vunpack.c.l.b16 %v3243
        %v3424 = vunpack.c.h.b16 %v3243
        %v3425 = vunpack.c.l.b16 %v3244
        %v3426 = vunpack.c.h.b16 %v3244
        %v3427 = vunpack.c.l.b16 %v3245
        %v3428 = vunpack.c.h.b16 %v3245
        %v3429 = vunpack.c.l.b16 %v3246
        %v3430 = vunpack.c.h.b16 %v3246
        %v3431 = vunpack.c.l.b16 %v3247
        %v3432 = vunpack.c.h.b16 %v3247
        %v3433 = vunpack.c.l.b16 %v3248
        %v3434 = vunpack.c.h.b16 %v3248
        %v3435 = vunpack.c.l.b16 %v3249
        %v3436 = vunpack.c.h.b16 %v3249
        %v3437 = vunpack.c.l.b16 %v3250
        %v3438 = vunpack.c.h.b16 %v3250
        %v3439 = vunpack.c.l.b16 %v3251
        %v3440 = vunpack.c.h.b16 %v3251
        %v3441 = vunpack.c.l.b16 %v3252
        %v3442 = vunpack.c.h.b16 %v3252
        %v3443 = vunpack.c.l.b16 %v3253
        %v3444 = vunpack.c.h.b16 %v3253
        %v3445 = vunpack.c.l.b16 %v3254
        %v3446 = vunpack.c.h.b16 %v3254
        %v3447 = vunpack.c.l.b16 %v3255
        %v3448 = vunpack.c.h.b16 %v3255
        %v3449 = vunpack.c.l.b16 %v3256
        %v3450 = vunpack.c.h.b16 %v3256
        %v3451 = vunpack.c.l.b16 %v3257
        %v3452 = vunpack.c.h.b16 %v3257
        %v3453 = vunpack.c.l.b16 %v3258
        %v3454 = vunpack.c.h.b16 %v3258
        %v3455 = vunpack.c.l.b16 %v3259
        %v3456 = vunpack.c.h.b16 %v3259
        %v3457 = vunpack.c.l.b16 %v3260
        %v3458 = vunpack.c.h.b16 %v3260
        %v3459 = vunpack.c.l.b16 %v3261
        %v3460 = vunpack.c.h.b16 %v3261
        %v3461 = vunpack.c.l.b16 %v3262
        %v3462 = vunpack.c.h.b16 %v3262
        %v3463 = vunpack.c.l.b16 %v3263
        %v3464 = vunpack.c.h.b16 %v3263
        %v3465 = vunpack.c.l.b16 %v3264
        %v3466 = vunpack.c.h.b16 %v3264
        %v3467 = vunpack.c.l.b16 %v3265
        %v3468 = vunpack.c.h.b16 %v3265
        %v3469 = vunpack.c.l.b16 %v3266
        %v3470 = vunpack.c.h.b16 %v3266
        %v3471 = vunpack.c.l.b16 %v3267
        %v3472 = vunpack.c.h.b16 %v3267
        %v3473 = vunpack.c.l.b16 %v3268
        %v3474 = vunpack.c.h.b16 %v3268
        %v3475 = vunpack.c.l.b16 %v3269
        %v3476 = vunpack.c.h.b16 %v3269
        %v3477 = vunpack.c.l.b16 %v3270
        %v3478 = vunpack.c.h.b16 %v3270
        %v3479 = vunpack.c.l.b16 %v3271
        %v3480 = vunpack.c.h.b16 %v3271
        %v3481 = vunpack.c.l.b16 %v3272
        %v3482 = vunpack.c.h.b16 %v3272
        %v3483 = vunpack.c.l.b16 %v3273
        %v3484 = vunpack.c.h.b16 %v3273
        %v3485 = vunpack.c.l.b16 %v3274
        %v3486 = vunpack.c.h.b16 %v3274
        %v3487 = vunpack.c.l.b16 %v3275
        %v3488 = vunpack.c.h.b16 %v3275
        %v3489 = vunpack.c.l.b16 %v3276
        %v3490 = vunpack.c.h.b16 %v3276
        %v3491 = vpack.c.b16 %v3367, %v3363
        %v3492 = vpack.c.b16 %v3368, %v3364
        %v3493 = vpack.c.b16 %v3369, %v3365
        %v3494 = vpack.c.b16 %v3370, %v3366
        %v3495 = vpack.c.b16 %v3375, %v3371
        %v3496 = vpack.c.b16 %v3376, %v3372
        %v3497 = vpack.c.b16 %v3377, %v3373
        %v3498 = vpack.c.b16 %v3378, %v3374
        %v3499 = vpack.c.b16 %v3383, %v3379
        %v3500 = vpack.c.b16 %v3384, %v3380
        %v3501 = vpack.c.b16 %v3385, %v3381
        %v3502 = vpack.c.b16 %v3386, %v3382
        %v3503 = vpack.c.b16 %v3391, %v3387
        %v3504 = vpack.c.b16 %v3392, %v3388
        %v3505 = vpack.c.b16 %v3393, %v3389
        %v3506 = vpack.c.b16 %v3394, %v3390
        %v3507 = vpack.c.b16 %v3399, %v3395
        %v3508 = vpack.c.b16 %v3400, %v3396
        %v3509 = vpack.c.b16 %v3401, %v3397
        %v3510 = vpack.c.b16 %v3402, %v3398
        %v3511 = vpack.c.b16 %v3407, %v3403
        %v3512 = vpack.c.b16 %v3408, %v3404
        %v3513 = vpack.c.b16 %v3409, %v3405
        %v3514 = vpack.c.b16 %v3410, %v3406
        %v3515 = vpack.c.b16 %v3415, %v3411
        %v3516 = vpack.c.b16 %v3416, %v3412
        %v3517 = vpack.c.b16 %v3417, %v3413
        %v3518 = vpack.c.b16 %v3418, %v3414
        %v3519 = vpack.c.b16 %v3423, %v3419
        %v3520 = vpack.c.b16 %v3424, %v3420
        %v3521 = vpack.c.b16 %v3425, %v3421
        %v3522 = vpack.c.b16 %v3426, %v3422
        %v3523 = vpack.c.b16 %v3431, %v3427
        %v3524 = vpack.c.b16 %v3432, %v3428
        %v3525 = vpack.c.b16 %v3433, %v3429
        %v3526 = vpack.c.b16 %v3434, %v3430
        %v3527 = vpack.c.b16 %v3439, %v3435
        %v3528 = vpack.c.b16 %v3440, %v3436
        %v3529 = vpack.c.b16 %v3441, %v3437
        %v3530 = vpack.c.b16 %v3442, %v3438
        %v3531 = vpack.c.b16 %v3447, %v3443
        %v3532 = vpack.c.b16 %v3448, %v3444
        %v3533 = vpack.c.b16 %v3449, %v3445
        %v3534 = vpack.c.b16 %v3450, %v3446
        %v3535 = vpack.c.b16 %v3455, %v3451
        %v3536 = vpack.c.b16 %v3456, %v3452
        %v3537 = vpack.c.b16 %v3457, %v3453
        %v3538 = vpack.c.b16 %v3458, %v3454
        %v3539 = vpack.c.b16 %v3463, %v3459
        %v3540 = vpack.c.b16 %v3464, %v3460
        %v3541 = vpack.c.b16 %v3465, %v3461
        %v3542 = vpack.c.b16 %v3466, %v3462
        %v3543 = vpack.c.b16 %v3471, %v3467
        %v3544 = vpack.c.b16 %v3472, %v3468
        %v3545 = vpack.c.b16 %v3473, %v3469
        %v3546 = vpack.c.b16 %v3474, %v3470
        %v3547 = vpack.c.b16 %v3479, %v3475
        %v3548 = vpack.c.b16 %v3480, %v3476
        %v3549 = vpack.c.b16 %v3481, %v3477
        %v3550 = vpack.c.b16 %v3482, %v3478
        %v3551 = vpack.c.b16 %v3487, %v3483
        %v3552 = vpack.c.b16 %v3488, %v3484
        %v3553 = vpack.c.b16 %v3489, %v3485
        %v3554 = vpack.c.b16 %v3490, %v3486
        %3619 = vmatprep.subr.bf16.mxu0 %v3492
        %3620 = vmatpush1.bf16.msra.mxu0 %v3491
        %3621 = vmatprep.subr.bf16.mxu0 %v3496
        %3622 = vmatpush1.bf16.msra.mxu0 %v3495
        %3623 = vmatprep.subr.bf16.mxu0 %v3500
        %3624 = vmatpush1.bf16.msra.mxu0 %v3499
        %3625 = vmatprep.subr.bf16.mxu0 %v3504
        %3626 = vmatpush1.bf16.msra.mxu0 %v3503
        %3627 = vmatprep.subr.bf16.mxu0 %v3508
        %3628 = vmatpush1.bf16.msra.mxu0 %v3507
        %3629 = vmatprep.subr.bf16.mxu0 %v3512
        %3630 = vmatpush1.bf16.msra.mxu0 %v3511
        %3631 = vmatprep.subr.bf16.mxu0 %v3516
        %3632 = vmatpush1.bf16.msra.mxu0 %v3515
        %3633 = vmatprep.subr.bf16.mxu0 %v3520
        %3634 = vmatpush1.bf16.msra.mxu0 %v3519
        %3635 = vmatprep.subr.bf16.mxu0 %v3524
        %3636 = vmatpush1.bf16.msra.mxu0 %v3523
        %3637 = vmatprep.subr.bf16.mxu0 %v3528
        %3638 = vmatpush1.bf16.msra.mxu0 %v3527
        %3639 = vmatprep.subr.bf16.mxu0 %v3532
        %3640 = vmatpush1.bf16.msra.mxu0 %v3531
        %3641 = vmatprep.subr.bf16.mxu0 %v3536
        %3642 = vmatpush1.bf16.msra.mxu0 %v3535
        %3643 = vmatprep.subr.bf16.mxu0 %v3540
        %3644 = vmatpush1.bf16.msra.mxu0 %v3539
        %3645 = vmatprep.subr.bf16.mxu0 %v3544
        %3646 = vmatpush1.bf16.msra.mxu0 %v3543
        %3647 = vmatprep.subr.bf16.mxu0 %v3548
        %3648 = vmatpush1.bf16.msra.mxu0 %v3547
        %3649 = vmatprep.subr.bf16.mxu0 %v3552
        %3650 = vmatpush1.bf16.msra.mxu0 %v3551
        %3651 = vmatprep.mubr.bf16.mxu0 %v3212
        %3652 = vmatmul.mubr.bf16.gmra.mrb[0].mxu0 %v3211
        %v3653 = vpop.f32.mrb[0].mxu0
        %v3654 = vadd.f32 %v3282, %v3653
        %v3655 = vpop.f32.mrb[0].mxu0
        %v3656 = vadd.f32 %v3286, %v3655
        %v3657 = vpop.f32.mrb[0].mxu0
        %v3658 = vadd.f32 %v3282, %v3657
        %v3659 = vpop.f32.mrb[0].mxu0
        %v3660 = vadd.f32 %v3286, %v3659
        %3661 = vdwg.mxu0
        %3662 = vmatprep.subr.bf16.mxu0 %v3494
        %3663 = vmatpush1.bf16.msra.mxu0 %v3493
        %3664 = vmatprep.subr.bf16.mxu0 %v3498
        %3665 = vmatpush1.bf16.msra.mxu0 %v3497
        %3666 = vmatprep.subr.bf16.mxu0 %v3502
        %3667 = vmatpush1.bf16.msra.mxu0 %v3501
        %3668 = vmatprep.subr.bf16.mxu0 %v3506
        %3669 = vmatpush1.bf16.msra.mxu0 %v3505
        %3670 = vmatprep.subr.bf16.mxu0 %v3510
        %3671 = vmatpush1.bf16.msra.mxu0 %v3509
        %3672 = vmatprep.subr.bf16.mxu0 %v3514
        %3673 = vmatpush1.bf16.msra.mxu0 %v3513
        %3674 = vmatprep.subr.bf16.mxu0 %v3518
        %3675 = vmatpush1.bf16.msra.mxu0 %v3517
        %3676 = vmatprep.subr.bf16.mxu0 %v3522
        %3677 = vmatpush1.bf16.msra.mxu0 %v3521
        %3678 = vmatprep.subr.bf16.mxu0 %v3526
        %3679 = vmatpush1.bf16.msra.mxu0 %v3525
        %3680 = vmatprep.subr.bf16.mxu0 %v3530
        %3681 = vmatpush1.bf16.msra.mxu0 %v3529
        %3682 = vmatprep.subr.bf16.mxu0 %v3534
        %3683 = vmatpush1.bf16.msra.mxu0 %v3533
        %3684 = vmatprep.subr.bf16.mxu0 %v3538
        %3685 = vmatpush1.bf16.msra.mxu0 %v3537
        %3686 = vmatprep.subr.bf16.mxu0 %v3542
        %3687 = vmatpush1.bf16.msra.mxu0 %v3541
        %3688 = vmatprep.subr.bf16.mxu0 %v3546
        %3689 = vmatpush1.bf16.msra.mxu0 %v3545
        %3690 = vmatprep.subr.bf16.mxu0 %v3550
        %3691 = vmatpush1.bf16.msra.mxu0 %v3549
        %3692 = vmatprep.subr.bf16.mxu0 %v3554
        %3693 = vmatpush1.bf16.msra.mxu0 %v3553
        %3694 = vmatprep.mubr.bf16.mxu0 %v3212
        %3695 = vmatmul.mubr.bf16.gmra.mrb[0].mxu0 %v3211
        %v3696 = vpop.f32.mrb[0].mxu0
        %v3697 = vadd.f32 %v3290, %v3696
        %v3698 = vpop.f32.mrb[0].mxu0
        %v3699 = vadd.f32 %v3294, %v3698
        %v3700 = vpop.f32.mrb[0].mxu0
        %v3701 = vadd.f32 %v3290, %v3700
        %v3702 = vpop.f32.mrb[0].mxu0
        %v3703 = vadd.f32 %v3294, %v3702
        %3704 = vdwg.mxu0
        %v3705 = vmax.f32 %v3654, 0.0
        %v3706 = vmax.f32 %v3656, 0.0
        %v3707 = vmax.f32 %v3697, 0.0
        %v3708 = vmax.f32 %v3699, 0.0
        %v3709 = vmax.f32 %v3658, 0.0
        %v3710 = vmax.f32 %v3660, 0.0
        %v3711 = vmax.f32 %v3701, 0.0
        %v3712 = vmax.f32 %v3703, 0.0
        %v3713 = vpack.c.bf16 %v3709, %v3705
        %v3714 = vpack.c.bf16 %v3710, %v3706
        %v3715 = vpack.c.bf16 %v3711, %v3707
        %v3716 = vpack.c.bf16 %v3712, %v3708
        %v3717 = vld [vmem:[%s766] sm:$0xff]
        %v3718 = vld [vmem:[%s766 + $0x8] sm:$0xff]
        %v3719 = vld [vmem:[%s766 + $0x10] sm:$0xff]
        %v3720 = vld [vmem:[%s766 + $0x18] sm:$0xff]
        %v3721 = vld [vmem:[%s766 + $0x20] sm:$0xff]
        %v3722 = vld [vmem:[%s766 + $0x28] sm:$0xff]
        %v3723 = vld [vmem:[%s766 + $0x30] sm:$0xff]
        %v3724 = vld [vmem:[%s766 + $0x38] sm:$0xff]
        %v3725 = vld [vmem:[%s766 + $0x40] sm:$0xff]
        %v3726 = vld [vmem:[%s766 + $0x48] sm:$0xff]
        %v3727 = vld [vmem:[%s766 + $0x50] sm:$0xff]
        %v3728 = vld [vmem:[%s766 + $0x58] sm:$0xff]
        %v3729 = vld [vmem:[%s766 + $0x60] sm:$0xff]
        %v3730 = vld [vmem:[%s766 + $0x68] sm:$0xff]
        %v3731 = vld [vmem:[%s766 + $0x70] sm:$0xff]
        %v3732 = vld [vmem:[%s766 + $0x78] sm:$0xff]
        %v3733 = vld [vmem:[%s766 + $0x80] sm:$0xff]
        %v3734 = vld [vmem:[%s766 + $0x88] sm:$0xff]
        %v3735 = vld [vmem:[%s766 + $0x90] sm:$0xff]
        %v3736 = vld [vmem:[%s766 + $0x98] sm:$0xff]
        %v3737 = vld [vmem:[%s766 + $0xa0] sm:$0xff]
        %v3738 = vld [vmem:[%s766 + $0xa8] sm:$0xff]
        %v3739 = vld [vmem:[%s766 + $0xb0] sm:$0xff]
        %v3740 = vld [vmem:[%s766 + $0xb8] sm:$0xff]
        %v3741 = vld [vmem:[%s766 + $0xc0] sm:$0xff]
        %v3742 = vld [vmem:[%s766 + $0xc8] sm:$0xff]
        %v3743 = vld [vmem:[%s766 + $0xd0] sm:$0xff]
        %v3744 = vld [vmem:[%s766 + $0xd8] sm:$0xff]
        %v3745 = vld [vmem:[%s766 + $0xe0] sm:$0xff]
        %v3746 = vld [vmem:[%s766 + $0xe8] sm:$0xff]
        %v3747 = vld [vmem:[%s766 + $0xf0] sm:$0xff]
        %v3748 = vld [vmem:[%s766 + $0xf8] sm:$0xff]
        %v3749 = vld [vmem:[%s766 + $0x100] sm:$0xff]
        %v3750 = vld [vmem:[%s766 + $0x108] sm:$0xff]
        %v3751 = vld [vmem:[%s766 + $0x110] sm:$0xff]
        %v3752 = vld [vmem:[%s766 + $0x118] sm:$0xff]
        %v3753 = vld [vmem:[%s766 + $0x120] sm:$0xff]
        %v3754 = vld [vmem:[%s766 + $0x128] sm:$0xff]
        %v3755 = vld [vmem:[%s766 + $0x130] sm:$0xff]
        %v3756 = vld [vmem:[%s766 + $0x138] sm:$0xff]
        %v3757 = vld [vmem:[%s766 + $0x140] sm:$0xff]
        %v3758 = vld [vmem:[%s766 + $0x148] sm:$0xff]
        %v3759 = vld [vmem:[%s766 + $0x150] sm:$0xff]
        %v3760 = vld [vmem:[%s766 + $0x158] sm:$0xff]
        %v3761 = vld [vmem:[%s766 + $0x160] sm:$0xff]
        %v3762 = vld [vmem:[%s766 + $0x168] sm:$0xff]
        %v3763 = vld [vmem:[%s766 + $0x170] sm:$0xff]
        %v3764 = vld [vmem:[%s766 + $0x178] sm:$0xff]
        %v3765 = vld [vmem:[%s766 + $0x180] sm:$0xff]
        %v3766 = vld [vmem:[%s766 + $0x188] sm:$0xff]
        %v3767 = vld [vmem:[%s766 + $0x190] sm:$0xff]
        %v3768 = vld [vmem:[%s766 + $0x198] sm:$0xff]
        %v3769 = vld [vmem:[%s766 + $0x1a0] sm:$0xff]
        %v3770 = vld [vmem:[%s766 + $0x1a8] sm:$0xff]
        %v3771 = vld [vmem:[%s766 + $0x1b0] sm:$0xff]
        %v3772 = vld [vmem:[%s766 + $0x1b8] sm:$0xff]
        %v3773 = vld [vmem:[%s766 + $0x1c0] sm:$0xff]
        %v3774 = vld [vmem:[%s766 + $0x1c8] sm:$0xff]
        %v3775 = vld [vmem:[%s766 + $0x1d0] sm:$0xff]
        %v3776 = vld [vmem:[%s766 + $0x1d8] sm:$0xff]
        %v3777 = vld [vmem:[%s766 + $0x1e0] sm:$0xff]
        %v3778 = vld [vmem:[%s766 + $0x1e8] sm:$0xff]
        %v3779 = vld [vmem:[%s766 + $0x1f0] sm:$0xff]
        %v3780 = vld [vmem:[%s766 + $0x1f8] sm:$0xff]
        %v3781 = vld [vmem:[%s886] sm:$0x3]
        %v3783 = vlaneseq
        %v3784 = vshrl.u32 %v3783, 7
        %v3785 = vsub.s32 0, %v3784
        %v3786 = vrot.slane %v3781, %v3785
        %v3787 = vlaneseq
        %v3788 = vshrl.u32 %v3787, 7
        %v3789 = vsub.s32 1, %v3788
        %v3790 = vrot.slane %v3781, %v3789
        %v3857 = vunpack.c.l.b16 %v3717
        %v3858 = vunpack.c.h.b16 %v3717
        %v3859 = vunpack.c.l.b16 %v3718
        %v3860 = vunpack.c.h.b16 %v3718
        %v3861 = vunpack.c.l.b16 %v3719
        %v3862 = vunpack.c.h.b16 %v3719
        %v3863 = vunpack.c.l.b16 %v3720
        %v3864 = vunpack.c.h.b16 %v3720
        %v3865 = vunpack.c.l.b16 %v3721
        %v3866 = vunpack.c.h.b16 %v3721
        %v3867 = vunpack.c.l.b16 %v3722
        %v3868 = vunpack.c.h.b16 %v3722
        %v3869 = vunpack.c.l.b16 %v3723
        %v3870 = vunpack.c.h.b16 %v3723
        %v3871 = vunpack.c.l.b16 %v3724
        %v3872 = vunpack.c.h.b16 %v3724
        %v3873 = vunpack.c.l.b16 %v3725
        %v3874 = vunpack.c.h.b16 %v3725
        %v3875 = vunpack.c.l.b16 %v3726
        %v3876 = vunpack.c.h.b16 %v3726
        %v3877 = vunpack.c.l.b16 %v3727
        %v3878 = vunpack.c.h.b16 %v3727
        %v3879 = vunpack.c.l.b16 %v3728
        %v3880 = vunpack.c.h.b16 %v3728
        %v3881 = vunpack.c.l.b16 %v3729
        %v3882 = vunpack.c.h.b16 %v3729
        %v3883 = vunpack.c.l.b16 %v3730
        %v3884 = vunpack.c.h.b16 %v3730
        %v3885 = vunpack.c.l.b16 %v3731
        %v3886 = vunpack.c.h.b16 %v3731
        %v3887 = vunpack.c.l.b16 %v3732
        %v3888 = vunpack.c.h.b16 %v3732
        %v3889 = vunpack.c.l.b16 %v3733
        %v3890 = vunpack.c.h.b16 %v3733
        %v3891 = vunpack.c.l.b16 %v3734
        %v3892 = vunpack.c.h.b16 %v3734
        %v3893 = vunpack.c.l.b16 %v3735
        %v3894 = vunpack.c.h.b16 %v3735
        %v3895 = vunpack.c.l.b16 %v3736
        %v3896 = vunpack.c.h.b16 %v3736
        %v3897 = vunpack.c.l.b16 %v3737
        %v3898 = vunpack.c.h.b16 %v3737
        %v3899 = vunpack.c.l.b16 %v3738
        %v3900 = vunpack.c.h.b16 %v3738
        %v3901 = vunpack.c.l.b16 %v3739
        %v3902 = vunpack.c.h.b16 %v3739
        %v3903 = vunpack.c.l.b16 %v3740
        %v3904 = vunpack.c.h.b16 %v3740
        %v3905 = vunpack.c.l.b16 %v3741
        %v3906 = vunpack.c.h.b16 %v3741
        %v3907 = vunpack.c.l.b16 %v3742
        %v3908 = vunpack.c.h.b16 %v3742
        %v3909 = vunpack.c.l.b16 %v3743
        %v3910 = vunpack.c.h.b16 %v3743
        %v3911 = vunpack.c.l.b16 %v3744
        %v3912 = vunpack.c.h.b16 %v3744
        %v3913 = vunpack.c.l.b16 %v3745
        %v3914 = vunpack.c.h.b16 %v3745
        %v3915 = vunpack.c.l.b16 %v3746
        %v3916 = vunpack.c.h.b16 %v3746
        %v3917 = vunpack.c.l.b16 %v3747
        %v3918 = vunpack.c.h.b16 %v3747
        %v3919 = vunpack.c.l.b16 %v3748
        %v3920 = vunpack.c.h.b16 %v3748
        %v3921 = vunpack.c.l.b16 %v3749
        %v3922 = vunpack.c.h.b16 %v3749
        %v3923 = vunpack.c.l.b16 %v3750
        %v3924 = vunpack.c.h.b16 %v3750
        %v3925 = vunpack.c.l.b16 %v3751
        %v3926 = vunpack.c.h.b16 %v3751
        %v3927 = vunpack.c.l.b16 %v3752
        %v3928 = vunpack.c.h.b16 %v3752
        %v3929 = vunpack.c.l.b16 %v3753
        %v3930 = vunpack.c.h.b16 %v3753
        %v3931 = vunpack.c.l.b16 %v3754
        %v3932 = vunpack.c.h.b16 %v3754
        %v3933 = vunpack.c.l.b16 %v3755
        %v3934 = vunpack.c.h.b16 %v3755
        %v3935 = vunpack.c.l.b16 %v3756
        %v3936 = vunpack.c.h.b16 %v3756
        %v3937 = vunpack.c.l.b16 %v3757
        %v3938 = vunpack.c.h.b16 %v3757
        %v3939 = vunpack.c.l.b16 %v3758
        %v3940 = vunpack.c.h.b16 %v3758
        %v3941 = vunpack.c.l.b16 %v3759
        %v3942 = vunpack.c.h.b16 %v3759
        %v3943 = vunpack.c.l.b16 %v3760
        %v3944 = vunpack.c.h.b16 %v3760
        %v3945 = vunpack.c.l.b16 %v3761
        %v3946 = vunpack.c.h.b16 %v3761
        %v3947 = vunpack.c.l.b16 %v3762
        %v3948 = vunpack.c.h.b16 %v3762
        %v3949 = vunpack.c.l.b16 %v3763
        %v3950 = vunpack.c.h.b16 %v3763
        %v3951 = vunpack.c.l.b16 %v3764
        %v3952 = vunpack.c.h.b16 %v3764
        %v3953 = vunpack.c.l.b16 %v3765
        %v3954 = vunpack.c.h.b16 %v3765
        %v3955 = vunpack.c.l.b16 %v3766
        %v3956 = vunpack.c.h.b16 %v3766
        %v3957 = vunpack.c.l.b16 %v3767
        %v3958 = vunpack.c.h.b16 %v3767
        %v3959 = vunpack.c.l.b16 %v3768
        %v3960 = vunpack.c.h.b16 %v3768
        %v3961 = vunpack.c.l.b16 %v3769
        %v3962 = vunpack.c.h.b16 %v3769
        %v3963 = vunpack.c.l.b16 %v3770
        %v3964 = vunpack.c.h.b16 %v3770
        %v3965 = vunpack.c.l.b16 %v3771
        %v3966 = vunpack.c.h.b16 %v3771
        %v3967 = vunpack.c.l.b16 %v3772
        %v3968 = vunpack.c.h.b16 %v3772
        %v3969 = vunpack.c.l.b16 %v3773
        %v3970 = vunpack.c.h.b16 %v3773
        %v3971 = vunpack.c.l.b16 %v3774
        %v3972 = vunpack.c.h.b16 %v3774
        %v3973 = vunpack.c.l.b16 %v3775
        %v3974 = vunpack.c.h.b16 %v3775
        %v3975 = vunpack.c.l.b16 %v3776
        %v3976 = vunpack.c.h.b16 %v3776
        %v3977 = vunpack.c.l.b16 %v3777
        %v3978 = vunpack.c.h.b16 %v3777
        %v3979 = vunpack.c.l.b16 %v3778
        %v3980 = vunpack.c.h.b16 %v3778
        %v3981 = vunpack.c.l.b16 %v3779
        %v3982 = vunpack.c.h.b16 %v3779
        %v3983 = vunpack.c.l.b16 %v3780
        %v3984 = vunpack.c.h.b16 %v3780
        %v3985 = vpack.c.b16 %v3859, %v3857
        %v3986 = vpack.c.b16 %v3860, %v3858
        %v3987 = vpack.c.b16 %v3863, %v3861
        %v3988 = vpack.c.b16 %v3864, %v3862
        %v3989 = vpack.c.b16 %v3867, %v3865
        %v3990 = vpack.c.b16 %v3868, %v3866
        %v3991 = vpack.c.b16 %v3871, %v3869
        %v3992 = vpack.c.b16 %v3872, %v3870
        %v3993 = vpack.c.b16 %v3875, %v3873
        %v3994 = vpack.c.b16 %v3876, %v3874
        %v3995 = vpack.c.b16 %v3879, %v3877
        %v3996 = vpack.c.b16 %v3880, %v3878
        %v3997 = vpack.c.b16 %v3883, %v3881
        %v3998 = vpack.c.b16 %v3884, %v3882
        %v3999 = vpack.c.b16 %v3887, %v3885
        %v4000 = vpack.c.b16 %v3888, %v3886
        %v4001 = vpack.c.b16 %v3891, %v3889
        %v4002 = vpack.c.b16 %v3892, %v3890
        %v4003 = vpack.c.b16 %v3895, %v3893
        %v4004 = vpack.c.b16 %v3896, %v3894
        %v4005 = vpack.c.b16 %v3899, %v3897
        %v4006 = vpack.c.b16 %v3900, %v3898
        %v4007 = vpack.c.b16 %v3903, %v3901
        %v4008 = vpack.c.b16 %v3904, %v3902
        %v4009 = vpack.c.b16 %v3907, %v3905
        %v4010 = vpack.c.b16 %v3908, %v3906
        %v4011 = vpack.c.b16 %v3911, %v3909
        %v4012 = vpack.c.b16 %v3912, %v3910
        %v4013 = vpack.c.b16 %v3915, %v3913
        %v4014 = vpack.c.b16 %v3916, %v3914
        %v4015 = vpack.c.b16 %v3919, %v3917
        %v4016 = vpack.c.b16 %v3920, %v3918
        %v4017 = vpack.c.b16 %v3923, %v3921
        %v4018 = vpack.c.b16 %v3924, %v3922
        %v4019 = vpack.c.b16 %v3927, %v3925
        %v4020 = vpack.c.b16 %v3928, %v3926
        %v4021 = vpack.c.b16 %v3931, %v3929
        %v4022 = vpack.c.b16 %v3932, %v3930
        %v4023 = vpack.c.b16 %v3935, %v3933
        %v4024 = vpack.c.b16 %v3936, %v3934
        %v4025 = vpack.c.b16 %v3939, %v3937
        %v4026 = vpack.c.b16 %v3940, %v3938
        %v4027 = vpack.c.b16 %v3943, %v3941
        %v4028 = vpack.c.b16 %v3944, %v3942
        %v4029 = vpack.c.b16 %v3947, %v3945
        %v4030 = vpack.c.b16 %v3948, %v3946
        %v4031 = vpack.c.b16 %v3951, %v3949
        %v4032 = vpack.c.b16 %v3952, %v3950
        %v4033 = vpack.c.b16 %v3955, %v3953
        %v4034 = vpack.c.b16 %v3956, %v3954
        %v4035 = vpack.c.b16 %v3959, %v3957
        %v4036 = vpack.c.b16 %v3960, %v3958
        %v4037 = vpack.c.b16 %v3963, %v3961
        %v4038 = vpack.c.b16 %v3964, %v3962
        %v4039 = vpack.c.b16 %v3967, %v3965
        %v4040 = vpack.c.b16 %v3968, %v3966
        %v4041 = vpack.c.b16 %v3971, %v3969
        %v4042 = vpack.c.b16 %v3972, %v3970
        %v4043 = vpack.c.b16 %v3975, %v3973
        %v4044 = vpack.c.b16 %v3976, %v3974
        %v4045 = vpack.c.b16 %v3979, %v3977
        %v4046 = vpack.c.b16 %v3980, %v3978
        %v4047 = vpack.c.b16 %v3983, %v3981
        %v4048 = vpack.c.b16 %v3984, %v3982
        %4113 = vmatprep.subr.bf16.mxu0 %v3986
        %4114 = vmatpush1.bf16.msra.mxu0 %v3985
        %4115 = vmatprep.subr.bf16.mxu0 %v3988
        %4116 = vmatpush1.bf16.msra.mxu0 %v3987
        %4117 = vmatprep.subr.bf16.mxu0 %v3990
        %4118 = vmatpush1.bf16.msra.mxu0 %v3989
        %4119 = vmatprep.subr.bf16.mxu0 %v3992
        %4120 = vmatpush1.bf16.msra.mxu0 %v3991
        %4121 = vmatprep.subr.bf16.mxu0 %v3994
        %4122 = vmatpush1.bf16.msra.mxu0 %v3993
        %4123 = vmatprep.subr.bf16.mxu0 %v3996
        %4124 = vmatpush1.bf16.msra.mxu0 %v3995
        %4125 = vmatprep.subr.bf16.mxu0 %v3998
        %4126 = vmatpush1.bf16.msra.mxu0 %v3997
        %4127 = vmatprep.subr.bf16.mxu0 %v4000
        %4128 = vmatpush1.bf16.msra.mxu0 %v3999
        %4129 = vmatprep.subr.bf16.mxu0 %v4002
        %4130 = vmatpush1.bf16.msra.mxu0 %v4001
        %4131 = vmatprep.subr.bf16.mxu0 %v4004
        %4132 = vmatpush1.bf16.msra.mxu0 %v4003
        %4133 = vmatprep.subr.bf16.mxu0 %v4006
        %4134 = vmatpush1.bf16.msra.mxu0 %v4005
        %4135 = vmatprep.subr.bf16.mxu0 %v4008
        %4136 = vmatpush1.bf16.msra.mxu0 %v4007
        %4137 = vmatprep.subr.bf16.mxu0 %v4010
        %4138 = vmatpush1.bf16.msra.mxu0 %v4009
        %4139 = vmatprep.subr.bf16.mxu0 %v4012
        %4140 = vmatpush1.bf16.msra.mxu0 %v4011
        %4141 = vmatprep.subr.bf16.mxu0 %v4014
        %4142 = vmatpush1.bf16.msra.mxu0 %v4013
        %4143 = vmatprep.subr.bf16.mxu0 %v4016
        %4144 = vmatpush1.bf16.msra.mxu0 %v4015
        %4145 = vmatprep.mubr.bf16.mxu0 %v3714
        %4146 = vmatmul.mubr.bf16.gmra.mrb[0].mxu0 %v3713
        %v4147 = vpop.f32.mrb[0].mxu0
        %v4148 = vadd.f32 %v3786, %v4147
        %v4149 = vpop.f32.mrb[0].mxu0
        %v4150 = vadd.f32 %v3790, %v4149
        %v4151 = vpop.f32.mrb[0].mxu0
        %v4152 = vadd.f32 %v3786, %v4151
        %v4153 = vpop.f32.mrb[0].mxu0
        %v4154 = vadd.f32 %v3790, %v4153
        %4155 = vdwg.mxu0
        %4156 = vmatprep.subr.bf16.mxu0 %v4018
        %4157 = vmatpush1.bf16.msra.mxu0 %v4017
        %4158 = vmatprep.subr.bf16.mxu0 %v4020
        %4159 = vmatpush1.bf16.msra.mxu0 %v4019
        %4160 = vmatprep.subr.bf16.mxu0 %v4022
        %4161 = vmatpush1.bf16.msra.mxu0 %v4021
        %4162 = vmatprep.subr.bf16.mxu0 %v4024
        %4163 = vmatpush1.bf16.msra.mxu0 %v4023
        %4164 = vmatprep.subr.bf16.mxu0 %v4026
        %4165 = vmatpush1.bf16.msra.mxu0 %v4025
        %4166 = vmatprep.subr.bf16.mxu0 %v4028
        %4167 = vmatpush1.bf16.msra.mxu0 %v4027
        %4168 = vmatprep.subr.bf16.mxu0 %v4030
        %4169 = vmatpush1.bf16.msra.mxu0 %v4029
        %4170 = vmatprep.subr.bf16.mxu0 %v4032
        %4171 = vmatpush1.bf16.msra.mxu0 %v4031
        %4172 = vmatprep.subr.bf16.mxu0 %v4034
        %4173 = vmatpush1.bf16.msra.mxu0 %v4033
        %4174 = vmatprep.subr.bf16.mxu0 %v4036
        %4175 = vmatpush1.bf16.msra.mxu0 %v4035
        %4176 = vmatprep.subr.bf16.mxu0 %v4038
        %4177 = vmatpush1.bf16.msra.mxu0 %v4037
        %4178 = vmatprep.subr.bf16.mxu0 %v4040
        %4179 = vmatpush1.bf16.msra.mxu0 %v4039
        %4180 = vmatprep.subr.bf16.mxu0 %v4042
        %4181 = vmatpush1.bf16.msra.mxu0 %v4041
        %4182 = vmatprep.subr.bf16.mxu0 %v4044
        %4183 = vmatpush1.bf16.msra.mxu0 %v4043
        %4184 = vmatprep.subr.bf16.mxu0 %v4046
        %4185 = vmatpush1.bf16.msra.mxu0 %v4045
        %4186 = vmatprep.subr.bf16.mxu0 %v4048
        %4187 = vmatpush1.bf16.msra.mxu0 %v4047
        %4188 = vmatprep.mubr.bf16.mxu0 %v3716
        %4189 = vmatmul.mubr.bf16.gmra.mrb[0].mxu0 %v3715
        %v4190 = vpop.f32.mrb[0].mxu0
        %v4191 = vadd.f32 %v4148, %v4190
        %v4192 = vpop.f32.mrb[0].mxu0
        %v4193 = vadd.f32 %v4150, %v4192
        %v4194 = vpop.f32.mrb[0].mxu0
        %v4195 = vadd.f32 %v4152, %v4194
        %v4196 = vpop.f32.mrb[0].mxu0
        %v4197 = vadd.f32 %v4154, %v4196
        %4198 = vdwg.mxu0
        %v4199 = vadd.f32 %v917, %v4191
        %v4200 = vadd.f32 %v918, %v4193
        %v4201 = vadd.f32 %v919, %v4195
        %v4202 = vadd.f32 %v920, %v4197
        %4203 = vst [vmem:[#allocation2] sm:$0xff] %v4199
        %4204 = vst [vmem:[#allocation2 + $0x8] sm:$0xff] %v4200
        %4205 = vst [vmem:[#allocation2 + $0x10] sm:$0xff] %v4201
        %4206 = vst [vmem:[#allocation2 + $0x18] sm:$0xff] %v4202
        %p4207 = scmp.eq.s32.totalorder %s47, 1
        // Predicated region
        $region117: #{tpu_custom_call.1} parent=83 // pred_check
          %p4208 = pneg %p4207
        $region118: #{tpu_custom_call.1} parent=83 // pred_check_branch
          %4210 = sbr.rel (%p4208) target = $region120
        $region119: #{tpu_custom_call.1} parent=83 // pred_region
          %v4211 = vld [vmem:[%s14] sm:$0x3]
          %v4212 = vld [vmem:[%s15] sm:$0x3]
          %v4213 = vadd.f32 %v4199, %v4200
          %4214 = vadd.xlane.f32.xlu0 %v4213
          %v4215 = vpop.xlane.xlu0 %4214
          %v4216 = vadd.f32 %v4201, %v4202
          %4217 = vadd.xlane.f32.xlu0 %v4216
          %v4218 = vpop.xlane.xlu0 %4217
          %v4219 = vmul.f32 %v4215, %v929
          %v4220 = vmul.f32 %v4218, %v929
          %v4221 = vsub.f32 %v4199, %v4219
          %v4222 = vsub.f32 %v4200, %v4219
          %v4223 = vsub.f32 %v4201, %v4220
          %v4224 = vsub.f32 %v4202, %v4220
          %v4225 = vmul.f32 %v4221, %v4221
          %v4226 = vmul.f32 %v4222, %v4222
          %v4227 = vmul.f32 %v4223, %v4223
          %v4228 = vmul.f32 %v4224, %v4224
          %v4229 = vadd.f32 %v4225, %v4226
          %4230 = vadd.xlane.f32.xlu0 %v4229
          %v4231 = vpop.xlane.xlu0 %4230
          %v4232 = vadd.f32 %v4227, %v4228
          %4233 = vadd.xlane.f32.xlu0 %v4232
          %v4234 = vpop.xlane.xlu0 %4233
          %v4235 = vmul.f32 %v4231, 0.003921569
          %v4236 = vmul.f32 %v4234, 0.003921569
          %v4238 = vlaneseq
          %v4239 = vshrl.u32 %v4238, 7
          %v4240 = vsub.s32 0, %v4239
          %v4241 = vrot.slane %v4211, %v4240
          %v4242 = vlaneseq
          %v4243 = vshrl.u32 %v4242, 7
          %v4244 = vsub.s32 1, %v4243
          %v4245 = vrot.slane %v4211, %v4244
          %v4248 = vmul.f32 %v4241, %v4221
          %v4249 = vmul.f32 %v4245, %v4222
          %v4250 = vmul.f32 %v4241, %v4223
          %v4251 = vmul.f32 %v4245, %v4224
          %v4252 = vrsqrt.pop %v4235
          %v4253 = vmul.f32 %v4235, %v4252
          %vm4254 = vcmp.eq.f32.partialorder %v4235, inf
          %v4255 = vsel %vm4254, %v4235, %v4253
          %vm4256 = vcmp.eq.f32.partialorder %v4235, 0.0
          %v4257 = vand.u32 %v4235, 2147483648
          %v4258 = vsel %vm4256, %v4257, %v4255
          %v4259 = vrsqrt.pop %v4236
          %v4260 = vmul.f32 %v4236, %v4259
          %vm4261 = vcmp.eq.f32.partialorder %v4236, inf
          %v4262 = vsel %vm4261, %v4236, %v4260
          %vm4263 = vcmp.eq.f32.partialorder %v4236, 0.0
          %v4264 = vand.u32 %v4236, 2147483648
          %v4265 = vsel %vm4263, %v4264, %v4262
          %v4266 = vadd.f32 %v4258, 1e-06
          %v4267 = vadd.f32 %v4265, 1e-06
          %v4268 = vrcp.pop %v4266
          %v4269 = vmul.f32 %v4248, %v4268
          %v4270 = vmul.f32 %v4249, %v4268
          %v4271 = vrcp.pop %v4267
          %v4272 = vmul.f32 %v4250, %v4271
          %v4273 = vmul.f32 %v4251, %v4271
          %v4275 = vlaneseq
          %v4276 = vshrl.u32 %v4275, 7
          %v4277 = vsub.s32 0, %v4276
          %v4278 = vrot.slane %v4212, %v4277
          %v4279 = vlaneseq
          %v4280 = vshrl.u32 %v4279, 7
          %v4281 = vsub.s32 1, %v4280
          %v4282 = vrot.slane %v4212, %v4281
          %v4285 = vadd.f32 %v4269, %v4278
          %v4286 = vadd.f32 %v4270, %v4282
          %v4287 = vadd.f32 %v4272, %v4278
          %v4288 = vadd.f32 %v4273, %v4282
          %4289 = vst [vmem:[%s872] sm:$0xff] %v4285
          %4290 = vst [vmem:[%s872 + $0x8] sm:$0xff] %v4286
          %4291 = vst [vmem:[%s872 + $0x10] sm:$0xff] %v4287
          %4292 = vst [vmem:[%s872 + $0x18] sm:$0xff] %v4288
        $region120: #{tpu_custom_call.1} parent=83 // pred_fallthru
          _
        %s4293 = sand.u32 %s468, 1
        %s4294 = scalar_lea.sflag [#allocation5], %s4293
        %s4295 = sand.u32 %s468, 1
        %s4296 = smul.addr %s4295, 32
        %s4297 = scalar_lea.vmem [#allocation15], %s4296
        // Predicated region
        $region121: #{tpu_custom_call.1} parent=83 // pred_check
          %p4298 = pneg %p478
        $region122: #{tpu_custom_call.1} parent=83 // pred_check_branch
          %4300 = sbr.rel (%p4298) target = $region124
        $region123: #{tpu_custom_call.1} parent=83 // pred_region
          %s4301 = smul.u32 2, %s46
          %s4303 = ssub.s32 512, 512
          %4304 = vsyncadd %s4294, %s4303
          %s4305 = smul.addr %s4301, 2
          %s4306 = smul.addr %s4305, 128
          %s4307 = scalar_lea.hbm %s16, %s4306
          %s4308 = sshll.u32 %s4297, 4
          %s4309 = int_to_ptr.vmem [resolvable:$true] %s4308
          %4314 = dma.vmem_to_hbm [thread:$0]  %s4309, 512, %s4307, %s4294, 256, 256, 16
        $region124: #{tpu_custom_call.1} parent=83 // pred_fallthru
          _
      $region84: #{tpu_custom_call.1} parent=5 // pred_fallthru
        _
      %p4315 = scmp.le.s32.totalorder 2, %s37
      // Predicated region
      $region125: #{tpu_custom_call.1} parent=5 // pred_check
        %p4316 = pneg %p4315
      $region126: #{tpu_custom_call.1} parent=5 // pred_check_branch
        %4318 = sbr.rel (%p4316) target = $region128
      $region127: #{tpu_custom_call.1} parent=5 // pred_region
        %s4319 = ssub.s32 %s37, 2
        // Predicated region
        $region129: #{tpu_custom_call.1} parent=127 // pred_check
          %p4320 = pneg %p484
        $region130: #{tpu_custom_call.1} parent=127 // pred_check_branch
          %4322 = sbr.rel (%p4320) target = $region132
        $region131: #{tpu_custom_call.1} parent=127 // pred_region
          %s4323 = sand.u32 %s469, 1
          %s4324 = scalar_lea.sflag [#allocation5], %s4323
          %s4325 = sand.u32 %s469, 1
          %s4326 = smul.addr %s4325, 32
          %s4327 = scalar_lea.vmem [#allocation15], %s4326
          %4328 = dma.done %s4324, 512
        $region132: #{tpu_custom_call.1} parent=127 // pred_fallthru
          _
      $region128: #{tpu_custom_call.1} parent=5 // pred_fallthru
        _
    $region6: #{tpu_custom_call.1} parent=1 // loop_footer
      %s41 = sadd.s32 1, %s37
    $region7: #{tpu_custom_call.1} parent=1 // loop_footer_branch
      %36 = sbr.rel target = $region3
    $region8: #{tpu_custom_call.1} parent=1 // loop_exit
      _
    %4329 = vsyncpa [#allocation4], 1
    %s4330 = scalar_lea.sflag [#allocation4], 1
    %4331 = vsyncpa %s4330, 1
    %4332 = vsyncpa [#allocation7], 1
    %s4333 = scalar_lea.sflag [#allocation7], 1
    %4334 = vsyncpa %s4333, 1
    %4335 = vsyncpa [#allocation10], 1
    %s4336 = scalar_lea.sflag [#allocation10], 1
    %4337 = vsyncpa %s4336, 1
    %4338 = vsyncpa [#allocation13], 1
    %s4339 = scalar_lea.sflag [#allocation13], 1
    %4340 = vsyncpa %s4339, 1
    %4341 = vsyncpa [#allocation5], 1
    %s4342 = scalar_lea.sflag [#allocation5], 1
    %4343 = vsyncpa %s4342, 1

</llo_original>
